<compile_context>
chip_gen: v6e
topology: v6e:2x2x1
jax: 0.10.0
libtpu: 0.0.40
codegen_flags: <defaults>
</compile_context>

<pallas_src>
import functools

import jax
import jax.numpy as jnp
from jax import lax
from jax.experimental import pallas as pl
from jax.experimental.pallas import tpu as pltpu


# Sentinel used to pad the *raw* input of a BN->ReLU->Conv block: after the
# in-kernel relu(x*scale+shift) prologue it maps to exactly 0, matching
# PyTorch's zero padding of the post-ReLU activation (scale > 0 for the
# generated BN params, as for PyTorch's default gamma init).
NEG_PAD = -1e30


def _pick_row_tile(m, pref=128):
    """Largest row tile <= pref that divides m exactly (falls back to full m)."""
    if m <= pref:
        return m
    for t in (pref, 64, 32, 16, 8):
        if m % t == 0:
            return t
    return m


# ----------------------------- Pallas kernels -----------------------------

def _fused_matmul_kernel(*refs, pre_bn, has_bias, post_bn_relu):
    """out = [relu(((relu(a*ps+pb)) @ b + bias) * qs + qb)] with optional parts.

    ref order: a, b, [pre_scale, pre_shift], [bias], [post_scale, post_shift], out
    """
    it = iter(refs)
    a_ref = next(it)
    b_ref = next(it)
    pre_scale_ref = next(it) if pre_bn else None
    pre_shift_ref = next(it) if pre_bn else None
    bias_ref = next(it) if has_bias else None
    post_scale_ref = next(it) if post_bn_relu else None
    post_shift_ref = next(it) if post_bn_relu else None
    o_ref = next(it)

    a = a_ref[...]
    if pre_bn:  # BN + ReLU of the *input* (conv_block / transition_block)
        a = jnp.maximum(a * pre_scale_ref[...] + pre_shift_ref[...], 0.0)
    out = jnp.dot(a, b_ref[...], preferred_element_type=jnp.float32)
    if has_bias:
        out = out + bias_ref[...]
    if post_bn_relu:  # BN + ReLU of the *output* (block1 head conv)
        out = jnp.maximum(out * post_scale_ref[...] + post_shift_ref[...], 0.0)
    o_ref[...] = out.astype(o_ref.dtype)


def fused_matmul(a, b, *, pre_scale=None, pre_shift=None, bias=None,
                 post_scale=None, post_shift=None):
    """a: (M, K) f32, b: (K, N) f32 -> (M, N) f32, single K step, no pad copies."""
    M, K = a.shape
    K2, N = b.shape
    assert K == K2
    pre_bn = pre_scale is not None
    has_bias = bias is not None
    post_bn_relu = post_scale is not None

    tm = _pick_row_tile(M, 128)                       # M blocks stay "parallel"
    tn = 128 if (N > 128 and N % 128 == 0) else N      # true N, no lane padding
    grid = (M // tm, N // tn)

    inputs = [a, b]
    in_specs = [
        pl.BlockSpec((tm, K), lambda i, j: (i, 0)),    # full K in one block
        pl.BlockSpec((K, tn), lambda i, j: (0, j)),
    ]
    if pre_bn:
        inputs += [pre_scale.reshape(1, K), pre_shift.reshape(1, K)]
        in_specs += [pl.BlockSpec((1, K), lambda i, j: (0, 0))] * 2
    if has_bias:
        inputs.append(bias.reshape(1, N))
        in_specs.append(pl.BlockSpec((1, tn), lambda i, j: (0, j)))
    if post_bn_relu:
        inputs += [post_scale.reshape(1, N), post_shift.reshape(1, N)]
        in_specs += [pl.BlockSpec((1, tn), lambda i, j: (0, j))] * 2

    kernel = functools.partial(_fused_matmul_kernel, pre_bn=pre_bn,
                               has_bias=has_bias, post_bn_relu=post_bn_relu)
    return pl.pallas_call(
        kernel,
        out_shape=jax.ShapeDtypeStruct((M, N), jnp.float32),
        grid_spec=pltpu.PrefetchScalarGridSpec(
            num_scalar_prefetch=0,
            grid=grid,
            in_specs=in_specs,
            out_specs=pl.BlockSpec((tm, tn), lambda i, j: (i, j)),
        ),
        compiler_params=pltpu.CompilerParams(
            dimension_semantics=("parallel", "parallel")),
    )(*inputs)


def _pool_kernel(*refs, n_win, is_max, fuse_bn):
    """Reduce k*k window slices (max or mean) with optional fused BN+ReLU."""
    idx = 0
    if fuse_bn:
        scale_ref, shift_ref = refs[0], refs[1]
        idx = 2
    win_refs = refs[idx:idx + n_win]
    o_ref = refs[idx + n_win]

    def load(r):
        v = r[...]
        if fuse_bn:
            v = jnp.maximum(v * scale_ref[...] + shift_ref[...], 0.0)
        return v

    acc = load(win_refs[0])
    for r in win_refs[1:]:
        v = load(r)
        acc = jnp.maximum(acc, v) if is_max else acc + v
    if not is_max:
        acc = acc * (1.0 / n_win)
    o_ref[...] = acc


# ------------------------------- JAX glue ----------------------------------

def _window_slices(x, k, stride, pad, pad_value):
    """k*k strided window slices of NHWC x, each flattened to (N*Ho*Wo, C)."""
    n, h, w, c = x.shape
    if pad > 0:
        x = jnp.pad(x, ((0, 0), (pad, pad), (pad, pad), (0, 0)),
                    constant_values=pad_value)
    ho = (h + 2 * pad - k) // stride + 1
    wo = (w + 2 * pad - k) // stride + 1
    slices = []
    for i in range(k):
        for j in range(k):
            s = lax.slice(
                x, (0, i, j, 0),
                (n, i + (ho - 1) * stride + 1, j + (wo - 1) * stride + 1, c),
                (1, stride, stride, 1))
            slices.append(s.reshape(n * ho * wo, c))
    return slices, (n, ho, wo, c)


def pool2d(x, k, stride, pad, *, is_max, bn=None, eps=1e-5):
    """Max/Avg pool; `bn` fuses a preceding BatchNorm+ReLU into the kernel."""
    assert pad == 0 or is_max  # fused-BN / avg pools here are always unpadded
    pad_value = NEG_PAD if is_max else 0.0
    slices, (n, ho, wo, c) = _window_slices(x, k, stride, pad, pad_value)
    m = n * ho * wo
    tm = _pick_row_tile(m, 512)
    fuse_bn = bn is not None

    inputs, in_specs = [], []
    if fuse_bn:
        scale = bn["gamma"] / jnp.sqrt(bn["var"] + eps)
        shift = bn["beta"] - bn["mean"] * scale
        inputs += [scale.reshape(1, c), shift.reshape(1, c)]
        in_specs += [pl.BlockSpec((1, c), lambda i: (0, 0))] * 2
    inputs += slices
    in_specs += [pl.BlockSpec((tm, c), lambda i: (i, 0))] * len(slices)

    kernel = functools.partial(_pool_kernel, n_win=len(slices),
                               is_max=is_max, fuse_bn=fuse_bn)
    out = pl.pallas_call(
        kernel,
        out_shape=jax.ShapeDtypeStruct((m, c), jnp.float32),
        grid_spec=pltpu.PrefetchScalarGridSpec(
            num_scalar_prefetch=0,
            grid=(m // tm,),
            in_specs=in_specs,
            out_specs=pl.BlockSpec((tm, c), lambda i: (i, 0)),
        ),
        compiler_params=pltpu.CompilerParams(
            dimension_semantics=("parallel",)),
    )(*inputs)
    return out.reshape(n, ho, wo, c)


def _im2col(x, kh, kw, stride, pad, pad_value):
    # TODO(synk): fuse im2col into the matmul grid (element-offset BlockSpecs)
    # so the activation is read from HBM only once instead of kh*kw times.
    n, h, w, c = x.shape
    if pad > 0:
        x = jnp.pad(x, ((0, 0), (pad, pad), (pad, pad), (0, 0)),
                    constant_values=pad_value)
    ho = (h + 2 * pad - kh) // stride + 1
    wo = (w + 2 * pad - kw) // stride + 1
    cols = []
    for i in range(kh):
        for j in range(kw):
            cols.append(lax.slice(
                x, (0, i, j, 0),
                (n, i + (ho - 1) * stride + 1, j + (wo - 1) * stride + 1, c),
                (1, stride, stride, 1)))
    patches = jnp.stack(cols, axis=3)          # (N, Ho, Wo, kh*kw, C)
    return patches.reshape(n * ho * wo, kh * kw * c), (n, ho, wo)


def conv2d_fused(x, w, b, stride, pad, *, pre_bn=None, post_bn=None, eps=1e-5):
    """Conv via im2col + one fused Pallas MXU matmul.

    pre_bn : BN(+ReLU) applied to the *input* inside the kernel (BN->ReLU->Conv).
    post_bn: BN(+ReLU) applied to the *output* inside the kernel (Conv->BN->ReLU).
    b may be None (bias=False conv): the bias path is skipped entirely.
    """
    kh, kw, cin, cout = w.shape
    pre_scale = pre_shift = post_scale = post_shift = None
    pad_value = 0.0
    if pre_bn is not None:
        scale = pre_bn["gamma"] / jnp.sqrt(pre_bn["var"] + eps)
        shift = pre_bn["beta"] - pre_bn["mean"] * scale
        pre_scale = jnp.tile(scale, kh * kw)   # im2col columns: window-major, channel-minor
        pre_shift = jnp.tile(shift, kh * kw)
        pad_value = NEG_PAD                    # -> 0 after the in-kernel ReLU prologue
    if post_bn is not None:
        post_scale = post_bn["gamma"] / jnp.sqrt(post_bn["var"] + eps)
        post_shift = post_bn["beta"] - post_bn["mean"] * post_scale

    patches, (n, ho, wo) = _im2col(x, kh, kw, stride, pad, pad_value)
    out = fused_matmul(patches, w.reshape(kh * kw * cin, cout),
                       pre_scale=pre_scale, pre_shift=pre_shift,
                       bias=b, post_scale=post_scale, post_shift=post_shift)
    return out.reshape(n, ho, wo, cout)


# --------------------------- parameter creation -----------------------------

def _bn_params(key, c):
    k1, k2, k3, k4 = jax.random.split(key, 4)
    return dict(
        gamma=jax.random.uniform(k1, (c,), jnp.float32, 0.5, 1.5),
        beta=jax.random.normal(k2, (c,), jnp.float32) * 0.1,
        mean=jax.random.normal(k3, (c,), jnp.float32) * 0.1,
        var=jax.random.uniform(k4, (c,), jnp.float32, 0.5, 1.5),
    )


def _conv_params(key, kh, kw, cin, cout, bias):
    k1, k2 = jax.random.split(key)
    w = jax.random.normal(k1, (kh, kw, cin, cout), jnp.float32) / jnp.sqrt(kh * kw * cin)
    b = jax.random.normal(k2, (cout,), jnp.float32) * 0.01 if bias else None
    return dict(w=w, b=b)


def init_densenet(key, growth_rate, block_layers):
    keys = iter(jax.random.split(key, 256))
    params = {}
    # block1: Conv2d(3, 64, k=7, s=3, p=10, bias=True) + BN(64) + ReLU + MaxPool(3,2,1)
    params["conv0"] = _conv_params(next(keys), 7, 7, 3, 64, bias=True)
    params["bn0"] = _bn_params(next(keys), 64)

    channels = 64
    blocks = []
    for i, layers in enumerate(block_layers):
        dense_layers = []
        ch = channels
        for _ in range(layers):
            # conv_block: BN(ch) + ReLU + Conv2d(ch -> growth, k=3, p=1, bias=False)
            dense_layers.append(dict(
                bn=_bn_params(next(keys), ch),
                conv=_conv_params(next(keys), 3, 3, ch, growth_rate, bias=False)))
            ch += growth_rate
        blocks.append(("dense", dense_layers))
        channels = ch
        if i != len(block_layers) - 1:
            # transition: BN + ReLU + Conv2d(ch -> ch//2, k=1, bias=True) + AvgPool(2,2)
            out_c = channels // 2
            blocks.append(("trans", dict(
                bn=_bn_params(next(keys), channels),
                conv=_conv_params(next(keys), 1, 1, channels, out_c, bias=True))))
            channels = out_c
    params["blocks"] = blocks
    params["bn_final"] = _bn_params(next(keys), channels)
    k1, k2 = jax.random.split(next(keys))
    params["fc_w"] = jax.random.normal(k1, (channels, 10), jnp.float32) / jnp.sqrt(channels)
    params["fc_b"] = jax.random.normal(k2, (10,), jnp.float32) * 0.01
    return params


# -------------------------------- forward ----------------------------------

def densenet_forward(params, x_nchw):
    # Input is NCHW (PyTorch convention); convert once to NHWC for the kernels.
    x = jnp.transpose(x_nchw, (0, 2, 3, 1)).astype(jnp.float32)

    # block1: Conv(3->64, k7, s3, p10, bias) -> BN -> ReLU   (one fused kernel)
    x = conv2d_fused(x, params["conv0"]["w"], params["conv0"]["b"],
                     stride=3, pad=10, post_bn=params["bn0"])
    # MaxPool(3, 2, pad=1)
    x = pool2d(x, 3, 2, 1, is_max=True)

    # block2: dense blocks interleaved with transition blocks
    for kind, p in params["blocks"]:
        if kind == "dense":
            for layer in p:
                # conv_block: BN+ReLU fused into the conv matmul prologue.
                out = conv2d_fused(x, layer["conv"]["w"], layer["conv"]["b"],
                                   stride=1, pad=1, pre_bn=layer["bn"])
                # torch.cat((out, x), dim=1) -> channel axis 3 in NHWC.
                # TODO(synk): replace the growing concat with a preallocated
                # full-channel buffer + in-place channel-slice writes.
                x = jnp.concatenate([out, x], axis=3)
        else:  # transition: BN+ReLU fused into the 1x1 conv, then AvgPool(2,2)
            out = conv2d_fused(x, p["conv"]["w"], p["conv"]["b"],
                               stride=1, pad=0, pre_bn=p["bn"])
            x = pool2d(out, 2, 2, 0, is_max=False)

    # final BN + ReLU fused into AvgPool2d(3)
    x = pool2d(x, 3, 3, 0, is_max=False, bn=params["bn_final"])

    # classifier: view(B, -1) (spatial is 1x1 here) + Linear(channels, 10)
    flat = x.reshape(x.shape[0], -1)
    return fused_matmul(flat, params["fc_w"], bias=params["fc_b"])


# ----------------------------------- main -----------------------------------

if __name__ == "__main__":
    key = jax.random.PRNGKey(0)
    kp, kx = jax.random.split(key)

    # Small DenseNet config via the module's constructor args.
    growth_rate = 8
    block_layers = [2, 2]
    params = init_densenet(kp, growth_rate, block_layers)

    # Spatial 32 makes the final AvgPool2d(3) produce 1x1, as Linear(channels, 10) needs.
    x = jax.random.normal(kx, (2, 3, 32, 32), jnp.float32)  # NCHW

    fwd = jax.jit(lambda inp: densenet_forward(params, inp))
    out = jax.block_until_ready(fwd(x))
    assert out.shape == (2, 10), out.shape
    assert bool(jnp.all(jnp.isfinite(out)))
    print("KERNEL_OK")
</pallas_src>

<mosaic_0001>
module attributes {stable_mosaic.version = 11 : i64} {
  func.func @_fused_matmul_kernel(%arg0: i32, %arg1: i32, %arg2: memref<128x147xf32, #tpu.memory_space<vmem>>, %arg3: memref<147x64xf32, #tpu.memory_space<vmem>>, %arg4: memref<1x64xf32, #tpu.memory_space<vmem>>, %arg5: memref<1x64xf32, #tpu.memory_space<vmem>>, %arg6: memref<1x64xf32, #tpu.memory_space<vmem>>, %arg7: memref<128x64xf32, #tpu.memory_space<vmem>>) attributes {dimension_semantics = [#tpu.dimension_semantics<parallel>, #tpu.dimension_semantics<parallel>], iteration_bounds = array<i64: 4, 1>, scalar_prefetch = 0 : i64, scratch_operands = 0 : i64, tpu.core_type = #tpu.core_type<tc>, window_params = [{transform_indices = @transform_0, window_bounds = array<i64: 128, 147>}, {transform_indices = @transform_1, window_bounds = array<i64: 147, 64>}, {transform_indices = @transform_2, window_bounds = array<i64: 1, 64>}, {transform_indices = @transform_3, window_bounds = array<i64: 1, 64>}, {transform_indices = @transform_4, window_bounds = array<i64: 1, 64>}, {transform_indices = @transform_5, window_bounds = array<i64: 128, 64>}]} {
    %c0 = arith.constant 0 : index
    %c0_0 = arith.constant 0 : index
    %0 = vector.load %arg2[%c0, %c0_0] : memref<128x147xf32, #tpu.memory_space<vmem>>, vector<128x147xf32>
    %c0_1 = arith.constant 0 : index
    %c0_2 = arith.constant 0 : index
    %1 = vector.load %arg3[%c0_1, %c0_2] : memref<147x64xf32, #tpu.memory_space<vmem>>, vector<147x64xf32>
    %cst = arith.constant dense<0.000000e+00> : vector<128x64xf32>
    %2 = tpu.matmul %0, %1, %cst {dimension_numbers = #tpu.dot_dimension_numbers<[1], [0], [0], [1], [0, 0, 1, 1], [], []>} : vector<128x147xf32>, vector<147x64xf32>, vector<128x64xf32> -> vector<128x64xf32>
    %c0_3 = arith.constant 0 : index
    %c0_4 = arith.constant 0 : index
    %3 = vector.load %arg4[%c0_3, %c0_4] : memref<1x64xf32, #tpu.memory_space<vmem>>, vector<1x64xf32>
    %4 = vector.broadcast %3 : vector<1x64xf32> to vector<128x64xf32>
    %5 = arith.addf %2, %4 : vector<128x64xf32>
    %c0_5 = arith.constant 0 : index
    %c0_6 = arith.constant 0 : index
    %6 = vector.load %arg5[%c0_5, %c0_6] : memref<1x64xf32, #tpu.memory_space<vmem>>, vector<1x64xf32>
    %7 = vector.broadcast %6 : vector<1x64xf32> to vector<128x64xf32>
    %8 = arith.mulf %5, %7 : vector<128x64xf32>
    %c0_7 = arith.constant 0 : index
    %c0_8 = arith.constant 0 : index
    %9 = vector.load %arg6[%c0_7, %c0_8] : memref<1x64xf32, #tpu.memory_space<vmem>>, vector<1x64xf32>
    %10 = vector.broadcast %9 : vector<1x64xf32> to vector<128x64xf32>
    %11 = arith.addf %8, %10 : vector<128x64xf32>
    %cst_9 = arith.constant 0.000000e+00 : f32
    %12 = vector.broadcast %cst_9 : f32 to vector<128x64xf32>
    %13 = arith.maximumf %11, %12 : vector<128x64xf32>
    %c0_10 = arith.constant 0 : index
    %c0_11 = arith.constant 0 : index
    %14 = vector.load %arg7[%c0_10, %c0_11] : memref<128x64xf32, #tpu.memory_space<vmem>>, vector<128x64xf32>
    tpu.vector_store %arg7[%c0_10, %c0_11], %13 {strides = array<i32>} : memref<128x64xf32, #tpu.memory_space<vmem>>, vector<128x64xf32>,
    return
  }
  func.func @transform_0(%arg0: i32, %arg1: i32) -> (i32, i32) {
    %c0_i32 = arith.constant 0 : i32
    %c0_i32_0 = arith.constant 0 : i32
    return %arg0, %c0_i32 : i32, i32
  }
  func.func @transform_1(%arg0: i32, %arg1: i32) -> (i32, i32) {
    %c0_i32 = arith.constant 0 : i32
    %c0_i32_0 = arith.constant 0 : i32
    return %c0_i32, %arg1 : i32, i32
  }
  func.func @transform_2(%arg0: i32, %arg1: i32) -> (i32, i32) {
    %c0_i32 = arith.constant 0 : i32
    %c0_i32_0 = arith.constant 0 : i32
    return %c0_i32, %arg1 : i32, i32
  }
  func.func @transform_3(%arg0: i32, %arg1: i32) -> (i32, i32) {
    %c0_i32 = arith.constant 0 : i32
    %c0_i32_0 = arith.constant 0 : i32
    return %c0_i32, %arg1 : i32, i32
  }
  func.func @transform_4(%arg0: i32, %arg1: i32) -> (i32, i32) {
    %c0_i32 = arith.constant 0 : i32
    %c0_i32_0 = arith.constant 0 : i32
    return %c0_i32, %arg1 : i32, i32
  }
  func.func @transform_5(%arg0: i32, %arg1: i32) -> (i32, i32) {
    %c0_i32 = arith.constant 0 : i32
    return %arg0, %arg1 : i32, i32
  }
}

module attributes {stable_mosaic.version = 11 : i64} {
  func.func @_pool_kernel(%arg0: i32, %arg1: memref<128x64xf32, #tpu.memory_space<vmem>>, %arg2: memref<128x64xf32, #tpu.memory_space<vmem>>, %arg3: memref<128x64xf32, #tpu.memory_space<vmem>>, %arg4: memref<128x64xf32, #tpu.memory_space<vmem>>, %arg5: memref<128x64xf32, #tpu.memory_space<vmem>>, %arg6: memref<128x64xf32, #tpu.memory_space<vmem>>, %arg7: memref<128x64xf32, #tpu.memory_space<vmem>>, %arg8: memref<128x64xf32, #tpu.memory_space<vmem>>, %arg9: memref<128x64xf32, #tpu.memory_space<vmem>>, %arg10: memref<128x64xf32, #tpu.memory_space<vmem>>) attributes {dimension_semantics = [#tpu.dimension_semantics<parallel>], iteration_bounds = array<i64: 1>, scalar_prefetch = 0 : i64, scratch_operands = 0 : i64, tpu.core_type = #tpu.core_type<tc>, window_params = [{transform_indices = @transform_0, window_bounds = array<i64: 128, 64>}, {transform_indices = @transform_1, window_bounds = array<i64: 128, 64>}, {transform_indices = @transform_2, window_bounds = array<i64: 128, 64>}, {transform_indices = @transform_3, window_bounds = array<i64: 128, 64>}, {transform_indices = @transform_4, window_bounds = array<i64: 128, 64>}, {transform_indices = @transform_5, window_bounds = array<i64: 128, 64>}, {transform_indices = @transform_6, window_bounds = array<i64: 128, 64>}, {transform_indices = @transform_7, window_bounds = array<i64: 128, 64>}, {transform_indices = @transform_8, window_bounds = array<i64: 128, 64>}, {transform_indices = @transform_9, window_bounds = array<i64: 128, 64>}]} {
    %c0 = arith.constant 0 : index
    %c0_0 = arith.constant 0 : index
    %0 = vector.load %arg1[%c0, %c0_0] : memref<128x64xf32, #tpu.memory_space<vmem>>, vector<128x64xf32>
    %c0_1 = arith.constant 0 : index
    %c0_2 = arith.constant 0 : index
    %1 = vector.load %arg2[%c0_1, %c0_2] : memref<128x64xf32, #tpu.memory_space<vmem>>, vector<128x64xf32>
    %2 = arith.maximumf %0, %1 : vector<128x64xf32>
    %c0_3 = arith.constant 0 : index
    %c0_4 = arith.constant 0 : index
    %3 = vector.load %arg3[%c0_3, %c0_4] : memref<128x64xf32, #tpu.memory_space<vmem>>, vector<128x64xf32>
    %4 = arith.maximumf %2, %3 : vector<128x64xf32>
    %c0_5 = arith.constant 0 : index
    %c0_6 = arith.constant 0 : index
    %5 = vector.load %arg4[%c0_5, %c0_6] : memref<128x64xf32, #tpu.memory_space<vmem>>, vector<128x64xf32>
    %6 = arith.maximumf %4, %5 : vector<128x64xf32>
    %c0_7 = arith.constant 0 : index
    %c0_8 = arith.constant 0 : index
    %7 = vector.load %arg5[%c0_7, %c0_8] : memref<128x64xf32, #tpu.memory_space<vmem>>, vector<128x64xf32>
    %8 = arith.maximumf %6, %7 : vector<128x64xf32>
    %c0_9 = arith.constant 0 : index
    %c0_10 = arith.constant 0 : index
    %9 = vector.load %arg6[%c0_9, %c0_10] : memref<128x64xf32, #tpu.memory_space<vmem>>, vector<128x64xf32>
    %10 = arith.maximumf %8, %9 : vector<128x64xf32>
    %c0_11 = arith.constant 0 : index
    %c0_12 = arith.constant 0 : index
    %11 = vector.load %arg7[%c0_11, %c0_12] : memref<128x64xf32, #tpu.memory_space<vmem>>, vector<128x64xf32>
    %12 = arith.maximumf %10, %11 : vector<128x64xf32>
    %c0_13 = arith.constant 0 : index
    %c0_14 = arith.constant 0 : index
    %13 = vector.load %arg8[%c0_13, %c0_14] : memref<128x64xf32, #tpu.memory_space<vmem>>, vector<128x64xf32>
    %14 = arith.maximumf %12, %13 : vector<128x64xf32>
    %c0_15 = arith.constant 0 : index
    %c0_16 = arith.constant 0 : index
    %15 = vector.load %arg9[%c0_15, %c0_16] : memref<128x64xf32, #tpu.memory_space<vmem>>, vector<128x64xf32>
    %16 = arith.maximumf %14, %15 : vector<128x64xf32>
    %c0_17 = arith.constant 0 : index
    %c0_18 = arith.constant 0 : index
    %17 = vector.load %arg10[%c0_17, %c0_18] : memref<128x64xf32, #tpu.memory_space<vmem>>, vector<128x64xf32>
    tpu.vector_store %arg10[%c0_17, %c0_18], %16 {strides = array<i32>} : memref<128x64xf32, #tpu.memory_space<vmem>>, vector<128x64xf32>,
    return
  }
  func.func @transform_0(%arg0: i32) -> (i32, i32) {
    %c0_i32 = arith.constant 0 : i32
    %c0_i32_0 = arith.constant 0 : i32
    return %arg0, %c0_i32 : i32, i32
  }
  func.func @transform_1(%arg0: i32) -> (i32, i32) {
    %c0_i32 = arith.constant 0 : i32
    %c0_i32_0 = arith.constant 0 : i32
    return %arg0, %c0_i32 : i32, i32
  }
  func.func @transform_2(%arg0: i32) -> (i32, i32) {
    %c0_i32 = arith.constant 0 : i32
    %c0_i32_0 = arith.constant 0 : i32
    return %arg0, %c0_i32 : i32, i32
  }
  func.func @transform_3(%arg0: i32) -> (i32, i32) {
    %c0_i32 = arith.constant 0 : i32
    %c0_i32_0 = arith.constant 0 : i32
    return %arg0, %c0_i32 : i32, i32
  }
  func.func @transform_4(%arg0: i32) -> (i32, i32) {
    %c0_i32 = arith.constant 0 : i32
    %c0_i32_0 = arith.constant 0 : i32
    return %arg0, %c0_i32 : i32, i32
  }
  func.func @transform_5(%arg0: i32) -> (i32, i32) {
    %c0_i32 = arith.constant 0 : i32
    %c0_i32_0 = arith.constant 0 : i32
    return %arg0, %c0_i32 : i32, i32
  }
  func.func @transform_6(%arg0: i32) -> (i32, i32) {
    %c0_i32 = arith.constant 0 : i32
    %c0_i32_0 = arith.constant 0 : i32
    return %arg0, %c0_i32 : i32, i32
  }
  func.func @transform_7(%arg0: i32) -> (i32, i32) {
    %c0_i32 = arith.constant 0 : i32
    %c0_i32_0 = arith.constant 0 : i32
    return %arg0, %c0_i32 : i32, i32
  }
  func.func @transform_8(%arg0: i32) -> (i32, i32) {
    %c0_i32 = arith.constant 0 : i32
    %c0_i32_0 = arith.constant 0 : i32
    return %arg0, %c0_i32 : i32, i32
  }
  func.func @transform_9(%arg0: i32) -> (i32, i32) {
    %c0_i32 = arith.constant 0 : i32
    %c0_i32_0 = arith.constant 0 : i32
    return %arg0, %c0_i32 : i32, i32
  }
}

module attributes {stable_mosaic.version = 11 : i64} {
  func.func @_fused_matmul_kernel(%arg0: i32, %arg1: i32, %arg2: memref<128x576xf32, #tpu.memory_space<vmem>>, %arg3: memref<576x8xf32, #tpu.memory_space<vmem>>, %arg4: memref<1x576xf32, #tpu.memory_space<vmem>>, %arg5: memref<1x576xf32, #tpu.memory_space<vmem>>, %arg6: memref<128x8xf32, #tpu.memory_space<vmem>>) attributes {dimension_semantics = [#tpu.dimension_semantics<parallel>, #tpu.dimension_semantics<parallel>], iteration_bounds = array<i64: 1, 1>, scalar_prefetch = 0 : i64, scratch_operands = 0 : i64, tpu.core_type = #tpu.core_type<tc>, window_params = [{transform_indices = @transform_0, window_bounds = array<i64: 128, 576>}, {transform_indices = @transform_1, window_bounds = array<i64: 576, 8>}, {pipeline_mode = #tpu.pipeline_mode<synchronous>, transform_indices = @transform_2, window_bounds = array<i64: 1, 576>}, {pipeline_mode = #tpu.pipeline_mode<synchronous>, transform_indices = @transform_3, window_bounds = array<i64: 1, 576>}, {transform_indices = @transform_4, window_bounds = array<i64: 128, 8>}]} {
    %c0 = arith.constant 0 : index
    %c0_0 = arith.constant 0 : index
    %0 = vector.load %arg2[%c0, %c0_0] : memref<128x576xf32, #tpu.memory_space<vmem>>, vector<128x576xf32>
    %c0_1 = arith.constant 0 : index
    %c0_2 = arith.constant 0 : index
    %1 = vector.load %arg4[%c0_1, %c0_2] : memref<1x576xf32, #tpu.memory_space<vmem>>, vector<1x576xf32>
    %2 = vector.broadcast %1 : vector<1x576xf32> to vector<128x576xf32>
    %3 = arith.mulf %0, %2 : vector<128x576xf32>
    %c0_3 = arith.constant 0 : index
    %c0_4 = arith.constant 0 : index
    %4 = vector.load %arg5[%c0_3, %c0_4] : memref<1x576xf32, #tpu.memory_space<vmem>>, vector<1x576xf32>
    %5 = vector.broadcast %4 : vector<1x576xf32> to vector<128x576xf32>
    %6 = arith.addf %3, %5 : vector<128x576xf32>
    %cst = arith.constant 0.000000e+00 : f32
    %7 = vector.broadcast %cst : f32 to vector<128x576xf32>
    %8 = arith.maximumf %6, %7 : vector<128x576xf32>
    %c0_5 = arith.constant 0 : index
    %c0_6 = arith.constant 0 : index
    %9 = vector.load %arg3[%c0_5, %c0_6] : memref<576x8xf32, #tpu.memory_space<vmem>>, vector<576x8xf32>
    %cst_7 = arith.constant dense<0.000000e+00> : vector<128x8xf32>
    %10 = tpu.matmul %8, %9, %cst_7 {dimension_numbers = #tpu.dot_dimension_numbers<[1], [0], [0], [1], [0, 0, 1, 1], [], []>} : vector<128x576xf32>, vector<576x8xf32>, vector<128x8xf32> -> vector<128x8xf32>
    %c0_8 = arith.constant 0 : index
    %c0_9 = arith.constant 0 : index
    %11 = vector.load %arg6[%c0_8, %c0_9] : memref<128x8xf32, #tpu.memory_space<vmem>>, vector<128x8xf32>
    tpu.vector_store %arg6[%c0_8, %c0_9], %10 {strides = array<i32>} : memref<128x8xf32, #tpu.memory_space<vmem>>, vector<128x8xf32>,
    return
  }
  func.func @transform_0(%arg0: i32, %arg1: i32) -> (i32, i32) {
    %c0_i32 = arith.constant 0 : i32
    %c0_i32_0 = arith.constant 0 : i32
    return %arg0, %c0_i32 : i32, i32
  }
  func.func @transform_1(%arg0: i32, %arg1: i32) -> (i32, i32) {
    %c0_i32 = arith.constant 0 : i32
    %c0_i32_0 = arith.constant 0 : i32
    return %c0_i32, %arg1 : i32, i32
  }
  func.func @transform_2(%arg0: i32, %arg1: i32) -> (i32, i32) {
    %c0_i32 = arith.constant 0 : i32
    %c0_i32_0 = arith.constant 0 : i32
    %c0_i32_1 = arith.constant 0 : i32
    return %c0_i32, %c0_i32_0 : i32, i32
  }
  func.func @transform_3(%arg0: i32, %arg1: i32) -> (i32, i32) {
    %c0_i32 = arith.constant 0 : i32
    %c0_i32_0 = arith.constant 0 : i32
    %c0_i32_1 = arith.constant 0 : i32
    return %c0_i32, %c0_i32_0 : i32, i32
  }
  func.func @transform_4(%arg0: i32, %arg1: i32) -> (i32, i32) {
    %c0_i32 = arith.constant 0 : i32
    return %arg0, %arg1 : i32, i32
  }
}

module attributes {stable_mosaic.version = 11 : i64} {
  func.func @_fused_matmul_kernel(%arg0: i32, %arg1: i32, %arg2: memref<128x648xf32, #tpu.memory_space<vmem>>, %arg3: memref<648x8xf32, #tpu.memory_space<vmem>>, %arg4: memref<1x648xf32, #tpu.memory_space<vmem>>, %arg5: memref<1x648xf32, #tpu.memory_space<vmem>>, %arg6: memref<128x8xf32, #tpu.memory_space<vmem>>) attributes {dimension_semantics = [#tpu.dimension_semantics<parallel>, #tpu.dimension_semantics<parallel>], iteration_bounds = array<i64: 1, 1>, scalar_prefetch = 0 : i64, scratch_operands = 0 : i64, tpu.core_type = #tpu.core_type<tc>, window_params = [{transform_indices = @transform_0, window_bounds = array<i64: 128, 648>}, {transform_indices = @transform_1, window_bounds = array<i64: 648, 8>}, {pipeline_mode = #tpu.pipeline_mode<synchronous>, transform_indices = @transform_2, window_bounds = array<i64: 1, 648>}, {pipeline_mode = #tpu.pipeline_mode<synchronous>, transform_indices = @transform_3, window_bounds = array<i64: 1, 648>}, {transform_indices = @transform_4, window_bounds = array<i64: 128, 8>}]} {
    %c0 = arith.constant 0 : index
    %c0_0 = arith.constant 0 : index
    %0 = vector.load %arg2[%c0, %c0_0] : memref<128x648xf32, #tpu.memory_space<vmem>>, vector<128x648xf32>
    %c0_1 = arith.constant 0 : index
    %c0_2 = arith.constant 0 : index
    %1 = vector.load %arg4[%c0_1, %c0_2] : memref<1x648xf32, #tpu.memory_space<vmem>>, vector<1x648xf32>
    %2 = vector.broadcast %1 : vector<1x648xf32> to vector<128x648xf32>
    %3 = arith.mulf %0, %2 : vector<128x648xf32>
    %c0_3 = arith.constant 0 : index
    %c0_4 = arith.constant 0 : index
    %4 = vector.load %arg5[%c0_3, %c0_4] : memref<1x648xf32, #tpu.memory_space<vmem>>, vector<1x648xf32>
    %5 = vector.broadcast %4 : vector<1x648xf32> to vector<128x648xf32>
    %6 = arith.addf %3, %5 : vector<128x648xf32>
    %cst = arith.constant 0.000000e+00 : f32
    %7 = vector.broadcast %cst : f32 to vector<128x648xf32>
    %8 = arith.maximumf %6, %7 : vector<128x648xf32>
    %c0_5 = arith.constant 0 : index
    %c0_6 = arith.constant 0 : index
    %9 = vector.load %arg3[%c0_5, %c0_6] : memref<648x8xf32, #tpu.memory_space<vmem>>, vector<648x8xf32>
    %cst_7 = arith.constant dense<0.000000e+00> : vector<128x8xf32>
    %10 = tpu.matmul %8, %9, %cst_7 {dimension_numbers = #tpu.dot_dimension_numbers<[1], [0], [0], [1], [0, 0, 1, 1], [], []>} : vector<128x648xf32>, vector<648x8xf32>, vector<128x8xf32> -> vector<128x8xf32>
    %c0_8 = arith.constant 0 : index
    %c0_9 = arith.constant 0 : index
    %11 = vector.load %arg6[%c0_8, %c0_9] : memref<128x8xf32, #tpu.memory_space<vmem>>, vector<128x8xf32>
    tpu.vector_store %arg6[%c0_8, %c0_9], %10 {strides = array<i32>} : memref<128x8xf32, #tpu.memory_space<vmem>>, vector<128x8xf32>,
    return
  }
  func.func @transform_0(%arg0: i32, %arg1: i32) -> (i32, i32) {
    %c0_i32 = arith.constant 0 : i32
    %c0_i32_0 = arith.constant 0 : i32
    return %arg0, %c0_i32 : i32, i32
  }
  func.func @transform_1(%arg0: i32, %arg1: i32) -> (i32, i32) {
    %c0_i32 = arith.constant 0 : i32
    %c0_i32_0 = arith.constant 0 : i32
    return %c0_i32, %arg1 : i32, i32
  }
  func.func @transform_2(%arg0: i32, %arg1: i32) -> (i32, i32) {
    %c0_i32 = arith.constant 0 : i32
    %c0_i32_0 = arith.constant 0 : i32
    %c0_i32_1 = arith.constant 0 : i32
    return %c0_i32, %c0_i32_0 : i32, i32
  }
  func.func @transform_3(%arg0: i32, %arg1: i32) -> (i32, i32) {
    %c0_i32 = arith.constant 0 : i32
    %c0_i32_0 = arith.constant 0 : i32
    %c0_i32_1 = arith.constant 0 : i32
    return %c0_i32, %c0_i32_0 : i32, i32
  }
  func.func @transform_4(%arg0: i32, %arg1: i32) -> (i32, i32) {
    %c0_i32 = arith.constant 0 : i32
    return %arg0, %arg1 : i32, i32
  }
}

module attributes {stable_mosaic.version = 11 : i64} {
  func.func @_fused_matmul_kernel(%arg0: i32, %arg1: i32, %arg2: memref<128x80xf32, #tpu.memory_space<vmem>>, %arg3: memref<80x40xf32, #tpu.memory_space<vmem>>, %arg4: memref<1x80xf32, #tpu.memory_space<vmem>>, %arg5: memref<1x80xf32, #tpu.memory_space<vmem>>, %arg6: memref<1x40xf32, #tpu.memory_space<vmem>>, %arg7: memref<128x40xf32, #tpu.memory_space<vmem>>) attributes {dimension_semantics = [#tpu.dimension_semantics<parallel>, #tpu.dimension_semantics<parallel>], iteration_bounds = array<i64: 1, 1>, scalar_prefetch = 0 : i64, scratch_operands = 0 : i64, tpu.core_type = #tpu.core_type<tc>, window_params = [{transform_indices = @transform_0, window_bounds = array<i64: 128, 80>}, {transform_indices = @transform_1, window_bounds = array<i64: 80, 40>}, {pipeline_mode = #tpu.pipeline_mode<synchronous>, transform_indices = @transform_2, window_bounds = array<i64: 1, 80>}, {pipeline_mode = #tpu.pipeline_mode<synchronous>, transform_indices = @transform_3, window_bounds = array<i64: 1, 80>}, {transform_indices = @transform_4, window_bounds = array<i64: 1, 40>}, {transform_indices = @transform_5, window_bounds = array<i64: 128, 40>}]} {
    %c0 = arith.constant 0 : index
    %c0_0 = arith.constant 0 : index
    %0 = vector.load %arg2[%c0, %c0_0] : memref<128x80xf32, #tpu.memory_space<vmem>>, vector<128x80xf32>
    %c0_1 = arith.constant 0 : index
    %c0_2 = arith.constant 0 : index
    %1 = vector.load %arg4[%c0_1, %c0_2] : memref<1x80xf32, #tpu.memory_space<vmem>>, vector<1x80xf32>
    %2 = vector.broadcast %1 : vector<1x80xf32> to vector<128x80xf32>
    %3 = arith.mulf %0, %2 : vector<128x80xf32>
    %c0_3 = arith.constant 0 : index
    %c0_4 = arith.constant 0 : index
    %4 = vector.load %arg5[%c0_3, %c0_4] : memref<1x80xf32, #tpu.memory_space<vmem>>, vector<1x80xf32>
    %5 = vector.broadcast %4 : vector<1x80xf32> to vector<128x80xf32>
    %6 = arith.addf %3, %5 : vector<128x80xf32>
    %cst = arith.constant 0.000000e+00 : f32
    %7 = vector.broadcast %cst : f32 to vector<128x80xf32>
    %8 = arith.maximumf %6, %7 : vector<128x80xf32>
    %c0_5 = arith.constant 0 : index
    %c0_6 = arith.constant 0 : index
    %9 = vector.load %arg3[%c0_5, %c0_6] : memref<80x40xf32, #tpu.memory_space<vmem>>, vector<80x40xf32>
    %cst_7 = arith.constant dense<0.000000e+00> : vector<128x40xf32>
    %10 = tpu.matmul %8, %9, %cst_7 {dimension_numbers = #tpu.dot_dimension_numbers<[1], [0], [0], [1], [0, 0, 1, 1], [], []>} : vector<128x80xf32>, vector<80x40xf32>, vector<128x40xf32> -> vector<128x40xf32>
    %c0_8 = arith.constant 0 : index
    %c0_9 = arith.constant 0 : index
    %11 = vector.load %arg6[%c0_8, %c0_9] : memref<1x40xf32, #tpu.memory_space<vmem>>, vector<1x40xf32>
    %12 = vector.broadcast %11 : vector<1x40xf32> to vector<128x40xf32>
    %13 = arith.addf %10, %12 : vector<128x40xf32>
    %c0_10 = arith.constant 0 : index
    %c0_11 = arith.constant 0 : index
    %14 = vector.load %arg7[%c0_10, %c0_11] : memref<128x40xf32, #tpu.memory_space<vmem>>, vector<128x40xf32>
    tpu.vector_store %arg7[%c0_10, %c0_11], %13 {strides = array<i32>} : memref<128x40xf32, #tpu.memory_space<vmem>>, vector<128x40xf32>,
    return
  }
  func.func @transform_0(%arg0: i32, %arg1: i32) -> (i32, i32) {
    %c0_i32 = arith.constant 0 : i32
    %c0_i32_0 = arith.constant 0 : i32
    return %arg0, %c0_i32 : i32, i32
  }
  func.func @transform_1(%arg0: i32, %arg1: i32) -> (i32, i32) {
    %c0_i32 = arith.constant 0 : i32
    %c0_i32_0 = arith.constant 0 : i32
    return %c0_i32, %arg1 : i32, i32
  }
  func.func @transform_2(%arg0: i32, %arg1: i32) -> (i32, i32) {
    %c0_i32 = arith.constant 0 : i32
    %c0_i32_0 = arith.constant 0 : i32
    %c0_i32_1 = arith.constant 0 : i32
    return %c0_i32, %c0_i32_0 : i32, i32
  }
  func.func @transform_3(%arg0: i32, %arg1: i32) -> (i32, i32) {
    %c0_i32 = arith.constant 0 : i32
    %c0_i32_0 = arith.constant 0 : i32
    %c0_i32_1 = arith.constant 0 : i32
    return %c0_i32, %c0_i32_0 : i32, i32
  }
  func.func @transform_4(%arg0: i32, %arg1: i32) -> (i32, i32) {
    %c0_i32 = arith.constant 0 : i32
    %c0_i32_0 = arith.constant 0 : i32
    return %c0_i32, %arg1 : i32, i32
  }
  func.func @transform_5(%arg0: i32, %arg1: i32) -> (i32, i32) {
    %c0_i32 = arith.constant 0 : i32
    return %arg0, %arg1 : i32, i32
  }
}

module attributes {stable_mosaic.version = 11 : i64} {
  func.func @_pool_kernel(%arg0: i32, %arg1: memref<32x40xf32, #tpu.memory_space<vmem>>, %arg2: memref<32x40xf32, #tpu.memory_space<vmem>>, %arg3: memref<32x40xf32, #tpu.memory_space<vmem>>, %arg4: memref<32x40xf32, #tpu.memory_space<vmem>>, %arg5: memref<32x40xf32, #tpu.memory_space<vmem>>) attributes {dimension_semantics = [#tpu.dimension_semantics<parallel>], iteration_bounds = array<i64: 1>, scalar_prefetch = 0 : i64, scratch_operands = 0 : i64, tpu.core_type = #tpu.core_type<tc>, window_params = [{transform_indices = @transform_0, window_bounds = array<i64: 32, 40>}, {transform_indices = @transform_1, window_bounds = array<i64: 32, 40>}, {transform_indices = @transform_2, window_bounds = array<i64: 32, 40>}, {transform_indices = @transform_3, window_bounds = array<i64: 32, 40>}, {transform_indices = @transform_4, window_bounds = array<i64: 32, 40>}]} {
    %c0 = arith.constant 0 : index
    %c0_0 = arith.constant 0 : index
    %0 = vector.load %arg1[%c0, %c0_0] : memref<32x40xf32, #tpu.memory_space<vmem>>, vector<32x40xf32>
    %c0_1 = arith.constant 0 : index
    %c0_2 = arith.constant 0 : index
    %1 = vector.load %arg2[%c0_1, %c0_2] : memref<32x40xf32, #tpu.memory_space<vmem>>, vector<32x40xf32>
    %2 = arith.addf %0, %1 : vector<32x40xf32>
    %c0_3 = arith.constant 0 : index
    %c0_4 = arith.constant 0 : index
    %3 = vector.load %arg3[%c0_3, %c0_4] : memref<32x40xf32, #tpu.memory_space<vmem>>, vector<32x40xf32>
    %4 = arith.addf %2, %3 : vector<32x40xf32>
    %c0_5 = arith.constant 0 : index
    %c0_6 = arith.constant 0 : index
    %5 = vector.load %arg4[%c0_5, %c0_6] : memref<32x40xf32, #tpu.memory_space<vmem>>, vector<32x40xf32>
    %6 = arith.addf %4, %5 : vector<32x40xf32>
    %cst = arith.constant 2.500000e-01 : f32
    %7 = vector.broadcast %cst : f32 to vector<32x40xf32>
    %8 = arith.mulf %6, %7 : vector<32x40xf32>
    %c0_7 = arith.constant 0 : index
    %c0_8 = arith.constant 0 : index
    %9 = vector.load %arg5[%c0_7, %c0_8] : memref<32x40xf32, #tpu.memory_space<vmem>>, vector<32x40xf32>
    tpu.vector_store %arg5[%c0_7, %c0_8], %8 {strides = array<i32>} : memref<32x40xf32, #tpu.memory_space<vmem>>, vector<32x40xf32>,
    return
  }
  func.func @transform_0(%arg0: i32) -> (i32, i32) {
    %c0_i32 = arith.constant 0 : i32
    %c0_i32_0 = arith.constant 0 : i32
    return %arg0, %c0_i32 : i32, i32
  }
  func.func @transform_1(%arg0: i32) -> (i32, i32) {
    %c0_i32 = arith.constant 0 : i32
    %c0_i32_0 = arith.constant 0 : i32
    return %arg0, %c0_i32 : i32, i32
  }
  func.func @transform_2(%arg0: i32) -> (i32, i32) {
    %c0_i32 = arith.constant 0 : i32
    %c0_i32_0 = arith.constant 0 : i32
    return %arg0, %c0_i32 : i32, i32
  }
  func.func @transform_3(%arg0: i32) -> (i32, i32) {
    %c0_i32 = arith.constant 0 : i32
    %c0_i32_0 = arith.constant 0 : i32
    return %arg0, %c0_i32 : i32, i32
  }
  func.func @transform_4(%arg0: i32) -> (i32, i32) {
    %c0_i32 = arith.constant 0 : i32
    %c0_i32_0 = arith.constant 0 : i32
    return %arg0, %c0_i32 : i32, i32
  }
}

module attributes {stable_mosaic.version = 11 : i64} {
  func.func @_fused_matmul_kernel(%arg0: i32, %arg1: i32, %arg2: memref<32x360xf32, #tpu.memory_space<vmem>>, %arg3: memref<360x8xf32, #tpu.memory_space<vmem>>, %arg4: memref<1x360xf32, #tpu.memory_space<vmem>>, %arg5: memref<1x360xf32, #tpu.memory_space<vmem>>, %arg6: memref<32x8xf32, #tpu.memory_space<vmem>>) attributes {dimension_semantics = [#tpu.dimension_semantics<parallel>, #tpu.dimension_semantics<parallel>], iteration_bounds = array<i64: 1, 1>, scalar_prefetch = 0 : i64, scratch_operands = 0 : i64, tpu.core_type = #tpu.core_type<tc>, window_params = [{transform_indices = @transform_0, window_bounds = array<i64: 32, 360>}, {transform_indices = @transform_1, window_bounds = array<i64: 360, 8>}, {pipeline_mode = #tpu.pipeline_mode<synchronous>, transform_indices = @transform_2, window_bounds = array<i64: 1, 360>}, {pipeline_mode = #tpu.pipeline_mode<synchronous>, transform_indices = @transform_3, window_bounds = array<i64: 1, 360>}, {transform_indices = @transform_4, window_bounds = array<i64: 32, 8>}]} {
    %c0 = arith.constant 0 : index
    %c0_0 = arith.constant 0 : index
    %0 = vector.load %arg2[%c0, %c0_0] : memref<32x360xf32, #tpu.memory_space<vmem>>, vector<32x360xf32>
    %c0_1 = arith.constant 0 : index
    %c0_2 = arith.constant 0 : index
    %1 = vector.load %arg4[%c0_1, %c0_2] : memref<1x360xf32, #tpu.memory_space<vmem>>, vector<1x360xf32>
    %2 = vector.broadcast %1 : vector<1x360xf32> to vector<32x360xf32>
    %3 = arith.mulf %0, %2 : vector<32x360xf32>
    %c0_3 = arith.constant 0 : index
    %c0_4 = arith.constant 0 : index
    %4 = vector.load %arg5[%c0_3, %c0_4] : memref<1x360xf32, #tpu.memory_space<vmem>>, vector<1x360xf32>
    %5 = vector.broadcast %4 : vector<1x360xf32> to vector<32x360xf32>
    %6 = arith.addf %3, %5 : vector<32x360xf32>
    %cst = arith.constant 0.000000e+00 : f32
    %7 = vector.broadcast %cst : f32 to vector<32x360xf32>
    %8 = arith.maximumf %6, %7 : vector<32x360xf32>
    %c0_5 = arith.constant 0 : index
    %c0_6 = arith.constant 0 : index
    %9 = vector.load %arg3[%c0_5, %c0_6] : memref<360x8xf32, #tpu.memory_space<vmem>>, vector<360x8xf32>
    %cst_7 = arith.constant dense<0.000000e+00> : vector<32x8xf32>
    %10 = tpu.matmul %8, %9, %cst_7 {dimension_numbers = #tpu.dot_dimension_numbers<[1], [0], [0], [1], [0, 0, 1, 1], [], []>} : vector<32x360xf32>, vector<360x8xf32>, vector<32x8xf32> -> vector<32x8xf32>
    %c0_8 = arith.constant 0 : index
    %c0_9 = arith.constant 0 : index
    %11 = vector.load %arg6[%c0_8, %c0_9] : memref<32x8xf32, #tpu.memory_space<vmem>>, vector<32x8xf32>
    tpu.vector_store %arg6[%c0_8, %c0_9], %10 {strides = array<i32>} : memref<32x8xf32, #tpu.memory_space<vmem>>, vector<32x8xf32>,
    return
  }
  func.func @transform_0(%arg0: i32, %arg1: i32) -> (i32, i32) {
    %c0_i32 = arith.constant 0 : i32
    %c0_i32_0 = arith.constant 0 : i32
    return %arg0, %c0_i32 : i32, i32
  }
  func.func @transform_1(%arg0: i32, %arg1: i32) -> (i32, i32) {
    %c0_i32 = arith.constant 0 : i32
    %c0_i32_0 = arith.constant 0 : i32
    return %c0_i32, %arg1 : i32, i32
  }
  func.func @transform_2(%arg0: i32, %arg1: i32) -> (i32, i32) {
    %c0_i32 = arith.constant 0 : i32
    %c0_i32_0 = arith.constant 0 : i32
    %c0_i32_1 = arith.constant 0 : i32
    return %c0_i32, %c0_i32_0 : i32, i32
  }
  func.func @transform_3(%arg0: i32, %arg1: i32) -> (i32, i32) {
    %c0_i32 = arith.constant 0 : i32
    %c0_i32_0 = arith.constant 0 : i32
    %c0_i32_1 = arith.constant 0 : i32
    return %c0_i32, %c0_i32_0 : i32, i32
  }
  func.func @transform_4(%arg0: i32, %arg1: i32) -> (i32, i32) {
    %c0_i32 = arith.constant 0 : i32
    return %arg0, %arg1 : i32, i32
  }
}

module attributes {stable_mosaic.version = 11 : i64} {
  func.func @_fused_matmul_kernel(%arg0: i32, %arg1: i32, %arg2: memref<32x432xf32, #tpu.memory_space<vmem>>, %arg3: memref<432x8xf32, #tpu.memory_space<vmem>>, %arg4: memref<1x432xf32, #tpu.memory_space<vmem>>, %arg5: memref<1x432xf32, #tpu.memory_space<vmem>>, %arg6: memref<32x8xf32, #tpu.memory_space<vmem>>) attributes {dimension_semantics = [#tpu.dimension_semantics<parallel>, #tpu.dimension_semantics<parallel>], iteration_bounds = array<i64: 1, 1>, scalar_prefetch = 0 : i64, scratch_operands = 0 : i64, tpu.core_type = #tpu.core_type<tc>, window_params = [{transform_indices = @transform_0, window_bounds = array<i64: 32, 432>}, {transform_indices = @transform_1, window_bounds = array<i64: 432, 8>}, {pipeline_mode = #tpu.pipeline_mode<synchronous>, transform_indices = @transform_2, window_bounds = array<i64: 1, 432>}, {pipeline_mode = #tpu.pipeline_mode<synchronous>, transform_indices = @transform_3, window_bounds = array<i64: 1, 432>}, {transform_indices = @transform_4, window_bounds = array<i64: 32, 8>}]} {
    %c0 = arith.constant 0 : index
    %c0_0 = arith.constant 0 : index
    %0 = vector.load %arg2[%c0, %c0_0] : memref<32x432xf32, #tpu.memory_space<vmem>>, vector<32x432xf32>
    %c0_1 = arith.constant 0 : index
    %c0_2 = arith.constant 0 : index
    %1 = vector.load %arg4[%c0_1, %c0_2] : memref<1x432xf32, #tpu.memory_space<vmem>>, vector<1x432xf32>
    %2 = vector.broadcast %1 : vector<1x432xf32> to vector<32x432xf32>
    %3 = arith.mulf %0, %2 : vector<32x432xf32>
    %c0_3 = arith.constant 0 : index
    %c0_4 = arith.constant 0 : index
    %4 = vector.load %arg5[%c0_3, %c0_4] : memref<1x432xf32, #tpu.memory_space<vmem>>, vector<1x432xf32>
    %5 = vector.broadcast %4 : vector<1x432xf32> to vector<32x432xf32>
    %6 = arith.addf %3, %5 : vector<32x432xf32>
    %cst = arith.constant 0.000000e+00 : f32
    %7 = vector.broadcast %cst : f32 to vector<32x432xf32>
    %8 = arith.maximumf %6, %7 : vector<32x432xf32>
    %c0_5 = arith.constant 0 : index
    %c0_6 = arith.constant 0 : index
    %9 = vector.load %arg3[%c0_5, %c0_6] : memref<432x8xf32, #tpu.memory_space<vmem>>, vector<432x8xf32>
    %cst_7 = arith.constant dense<0.000000e+00> : vector<32x8xf32>
    %10 = tpu.matmul %8, %9, %cst_7 {dimension_numbers = #tpu.dot_dimension_numbers<[1], [0], [0], [1], [0, 0, 1, 1], [], []>} : vector<32x432xf32>, vector<432x8xf32>, vector<32x8xf32> -> vector<32x8xf32>
    %c0_8 = arith.constant 0 : index
    %c0_9 = arith.constant 0 : index
    %11 = vector.load %arg6[%c0_8, %c0_9] : memref<32x8xf32, #tpu.memory_space<vmem>>, vector<32x8xf32>
    tpu.vector_store %arg6[%c0_8, %c0_9], %10 {strides = array<i32>} : memref<32x8xf32, #tpu.memory_space<vmem>>, vector<32x8xf32>,
    return
  }
  func.func @transform_0(%arg0: i32, %arg1: i32) -> (i32, i32) {
    %c0_i32 = arith.constant 0 : i32
    %c0_i32_0 = arith.constant 0 : i32
    return %arg0, %c0_i32 : i32, i32
  }
  func.func @transform_1(%arg0: i32, %arg1: i32) -> (i32, i32) {
    %c0_i32 = arith.constant 0 : i32
    %c0_i32_0 = arith.constant 0 : i32
    return %c0_i32, %arg1 : i32, i32
  }
  func.func @transform_2(%arg0: i32, %arg1: i32) -> (i32, i32) {
    %c0_i32 = arith.constant 0 : i32
    %c0_i32_0 = arith.constant 0 : i32
    %c0_i32_1 = arith.constant 0 : i32
    return %c0_i32, %c0_i32_0 : i32, i32
  }
  func.func @transform_3(%arg0: i32, %arg1: i32) -> (i32, i32) {
    %c0_i32 = arith.constant 0 : i32
    %c0_i32_0 = arith.constant 0 : i32
    %c0_i32_1 = arith.constant 0 : i32
    return %c0_i32, %c0_i32_0 : i32, i32
  }
  func.func @transform_4(%arg0: i32, %arg1: i32) -> (i32, i32) {
    %c0_i32 = arith.constant 0 : i32
    return %arg0, %arg1 : i32, i32
  }
}

module attributes {stable_mosaic.version = 11 : i64} {
  func.func @_pool_kernel(%arg0: i32, %arg1: memref<1x56xf32, #tpu.memory_space<vmem>>, %arg2: memref<1x56xf32, #tpu.memory_space<vmem>>, %arg3: memref<2x56xf32, #tpu.memory_space<vmem>>, %arg4: memref<2x56xf32, #tpu.memory_space<vmem>>, %arg5: memref<2x56xf32, #tpu.memory_space<vmem>>, %arg6: memref<2x56xf32, #tpu.memory_space<vmem>>, %arg7: memref<2x56xf32, #tpu.memory_space<vmem>>, %arg8: memref<2x56xf32, #tpu.memory_space<vmem>>, %arg9: memref<2x56xf32, #tpu.memory_space<vmem>>, %arg10: memref<2x56xf32, #tpu.memory_space<vmem>>, %arg11: memref<2x56xf32, #tpu.memory_space<vmem>>, %arg12: memref<2x56xf32, #tpu.memory_space<vmem>>) attributes {dimension_semantics = [#tpu.dimension_semantics<parallel>], iteration_bounds = array<i64: 1>, scalar_prefetch = 0 : i64, scratch_operands = 0 : i64, tpu.core_type = #tpu.core_type<tc>, window_params = [{pipeline_mode = #tpu.pipeline_mode<synchronous>, transform_indices = @transform_0, window_bounds = array<i64: 1, 56>}, {pipeline_mode = #tpu.pipeline_mode<synchronous>, transform_indices = @transform_1, window_bounds = array<i64: 1, 56>}, {transform_indices = @transform_2, window_bounds = array<i64: 2, 56>}, {transform_indices = @transform_3, window_bounds = array<i64: 2, 56>}, {transform_indices = @transform_4, window_bounds = array<i64: 2, 56>}, {transform_indices = @transform_5, window_bounds = array<i64: 2, 56>}, {transform_indices = @transform_6, window_bounds = array<i64: 2, 56>}, {transform_indices = @transform_7, window_bounds = array<i64: 2, 56>}, {transform_indices = @transform_8, window_bounds = array<i64: 2, 56>}, {transform_indices = @transform_9, window_bounds = array<i64: 2, 56>}, {transform_indices = @transform_10, window_bounds = array<i64: 2, 56>}, {transform_indices = @transform_11, window_bounds = array<i64: 2, 56>}]} {
    %c0 = arith.constant 0 : index
    %c0_0 = arith.constant 0 : index
    %0 = vector.load %arg3[%c0, %c0_0] : memref<2x56xf32, #tpu.memory_space<vmem>>, vector<2x56xf32>
    %c0_1 = arith.constant 0 : index
    %c0_2 = arith.constant 0 : index
    %1 = vector.load %arg1[%c0_1, %c0_2] : memref<1x56xf32, #tpu.memory_space<vmem>>, vector<1x56xf32>
    %2 = vector.broadcast %1 : vector<1x56xf32> to vector<2x56xf32>
    %3 = arith.mulf %0, %2 : vector<2x56xf32>
    %c0_3 = arith.constant 0 : index
    %c0_4 = arith.constant 0 : index
    %4 = vector.load %arg2[%c0_3, %c0_4] : memref<1x56xf32, #tpu.memory_space<vmem>>, vector<1x56xf32>
    %5 = vector.broadcast %4 : vector<1x56xf32> to vector<2x56xf32>
    %6 = arith.addf %3, %5 : vector<2x56xf32>
    %cst = arith.constant 0.000000e+00 : f32
    %7 = vector.broadcast %cst : f32 to vector<2x56xf32>
    %8 = arith.maximumf %6, %7 : vector<2x56xf32>
    %c0_5 = arith.constant 0 : index
    %c0_6 = arith.constant 0 : index
    %9 = vector.load %arg4[%c0_5, %c0_6] : memref<2x56xf32, #tpu.memory_space<vmem>>, vector<2x56xf32>
    %c0_7 = arith.constant 0 : index
    %c0_8 = arith.constant 0 : index
    %10 = vector.load %arg1[%c0_7, %c0_8] : memref<1x56xf32, #tpu.memory_space<vmem>>, vector<1x56xf32>
    %11 = vector.broadcast %10 : vector<1x56xf32> to vector<2x56xf32>
    %12 = arith.mulf %9, %11 : vector<2x56xf32>
    %c0_9 = arith.constant 0 : index
    %c0_10 = arith.constant 0 : index
    %13 = vector.load %arg2[%c0_9, %c0_10] : memref<1x56xf32, #tpu.memory_space<vmem>>, vector<1x56xf32>
    %14 = vector.broadcast %13 : vector<1x56xf32> to vector<2x56xf32>
    %15 = arith.addf %12, %14 : vector<2x56xf32>
    %cst_11 = arith.constant 0.000000e+00 : f32
    %16 = vector.broadcast %cst_11 : f32 to vector<2x56xf32>
    %17 = arith.maximumf %15, %16 : vector<2x56xf32>
    %18 = arith.addf %8, %17 : vector<2x56xf32>
    %c0_12 = arith.constant 0 : index
    %c0_13 = arith.constant 0 : index
    %19 = vector.load %arg5[%c0_12, %c0_13] : memref<2x56xf32, #tpu.memory_space<vmem>>, vector<2x56xf32>
    %c0_14 = arith.constant 0 : index
    %c0_15 = arith.constant 0 : index
    %20 = vector.load %arg1[%c0_14, %c0_15] : memref<1x56xf32, #tpu.memory_space<vmem>>, vector<1x56xf32>
    %21 = vector.broadcast %20 : vector<1x56xf32> to vector<2x56xf32>
    %22 = arith.mulf %19, %21 : vector<2x56xf32>
    %c0_16 = arith.constant 0 : index
    %c0_17 = arith.constant 0 : index
    %23 = vector.load %arg2[%c0_16, %c0_17] : memref<1x56xf32, #tpu.memory_space<vmem>>, vector<1x56xf32>
    %24 = vector.broadcast %23 : vector<1x56xf32> to vector<2x56xf32>
    %25 = arith.addf %22, %24 : vector<2x56xf32>
    %cst_18 = arith.constant 0.000000e+00 : f32
    %26 = vector.broadcast %cst_18 : f32 to vector<2x56xf32>
    %27 = arith.maximumf %25, %26 : vector<2x56xf32>
    %28 = arith.addf %18, %27 : vector<2x56xf32>
    %c0_19 = arith.constant 0 : index
    %c0_20 = arith.constant 0 : index
    %29 = vector.load %arg6[%c0_19, %c0_20] : memref<2x56xf32, #tpu.memory_space<vmem>>, vector<2x56xf32>
    %c0_21 = arith.constant 0 : index
    %c0_22 = arith.constant 0 : index
    %30 = vector.load %arg1[%c0_21, %c0_22] : memref<1x56xf32, #tpu.memory_space<vmem>>, vector<1x56xf32>
    %31 = vector.broadcast %30 : vector<1x56xf32> to vector<2x56xf32>
    %32 = arith.mulf %29, %31 : vector<2x56xf32>
    %c0_23 = arith.constant 0 : index
    %c0_24 = arith.constant 0 : index
    %33 = vector.load %arg2[%c0_23, %c0_24] : memref<1x56xf32, #tpu.memory_space<vmem>>, vector<1x56xf32>
    %34 = vector.broadcast %33 : vector<1x56xf32> to vector<2x56xf32>
    %35 = arith.addf %32, %34 : vector<2x56xf32>
    %cst_25 = arith.constant 0.000000e+00 : f32
    %36 = vector.broadcast %cst_25 : f32 to vector<2x56xf32>
    %37 = arith.maximumf %35, %36 : vector<2x56xf32>
    %38 = arith.addf %28, %37 : vector<2x56xf32>
    %c0_26 = arith.constant 0 : index
    %c0_27 = arith.constant 0 : index
    %39 = vector.load %arg7[%c0_26, %c0_27] : memref<2x56xf32, #tpu.memory_space<vmem>>, vector<2x56xf32>
    %c0_28 = arith.constant 0 : index
    %c0_29 = arith.constant 0 : index
    %40 = vector.load %arg1[%c0_28, %c0_29] : memref<1x56xf32, #tpu.memory_space<vmem>>, vector<1x56xf32>
    %41 = vector.broadcast %40 : vector<1x56xf32> to vector<2x56xf32>
    %42 = arith.mulf %39, %41 : vector<2x56xf32>
    %c0_30 = arith.constant 0 : index
    %c0_31 = arith.constant 0 : index
    %43 = vector.load %arg2[%c0_30, %c0_31] : memref<1x56xf32, #tpu.memory_space<vmem>>, vector<1x56xf32>
    %44 = vector.broadcast %43 : vector<1x56xf32> to vector<2x56xf32>
    %45 = arith.addf %42, %44 : vector<2x56xf32>
    %cst_32 = arith.constant 0.000000e+00 : f32
    %46 = vector.broadcast %cst_32 : f32 to vector<2x56xf32>
    %47 = arith.maximumf %45, %46 : vector<2x56xf32>
    %48 = arith.addf %38, %47 : vector<2x56xf32>
    %c0_33 = arith.constant 0 : index
    %c0_34 = arith.constant 0 : index
    %49 = vector.load %arg8[%c0_33, %c0_34] : memref<2x56xf32, #tpu.memory_space<vmem>>, vector<2x56xf32>
    %c0_35 = arith.constant 0 : index
    %c0_36 = arith.constant 0 : index
    %50 = vector.load %arg1[%c0_35, %c0_36] : memref<1x56xf32, #tpu.memory_space<vmem>>, vector<1x56xf32>
    %51 = vector.broadcast %50 : vector<1x56xf32> to vector<2x56xf32>
    %52 = arith.mulf %49, %51 : vector<2x56xf32>
    %c0_37 = arith.constant 0 : index
    %c0_38 = arith.constant 0 : index
    %53 = vector.load %arg2[%c0_37, %c0_38] : memref<1x56xf32, #tpu.memory_space<vmem>>, vector<1x56xf32>
    %54 = vector.broadcast %53 : vector<1x56xf32> to vector<2x56xf32>
    %55 = arith.addf %52, %54 : vector<2x56xf32>
    %cst_39 = arith.constant 0.000000e+00 : f32
    %56 = vector.broadcast %cst_39 : f32 to vector<2x56xf32>
    %57 = arith.maximumf %55, %56 : vector<2x56xf32>
    %58 = arith.addf %48, %57 : vector<2x56xf32>
    %c0_40 = arith.constant 0 : index
    %c0_41 = arith.constant 0 : index
    %59 = vector.load %arg9[%c0_40, %c0_41] : memref<2x56xf32, #tpu.memory_space<vmem>>, vector<2x56xf32>
    %c0_42 = arith.constant 0 : index
    %c0_43 = arith.constant 0 : index
    %60 = vector.load %arg1[%c0_42, %c0_43] : memref<1x56xf32, #tpu.memory_space<vmem>>, vector<1x56xf32>
    %61 = vector.broadcast %60 : vector<1x56xf32> to vector<2x56xf32>
    %62 = arith.mulf %59, %61 : vector<2x56xf32>
    %c0_44 = arith.constant 0 : index
    %c0_45 = arith.constant 0 : index
    %63 = vector.load %arg2[%c0_44, %c0_45] : memref<1x56xf32, #tpu.memory_space<vmem>>, vector<1x56xf32>
    %64 = vector.broadcast %63 : vector<1x56xf32> to vector<2x56xf32>
    %65 = arith.addf %62, %64 : vector<2x56xf32>
    %cst_46 = arith.constant 0.000000e+00 : f32
    %66 = vector.broadcast %cst_46 : f32 to vector<2x56xf32>
    %67 = arith.maximumf %65, %66 : vector<2x56xf32>
    %68 = arith.addf %58, %67 : vector<2x56xf32>
    %c0_47 = arith.constant 0 : index
    %c0_48 = arith.constant 0 : index
    %69 = vector.load %arg10[%c0_47, %c0_48] : memref<2x56xf32, #tpu.memory_space<vmem>>, vector<2x56xf32>
    %c0_49 = arith.constant 0 : index
    %c0_50 = arith.constant 0 : index
    %70 = vector.load %arg1[%c0_49, %c0_50] : memref<1x56xf32, #tpu.memory_space<vmem>>, vector<1x56xf32>
    %71 = vector.broadcast %70 : vector<1x56xf32> to vector<2x56xf32>
    %72 = arith.mulf %69, %71 : vector<2x56xf32>
    %c0_51 = arith.constant 0 : index
    %c0_52 = arith.constant 0 : index
    %73 = vector.load %arg2[%c0_51, %c0_52] : memref<1x56xf32, #tpu.memory_space<vmem>>, vector<1x56xf32>
    %74 = vector.broadcast %73 : vector<1x56xf32> to vector<2x56xf32>
    %75 = arith.addf %72, %74 : vector<2x56xf32>
    %cst_53 = arith.constant 0.000000e+00 : f32
    %76 = vector.broadcast %cst_53 : f32 to vector<2x56xf32>
    %77 = arith.maximumf %75, %76 : vector<2x56xf32>
    %78 = arith.addf %68, %77 : vector<2x56xf32>
    %c0_54 = arith.constant 0 : index
    %c0_55 = arith.constant 0 : index
    %79 = vector.load %arg11[%c0_54, %c0_55] : memref<2x56xf32, #tpu.memory_space<vmem>>, vector<2x56xf32>
    %c0_56 = arith.constant 0 : index
    %c0_57 = arith.constant 0 : index
    %80 = vector.load %arg1[%c0_56, %c0_57] : memref<1x56xf32, #tpu.memory_space<vmem>>, vector<1x56xf32>
    %81 = vector.broadcast %80 : vector<1x56xf32> to vector<2x56xf32>
    %82 = arith.mulf %79, %81 : vector<2x56xf32>
    %c0_58 = arith.constant 0 : index
    %c0_59 = arith.constant 0 : index
    %83 = vector.load %arg2[%c0_58, %c0_59] : memref<1x56xf32, #tpu.memory_space<vmem>>, vector<1x56xf32>
    %84 = vector.broadcast %83 : vector<1x56xf32> to vector<2x56xf32>
    %85 = arith.addf %82, %84 : vector<2x56xf32>
    %cst_60 = arith.constant 0.000000e+00 : f32
    %86 = vector.broadcast %cst_60 : f32 to vector<2x56xf32>
    %87 = arith.maximumf %85, %86 : vector<2x56xf32>
    %88 = arith.addf %78, %87 : vector<2x56xf32>
    %cst_61 = arith.constant 0.111111112 : f32
    %89 = vector.broadcast %cst_61 : f32 to vector<2x56xf32>
    %90 = arith.mulf %88, %89 : vector<2x56xf32>
    %c0_62 = arith.constant 0 : index
    %c0_63 = arith.constant 0 : index
    %91 = vector.load %arg12[%c0_62, %c0_63] : memref<2x56xf32, #tpu.memory_space<vmem>>, vector<2x56xf32>
    tpu.vector_store %arg12[%c0_62, %c0_63], %90 {strides = array<i32>} : memref<2x56xf32, #tpu.memory_space<vmem>>, vector<2x56xf32>,
    return
  }
  func.func @transform_0(%arg0: i32) -> (i32, i32) {
    %c0_i32 = arith.constant 0 : i32
    %c0_i32_0 = arith.constant 0 : i32
    %c0_i32_1 = arith.constant 0 : i32
    return %c0_i32, %c0_i32_0 : i32, i32
  }
  func.func @transform_1(%arg0: i32) -> (i32, i32) {
    %c0_i32 = arith.constant 0 : i32
    %c0_i32_0 = arith.constant 0 : i32
    %c0_i32_1 = arith.constant 0 : i32
    return %c0_i32, %c0_i32_0 : i32, i32
  }
  func.func @transform_2(%arg0: i32) -> (i32, i32) {
    %c0_i32 = arith.constant 0 : i32
    %c0_i32_0 = arith.constant 0 : i32
    return %arg0, %c0_i32 : i32, i32
  }
  func.func @transform_3(%arg0: i32) -> (i32, i32) {
    %c0_i32 = arith.constant 0 : i32
    %c0_i32_0 = arith.constant 0 : i32
    return %arg0, %c0_i32 : i32, i32
  }
  func.func @transform_4(%arg0: i32) -> (i32, i32) {
    %c0_i32 = arith.constant 0 : i32
    %c0_i32_0 = arith.constant 0 : i32
    return %arg0, %c0_i32 : i32, i32
  }
  func.func @transform_5(%arg0: i32) -> (i32, i32) {
    %c0_i32 = arith.constant 0 : i32
    %c0_i32_0 = arith.constant 0 : i32
    return %arg0, %c0_i32 : i32, i32
  }
  func.func @transform_6(%arg0: i32) -> (i32, i32) {
    %c0_i32 = arith.constant 0 : i32
    %c0_i32_0 = arith.constant 0 : i32
    return %arg0, %c0_i32 : i32, i32
  }
  func.func @transform_7(%arg0: i32) -> (i32, i32) {
    %c0_i32 = arith.constant 0 : i32
    %c0_i32_0 = arith.constant 0 : i32
    return %arg0, %c0_i32 : i32, i32
  }
  func.func @transform_8(%arg0: i32) -> (i32, i32) {
    %c0_i32 = arith.constant 0 : i32
    %c0_i32_0 = arith.constant 0 : i32
    return %arg0, %c0_i32 : i32, i32
  }
  func.func @transform_9(%arg0: i32) -> (i32, i32) {
    %c0_i32 = arith.constant 0 : i32
    %c0_i32_0 = arith.constant 0 : i32
    return %arg0, %c0_i32 : i32, i32
  }
  func.func @transform_10(%arg0: i32) -> (i32, i32) {
    %c0_i32 = arith.constant 0 : i32
    %c0_i32_0 = arith.constant 0 : i32
    return %arg0, %c0_i32 : i32, i32
  }
  func.func @transform_11(%arg0: i32) -> (i32, i32) {
    %c0_i32 = arith.constant 0 : i32
    %c0_i32_0 = arith.constant 0 : i32
    return %arg0, %c0_i32 : i32, i32
  }
}

module attributes {stable_mosaic.version = 11 : i64} {
  func.func @_fused_matmul_kernel(%arg0: i32, %arg1: i32, %arg2: memref<2x56xf32, #tpu.memory_space<vmem>>, %arg3: memref<56x10xf32, #tpu.memory_space<vmem>>, %arg4: memref<1x10xf32, #tpu.memory_space<vmem>>, %arg5: memref<2x10xf32, #tpu.memory_space<vmem>>) attributes {dimension_semantics = [#tpu.dimension_semantics<parallel>, #tpu.dimension_semantics<parallel>], iteration_bounds = array<i64: 1, 1>, scalar_prefetch = 0 : i64, scratch_operands = 0 : i64, tpu.core_type = #tpu.core_type<tc>, window_params = [{transform_indices = @transform_0, window_bounds = array<i64: 2, 56>}, {transform_indices = @transform_1, window_bounds = array<i64: 56, 10>}, {transform_indices = @transform_2, window_bounds = array<i64: 1, 10>}, {transform_indices = @transform_3, window_bounds = array<i64: 2, 10>}]} {
    %c0 = arith.constant 0 : index
    %c0_0 = arith.constant 0 : index
    %0 = vector.load %arg2[%c0, %c0_0] : memref<2x56xf32, #tpu.memory_space<vmem>>, vector<2x56xf32>
    %c0_1 = arith.constant 0 : index
    %c0_2 = arith.constant 0 : index
    %1 = vector.load %arg3[%c0_1, %c0_2] : memref<56x10xf32, #tpu.memory_space<vmem>>, vector<56x10xf32>
    %cst = arith.constant dense<0.000000e+00> : vector<2x10xf32>
    %2 = tpu.matmul %0, %1, %cst {dimension_numbers = #tpu.dot_dimension_numbers<[1], [0], [0], [1], [0, 0, 1, 1], [], []>} : vector<2x56xf32>, vector<56x10xf32>, vector<2x10xf32> -> vector<2x10xf32>
    %c0_3 = arith.constant 0 : index
    %c0_4 = arith.constant 0 : index
    %3 = vector.load %arg4[%c0_3, %c0_4] : memref<1x10xf32, #tpu.memory_space<vmem>>, vector<1x10xf32>
    %4 = vector.broadcast %3 : vector<1x10xf32> to vector<2x10xf32>
    %5 = arith.addf %2, %4 : vector<2x10xf32>
    %c0_5 = arith.constant 0 : index
    %c0_6 = arith.constant 0 : index
    %6 = vector.load %arg5[%c0_5, %c0_6] : memref<2x10xf32, #tpu.memory_space<vmem>>, vector<2x10xf32>
    tpu.vector_store %arg5[%c0_5, %c0_6], %5 {strides = array<i32>} : memref<2x10xf32, #tpu.memory_space<vmem>>, vector<2x10xf32>,
    return
  }
  func.func @transform_0(%arg0: i32, %arg1: i32) -> (i32, i32) {
    %c0_i32 = arith.constant 0 : i32
    %c0_i32_0 = arith.constant 0 : i32
    return %arg0, %c0_i32 : i32, i32
  }
  func.func @transform_1(%arg0: i32, %arg1: i32) -> (i32, i32) {
    %c0_i32 = arith.constant 0 : i32
    %c0_i32_0 = arith.constant 0 : i32
    return %c0_i32, %arg1 : i32, i32
  }
  func.func @transform_2(%arg0: i32, %arg1: i32) -> (i32, i32) {
    %c0_i32 = arith.constant 0 : i32
    %c0_i32_0 = arith.constant 0 : i32
    return %c0_i32, %arg1 : i32, i32
  }
  func.func @transform_3(%arg0: i32, %arg1: i32) -> (i32, i32) {
    %c0_i32 = arith.constant 0 : i32
    return %arg0, %arg1 : i32, i32
  }
}

</mosaic_0001>

<llo_original>
// kernel: _lambda_.10
$region0: #{_lambda_.10}
  #allocation0 [shape = 'u32[]', space=smem, size = 0x4, offset = 0x4, fixed_abs, tag = 'smem constant byte address 0x4 - core index']
  #allocation1 [shape = 'u32[144,128]{1,0:T(1,128)}', space=vmem, size = 0x12000, scoped, tag = 'internal scratch']
  %s0 = inlined_call_operand.vmem [shape: f32[512,147], index: 0, kind: input, shape index: {}]
  %s1 = inlined_call_operand.vmem [shape: f32[147,64], index: 1, kind: input, shape index: {}]
  %s2 = inlined_call_operand.vmem [shape: f32[1,64], index: 2, kind: input, shape index: {}]
  %s3 = inlined_call_operand.vmem [shape: f32[1,64], index: 3, kind: input, shape index: {}]
  %s4 = inlined_call_operand.vmem [shape: f32[1,64], index: 4, kind: input, shape index: {}]
  %s5 = inlined_call_operand.vmem [shape: f32[512,64], index: 5, kind: output, shape index: {}]
  %s6 = sld [smem:[#allocation0]]
  $region53: #{_lambda_.10} parent=0
    _
  %s8 = ssub.s32 1, %s6
  %s9 = scalar_select 0, %s8, %s6
  loop: start=0, step=1, limit=6
  $region2: #{_lambda_.10} parent=0 // loop_pre_header
    _
  $region3: #{_lambda_.10} parent=0 // loop_header
    %s11 = sphi 0, %s15
    %p12 = scmp.ge.s32.totalorder %s11, 6
    %s18 = sphi 0, %s30
    %s19 = sphi 0, %s26
    %s20 = sphi 0, %s18
    %s21 = sphi 0, %s19
    %s22 = sphi 0, %s20
    %s23 = sphi 0, %s21
    %s33 = sphi 0, %s35
    %s36 = sphi 0, %s33
    %s37 = sphi 0, %s36
    %s53 = sphi 0, %s37
    %s59 = sphi 0, %s61
    %s62 = sphi 0, %s59
    %s63 = sphi 0, %s62
    %s79 = sphi 0, %s63
    %s85 = sphi 0, %s87
    %s88 = sphi 0, %s85
    %s89 = sphi 0, %s88
    %s105 = sphi 0, %s89
    %s111 = sphi 0, %s113
    %s114 = sphi 0, %s111
    %s115 = sphi 0, %s114
    %s131 = sphi 0, %s115
    %s137 = sphi 0, %s139
    %s140 = sphi 0, %s137
    %s141 = sphi 0, %s140
    %s157 = sphi 0, %s141
    %s165 = sphi 0, %s167
    %s168 = sphi 0, %s165
    %s169 = sphi 0, %s168
    %s185 = sphi 0, %s169
  $region4: #{_lambda_.10} parent=0 // loop_header_branch
    %14 = sbr.rel (%p12) target = $region8
  $region5: #{_lambda_.10} parent=0 // loop_body
    %s16 = ssub.s32 %s11, 1
    %s17 = ssub.s32 %s11, 2
    %s24 = sadd.s32 1, %s19
    %p25 = scmp.ge.s32.totalorder %s24, 1
    %s26 = scalar_select %p25, 0, %s24
    %s27 = sadd.s32 1, %s18
    %s28 = scalar_select %p25, %s27, %s18
    %p29 = scmp.ge.s32.totalorder %s28, 4
    %s30 = scalar_select %p29, 0, %s28
    %s31 = ssub.s32 %s18, %s30
    %p32 = scmp.eq.s32.totalorder %s31, 0
    %s34 = sadd.s32 %s33, 1
    %s35 = scalar_select %p32, %s33, %s34
    %p38 = pneg %p32
    %p39 = scmp.eq.s32.totalorder %s11, 3
    %p40 = por %p38, %p39
    %p41 = scmp.ne.s32.totalorder %s33, %s36
    %p42 = scmp.eq.s32.totalorder %s11, 0
    %p43 = por %p41, %p42
    %p44 = scmp.ne.s32.totalorder %s33, %s36
    %p45 = scmp.eq.s32.totalorder %s16, 3
    %p46 = por %p44, %p45
    %p47 = scmp.ne.s32.totalorder %s36, %s37
    %p48 = scmp.eq.s32.totalorder %s16, 0
    %p49 = por %p47, %p48
    %p50 = scmp.ne.s32.totalorder %s36, %s37
    %p51 = scmp.eq.s32.totalorder %s17, 3
    %p52 = por %p50, %p51
    %p54 = scmp.ne.s32.totalorder %s37, %s53
    %p55 = scmp.eq.s32.totalorder %s17, 0
    %p56 = por %p54, %p55
    %s57 = ssub.s32 %s19, %s26
    %p58 = scmp.eq.s32.totalorder %s57, 0
    %s60 = sadd.s32 %s59, 1
    %s61 = scalar_select %p58, %s59, %s60
    %p64 = pneg %p58
    %p65 = scmp.eq.s32.totalorder %s11, 3
    %p66 = por %p64, %p65
    %p67 = scmp.ne.s32.totalorder %s59, %s62
    %p68 = scmp.eq.s32.totalorder %s11, 0
    %p69 = por %p67, %p68
    %p70 = scmp.ne.s32.totalorder %s59, %s62
    %p71 = scmp.eq.s32.totalorder %s16, 3
    %p72 = por %p70, %p71
    %p73 = scmp.ne.s32.totalorder %s62, %s63
    %p74 = scmp.eq.s32.totalorder %s16, 0
    %p75 = por %p73, %p74
    %p76 = scmp.ne.s32.totalorder %s62, %s63
    %p77 = scmp.eq.s32.totalorder %s17, 3
    %p78 = por %p76, %p77
    %p80 = scmp.ne.s32.totalorder %s63, %s79
    %p81 = scmp.eq.s32.totalorder %s17, 0
    %p82 = por %p80, %p81
    %s83 = ssub.s32 %s19, %s26
    %p84 = scmp.eq.s32.totalorder %s83, 0
    %s86 = sadd.s32 %s85, 1
    %s87 = scalar_select %p84, %s85, %s86
    %p90 = pneg %p84
    %p91 = scmp.eq.s32.totalorder %s11, 3
    %p92 = por %p90, %p91
    %p93 = scmp.ne.s32.totalorder %s85, %s88
    %p94 = scmp.eq.s32.totalorder %s11, 0
    %p95 = por %p93, %p94
    %p96 = scmp.ne.s32.totalorder %s85, %s88
    %p97 = scmp.eq.s32.totalorder %s16, 3
    %p98 = por %p96, %p97
    %p99 = scmp.ne.s32.totalorder %s88, %s89
    %p100 = scmp.eq.s32.totalorder %s16, 0
    %p101 = por %p99, %p100
    %p102 = scmp.ne.s32.totalorder %s88, %s89
    %p103 = scmp.eq.s32.totalorder %s17, 3
    %p104 = por %p102, %p103
    %p106 = scmp.ne.s32.totalorder %s89, %s105
    %p107 = scmp.eq.s32.totalorder %s17, 0
    %p108 = por %p106, %p107
    %s109 = ssub.s32 %s19, %s26
    %p110 = scmp.eq.s32.totalorder %s109, 0
    %s112 = sadd.s32 %s111, 1
    %s113 = scalar_select %p110, %s111, %s112
    %p116 = pneg %p110
    %p117 = scmp.eq.s32.totalorder %s11, 3
    %p118 = por %p116, %p117
    %p119 = scmp.ne.s32.totalorder %s111, %s114
    %p120 = scmp.eq.s32.totalorder %s11, 0
    %p121 = por %p119, %p120
    %p122 = scmp.ne.s32.totalorder %s111, %s114
    %p123 = scmp.eq.s32.totalorder %s16, 3
    %p124 = por %p122, %p123
    %p125 = scmp.ne.s32.totalorder %s114, %s115
    %p126 = scmp.eq.s32.totalorder %s16, 0
    %p127 = por %p125, %p126
    %p128 = scmp.ne.s32.totalorder %s114, %s115
    %p129 = scmp.eq.s32.totalorder %s17, 3
    %p130 = por %p128, %p129
    %p132 = scmp.ne.s32.totalorder %s115, %s131
    %p133 = scmp.eq.s32.totalorder %s17, 0
    %p134 = por %p132, %p133
    %s135 = ssub.s32 %s19, %s26
    %p136 = scmp.eq.s32.totalorder %s135, 0
    %s138 = sadd.s32 %s137, 1
    %s139 = scalar_select %p136, %s137, %s138
    %p142 = pneg %p136
    %p143 = scmp.eq.s32.totalorder %s11, 3
    %p144 = por %p142, %p143
    %p145 = scmp.ne.s32.totalorder %s137, %s140
    %p146 = scmp.eq.s32.totalorder %s11, 0
    %p147 = por %p145, %p146
    %p148 = scmp.ne.s32.totalorder %s137, %s140
    %p149 = scmp.eq.s32.totalorder %s16, 3
    %p150 = por %p148, %p149
    %p151 = scmp.ne.s32.totalorder %s140, %s141
    %p152 = scmp.eq.s32.totalorder %s16, 0
    %p153 = por %p151, %p152
    %p154 = scmp.ne.s32.totalorder %s140, %s141
    %p155 = scmp.eq.s32.totalorder %s17, 3
    %p156 = por %p154, %p155
    %p158 = scmp.ne.s32.totalorder %s141, %s157
    %p159 = scmp.eq.s32.totalorder %s17, 0
    %p160 = por %p158, %p159
    %s161 = ssub.s32 %s18, %s30
    %s162 = ssub.s32 %s19, %s26
    %s163 = sor.u32 %s161, %s162
    %p164 = scmp.eq.s32.totalorder %s163, 0
    %s166 = sadd.s32 %s165, 1
    %s167 = scalar_select %p164, %s165, %s166
    %p170 = pneg %p164
    %p171 = scmp.eq.s32.totalorder %s11, 3
    %p172 = por %p170, %p171
    %p173 = scmp.ne.s32.totalorder %s165, %s168
    %p174 = scmp.eq.s32.totalorder %s11, 0
    %p175 = por %p173, %p174
    %p176 = scmp.ne.s32.totalorder %s165, %s168
    %p177 = scmp.eq.s32.totalorder %s16, 3
    %p178 = por %p176, %p177
    %p179 = scmp.ne.s32.totalorder %s168, %s169
    %p180 = scmp.eq.s32.totalorder %s16, 0
    %p181 = por %p179, %p180
    %p182 = scmp.ne.s32.totalorder %s168, %s169
    %p183 = scmp.eq.s32.totalorder %s17, 3
    %p184 = por %p182, %p183
    %p186 = scmp.ne.s32.totalorder %s169, %s185
    %p187 = scmp.eq.s32.totalorder %s17, 0
    %p188 = por %p186, %p187
    %p189 = scmp.le.s32.totalorder 1, %s11
    %p190 = scmp.lt.s32.totalorder %s11, 5
    %p191 = pnand %p189, %p190
    %p192 = pneg %p191
    // Predicated region
    $region9: #{_lambda_.10} parent=5 // pred_check
      _
    $region10: #{_lambda_.10} parent=5 // pred_check_branch
      %194 = sbr.rel (%p191) target = $region12
    $region11: #{_lambda_.10} parent=5 // pred_region
      %s195 = ssub.s32 %s11, 1
      // Predicated region
      $region13: #{_lambda_.10} parent=11 // pred_check
        %p196 = pneg %p75
      $region14: #{_lambda_.10} parent=11 // pred_check_branch
        %198 = sbr.rel (%p196) target = $region16
      $region15: #{_lambda_.10} parent=11 // pred_region
        %p199 = scmp.lt.s32.totalorder %s21, 0
        %s200 = scalar_select %p199, %s21, 0
        %s201 = smul.addr %s200, 8
        %s202 = scalar_lea.vmem %s1, %s201
      $region16: #{_lambda_.10} parent=11 // pred_fallthru
        _
      // Predicated region
      $region17: #{_lambda_.10} parent=11 // pred_check
        %p203 = pneg %p101
      $region18: #{_lambda_.10} parent=11 // pred_check_branch
        %205 = sbr.rel (%p203) target = $region20
      $region19: #{_lambda_.10} parent=11 // pred_region
        %p206 = scmp.lt.s32.totalorder %s21, 0
        %s207 = scalar_select %p206, %s21, 0
        %s208 = scalar_lea.vmem %s2, %s207
      $region20: #{_lambda_.10} parent=11 // pred_fallthru
        _
      // Predicated region
      $region21: #{_lambda_.10} parent=11 // pred_check
        %p209 = pneg %p127
      $region22: #{_lambda_.10} parent=11 // pred_check_branch
        %211 = sbr.rel (%p209) target = $region24
      $region23: #{_lambda_.10} parent=11 // pred_region
        %p212 = scmp.lt.s32.totalorder %s21, 0
        %s213 = scalar_select %p212, %s21, 0
        %s214 = scalar_lea.vmem %s3, %s213
      $region24: #{_lambda_.10} parent=11 // pred_fallthru
        _
      // Predicated region
      $region25: #{_lambda_.10} parent=11 // pred_check
        %p215 = pneg %p153
      $region26: #{_lambda_.10} parent=11 // pred_check_branch
        %217 = sbr.rel (%p215) target = $region28
      $region27: #{_lambda_.10} parent=11 // pred_region
        %p218 = scmp.lt.s32.totalorder %s21, 0
        %s219 = scalar_select %p218, %s21, 0
        %s220 = scalar_lea.vmem %s4, %s219
      $region28: #{_lambda_.10} parent=11 // pred_fallthru
        _
    $region12: #{_lambda_.10} parent=5 // pred_fallthru
      _
    %p221 = scmp.lt.s32.totalorder %s11, 4
    // Predicated region
    $region29: #{_lambda_.10} parent=5 // pred_check
      %p222 = pneg %p221
    $region30: #{_lambda_.10} parent=5 // pred_check_branch
      %224 = sbr.rel (%p222) target = $region32
    $region31: #{_lambda_.10} parent=5 // pred_region
      // Predicated region
      $region33: #{_lambda_.10} parent=31 // pred_check
        %p225 = pneg %p43
      $region34: #{_lambda_.10} parent=31 // pred_check_branch
        %227 = sbr.rel (%p225) target = $region36
      $region35: #{_lambda_.10} parent=31 // pred_region
        %s228 = smul.u32 16, %s18
        %p229 = scmp.lt.s32.totalorder %s228, 63
        %s230 = scalar_select %p229, %s228, 63
        %s231 = smul.addr %s230, 2
        %s232 = smul.addr %s231, 8
        %s233 = scalar_lea.vmem %s0, %s232
        %s234 = smul.u32 16, %s18
      $region36: #{_lambda_.10} parent=31 // pred_fallthru
        _
    $region32: #{_lambda_.10} parent=5 // pred_fallthru
      _
    %p235 = scmp.le.s32.totalorder 1, %s11
    %p236 = scmp.lt.s32.totalorder %s11, 5
    %p237 = pnand %p235, %p236
    %p238 = pneg %p237
    // Predicated region
    $region37: #{_lambda_.10} parent=5 // pred_check
      _
    $region38: #{_lambda_.10} parent=5 // pred_check_branch
      %240 = sbr.rel (%p237) target = $region40
    $region39: #{_lambda_.10} parent=5 // pred_region
      %s241 = ssub.s32 %s11, 1
      %s242 = smul.u32 16, %s20
      %p243 = scmp.lt.s32.totalorder %s242, 63
      %s244 = scalar_select %p243, %s242, 63
      %s245 = smul.addr %s244, 2
      %s246 = smul.addr %s245, 8
      %s247 = scalar_lea.vmem %s0, %s246
      %p248 = pneg %p49
      %p249 = pneg %p46
      %p250 = scmp.lt.s32.totalorder %s21, 0
      %s251 = scalar_select %p250, %s21, 0
      %s252 = smul.addr %s251, 8
      %s253 = scalar_lea.vmem %s1, %s252
      %p254 = pneg %p75
      %p255 = pneg %p72
      %p256 = scmp.lt.s32.totalorder %s21, 0
      %s257 = scalar_select %p256, %s21, 0
      %s258 = scalar_lea.vmem %s2, %s257
      %p259 = pneg %p101
      %p260 = pneg %p98
      %p261 = scmp.lt.s32.totalorder %s21, 0
      %s262 = scalar_select %p261, %s21, 0
      %s263 = scalar_lea.vmem %s3, %s262
      %p264 = pneg %p127
      %p265 = pneg %p124
      %p266 = scmp.lt.s32.totalorder %s21, 0
      %s267 = scalar_select %p266, %s21, 0
      %s268 = scalar_lea.vmem %s4, %s267
      %p269 = pneg %p153
      %p270 = pneg %p150
      %p271 = pneg %p181
      %p272 = pneg %p178
      %s273 = smul.u32 16, %s20
      %p274 = scmp.lt.s32.totalorder %s273, 63
      %s275 = scalar_select %p274, %s273, 63
      %p276 = scmp.lt.s32.totalorder %s21, 0
      %s277 = scalar_select %p276, %s21, 0
      %s278 = sadd.s32 %s277, %s275
      %s279 = smul.addr %s278, 8
      %s280 = scalar_lea.vmem %s5, %s279
      %s281 = smul.u32 16, %s20
      %p282 = scmp.lt.s32.totalorder %s281, 63
      %s283 = scalar_select %p282, %s281, 63
      %s284 = smul.addr %s283, 2
      %s285 = smul.addr %s284, 8
      %s286 = scalar_lea.vmem %s0, %s285
      %s287 = smul.u32 16, %s20
      %p288 = scmp.lt.s32.totalorder %s21, 0
      %s289 = scalar_select %p288, %s21, 0
      %s290 = smul.addr %s289, 8
      %s291 = scalar_lea.vmem %s1, %s290
      %p292 = scmp.lt.s32.totalorder %s21, 0
      %s293 = scalar_select %p292, %s21, 0
      %s294 = scalar_lea.vmem %s2, %s293
      %p295 = scmp.lt.s32.totalorder %s21, 0
      %s296 = scalar_select %p295, %s21, 0
      %s297 = scalar_lea.vmem %s3, %s296
      %p298 = scmp.lt.s32.totalorder %s21, 0
      %s299 = scalar_select %p298, %s21, 0
      %s300 = scalar_lea.vmem %s4, %s299
      %s301 = smul.u32 16, %s20
      %p302 = scmp.lt.s32.totalorder %s301, 63
      %s303 = scalar_select %p302, %s301, 63
      %p304 = scmp.lt.s32.totalorder %s21, 0
      %s305 = scalar_select %p304, %s21, 0
      %s306 = sadd.s32 %s305, %s303
      %s307 = smul.addr %s306, 8
      %s308 = scalar_lea.vmem %s5, %s307
      %s309 = smul.u32 16, %s20
      %v310 = vld [vmem:[%s286] sm:$0xff]
      %v311 = vld [vmem:[%s286 + $0x8] sm:$0xff]
      %v312 = vld [vmem:[%s286 + $0x10] sm:$0xff]
      %v313 = vld [vmem:[%s286 + $0x18] sm:$0xff]
      %v314 = vld [vmem:[%s286 + $0x20] sm:$0xff]
      %v315 = vld [vmem:[%s286 + $0x28] sm:$0xff]
      %v316 = vld [vmem:[%s286 + $0x30] sm:$0xff]
      %v317 = vld [vmem:[%s286 + $0x38] sm:$0xff]
      %v318 = vld [vmem:[%s286 + $0x40] sm:$0xff]
      %v319 = vld [vmem:[%s286 + $0x48] sm:$0xff]
      %v320 = vld [vmem:[%s286 + $0x50] sm:$0xff]
      %v321 = vld [vmem:[%s286 + $0x58] sm:$0xff]
      %v322 = vld [vmem:[%s286 + $0x60] sm:$0xff]
      %v323 = vld [vmem:[%s286 + $0x68] sm:$0xff]
      %v324 = vld [vmem:[%s286 + $0x70] sm:$0xff]
      %v325 = vld [vmem:[%s286 + $0x78] sm:$0xff]
      %v326 = vld [vmem:[%s286 + $0x80] sm:$0xff]
      %v327 = vld [vmem:[%s286 + $0x88] sm:$0xff]
      %v328 = vld [vmem:[%s286 + $0x90] sm:$0xff]
      %v329 = vld [vmem:[%s286 + $0x98] sm:$0xff]
      %v330 = vld [vmem:[%s286 + $0xa0] sm:$0xff]
      %v331 = vld [vmem:[%s286 + $0xa8] sm:$0xff]
      %v332 = vld [vmem:[%s286 + $0xb0] sm:$0xff]
      %v333 = vld [vmem:[%s286 + $0xb8] sm:$0xff]
      %v334 = vld [vmem:[%s286 + $0xc0] sm:$0xff]
      %v335 = vld [vmem:[%s286 + $0xc8] sm:$0xff]
      %v336 = vld [vmem:[%s286 + $0xd0] sm:$0xff]
      %v337 = vld [vmem:[%s286 + $0xd8] sm:$0xff]
      %v338 = vld [vmem:[%s286 + $0xe0] sm:$0xff]
      %v339 = vld [vmem:[%s286 + $0xe8] sm:$0xff]
      %v340 = vld [vmem:[%s286 + $0xf0] sm:$0xff]
      %v341 = vld [vmem:[%s286 + $0xf8] sm:$0xff]
      %v342 = vld [vmem:[%s291] sm:$0xff]
      %v343 = vld [vmem:[%s291 + $0x8] sm:$0xff]
      %v344 = vld [vmem:[%s291 + $0x10] sm:$0xff]
      %v345 = vld [vmem:[%s291 + $0x18] sm:$0xff]
      %v346 = vld [vmem:[%s291 + $0x20] sm:$0xff]
      %v347 = vld [vmem:[%s291 + $0x28] sm:$0xff]
      %v348 = vld [vmem:[%s291 + $0x30] sm:$0xff]
      %v349 = vld [vmem:[%s291 + $0x38] sm:$0xff]
      %v350 = vld [vmem:[%s291 + $0x40] sm:$0xff]
      %v351 = vld [vmem:[%s291 + $0x48] sm:$0xff]
      %v352 = vld [vmem:[%s291 + $0x50] sm:$0xff]
      %v353 = vld [vmem:[%s291 + $0x58] sm:$0xff]
      %v354 = vld [vmem:[%s291 + $0x60] sm:$0xff]
      %v355 = vld [vmem:[%s291 + $0x68] sm:$0xff]
      %v356 = vld [vmem:[%s291 + $0x70] sm:$0xff]
      %v357 = vld [vmem:[%s291 + $0x78] sm:$0xff]
      %v358 = vld [vmem:[%s291 + $0x80] sm:$0xff]
      %v359 = vld [vmem:[%s291 + $0x88] sm:$0xff]
      %v360 = vld [vmem:[%s291 + $0x90] sm:$0x7]
      %v361 = vld [vmem:[%s294] sm:$0x1]
      %v363 = vlaneseq
      %v364 = vshrl.u32 %v363, 7
      %v365 = vsub.s32 0, %v364
      %v366 = vrot.slane %v361, %v365
      %vm368 = vcmask 154624
      %v370 = vsel %vm368, %v311, 0
      %v373 = vsel %vm368, %v313, 0
      %v376 = vsel %vm368, %v315, 0
      %v379 = vsel %vm368, %v317, 0
      %v382 = vsel %vm368, %v319, 0
      %v385 = vsel %vm368, %v321, 0
      %v388 = vsel %vm368, %v323, 0
      %v391 = vsel %vm368, %v325, 0
      %v394 = vsel %vm368, %v327, 0
      %v397 = vsel %vm368, %v329, 0
      %v400 = vsel %vm368, %v331, 0
      %v403 = vsel %vm368, %v333, 0
      %v406 = vsel %vm368, %v335, 0
      %v409 = vsel %vm368, %v337, 0
      %v412 = vsel %vm368, %v339, 0
      %v415 = vsel %vm368, %v341, 0
      %vm417 = vcmask 1042432
      %v419 = vsel %vm417, %v360, 0
      %421 = vmatprep.subr.mxu0 0.0
      %422 = vmatpush1.msra.mxu0 %v357
      %423 = vmatprep.subr.mxu0 0.0
      %424 = vmatpush1.msra.mxu0 %v356
      %425 = vmatprep.subr.mxu0 0.0
      %426 = vmatpush1.msra.mxu0 %v355
      %427 = vmatprep.subr.mxu0 0.0
      %428 = vmatpush1.msra.mxu0 %v354
      %429 = vmatprep.subr.mxu0 0.0
      %430 = vmatpush1.msra.mxu0 %v353
      %431 = vmatprep.subr.mxu0 0.0
      %432 = vmatpush1.msra.mxu0 %v352
      %433 = vmatprep.subr.mxu0 0.0
      %434 = vmatpush1.msra.mxu0 %v351
      %435 = vmatprep.subr.mxu0 0.0
      %436 = vmatpush1.msra.mxu0 %v350
      %437 = vmatprep.subr.mxu0 0.0
      %438 = vmatpush1.msra.mxu0 %v349
      %439 = vmatprep.subr.mxu0 0.0
      %440 = vmatpush1.msra.mxu0 %v348
      %441 = vmatprep.subr.mxu0 0.0
      %442 = vmatpush1.msra.mxu0 %v347
      %443 = vmatprep.subr.mxu0 0.0
      %444 = vmatpush1.msra.mxu0 %v346
      %445 = vmatprep.subr.mxu0 0.0
      %446 = vmatpush1.msra.mxu0 %v345
      %447 = vmatprep.subr.mxu0 0.0
      %448 = vmatpush1.msra.mxu0 %v344
      %449 = vmatprep.subr.mxu0 0.0
      %450 = vmatpush1.msra.mxu0 %v343
      %451 = vmatprep.subr.mxu0 0.0
      %452 = vmatpush1.msra.mxu0 %v342
      %453 = vmatprep.subr.mxu0 0.0
      %454 = vmatpush2.msra.mxu0 0.0
      %455 = vmatprep.subr.mxu0 0.0
      %456 = vmatpush2.msra.mxu0 0.0
      %457 = vmatprep.subr.mxu0 0.0
      %458 = vmatpush2.msra.mxu0 0.0
      %459 = vmatprep.subr.mxu0 0.0
      %460 = vmatpush2.msra.mxu0 0.0
      %461 = vmatprep.subr.mxu0 0.0
      %462 = vmatpush2.msra.mxu0 0.0
      %463 = vmatprep.subr.mxu0 0.0
      %464 = vmatpush2.msra.mxu0 0.0
      %465 = vmatprep.subr.mxu0 0.0
      %466 = vmatpush2.msra.mxu0 0.0
      %467 = vmatprep.subr.mxu0 0.0
      %468 = vmatpush2.msra.mxu0 0.0
      %469 = vmatprep.subr.mxu0 0.0
      %470 = vmatpush2.msra.mxu0 0.0
      %471 = vmatprep.subr.mxu0 0.0
      %472 = vmatpush2.msra.mxu0 0.0
      %473 = vmatprep.subr.mxu0 0.0
      %474 = vmatpush2.msra.mxu0 0.0
      %475 = vmatprep.subr.mxu0 0.0
      %476 = vmatpush2.msra.mxu0 0.0
      %477 = vmatprep.subr.mxu0 0.0
      %478 = vmatpush2.msra.mxu0 0.0
      %479 = vmatprep.subr.mxu0 0.0
      %480 = vmatpush2.msra.mxu0 %v419
      %481 = vmatprep.subr.mxu0 0.0
      %482 = vmatpush2.msra.mxu0 %v359
      %483 = vmatprep.subr.mxu0 0.0
      %484 = vmatpush2.msra.mxu0 %v358
      %485 = vmatprep.mubr.f32.mxu0 %v370
      %486 = vmatmul.mubr.f32.gmra.mxu0 %v310
      %v487 = vpop.f32.mrf.mxu0
      %v488 = vadd.f32 %v366, %v487
      %v489 = vpop.f32.mrf.mxu0
      %490 = vmatprep.mubr.f32.mxu0 %v373
      %491 = vmatmul.mubr.f32.gmra.mxu0 %v312
      %v492 = vpop.f32.mrf.mxu0
      %v493 = vadd.f32 %v366, %v492
      %v494 = vpop.f32.mrf.mxu0
      %495 = vmatprep.mubr.f32.mxu0 %v376
      %496 = vmatmul.mubr.f32.gmra.mxu0 %v314
      %v497 = vpop.f32.mrf.mxu0
      %v498 = vadd.f32 %v366, %v497
      %v499 = vpop.f32.mrf.mxu0
      %500 = vmatprep.mubr.f32.mxu0 %v379
      %501 = vmatmul.mubr.f32.gmra.mxu0 %v316
      %v502 = vpop.f32.mrf.mxu0
      %v503 = vadd.f32 %v366, %v502
      %v504 = vpop.f32.mrf.mxu0
      %505 = vmatprep.mubr.f32.mxu0 %v382
      %506 = vmatmul.mubr.f32.gmra.mxu0 %v318
      %v507 = vpop.f32.mrf.mxu0
      %v508 = vadd.f32 %v366, %v507
      %v509 = vpop.f32.mrf.mxu0
      %510 = vmatprep.mubr.f32.mxu0 %v385
      %511 = vmatmul.mubr.f32.gmra.mxu0 %v320
      %v512 = vpop.f32.mrf.mxu0
      %v513 = vadd.f32 %v366, %v512
      %v514 = vpop.f32.mrf.mxu0
      %515 = vmatprep.mubr.f32.mxu0 %v388
      %516 = vmatmul.mubr.f32.gmra.mxu0 %v322
      %v517 = vpop.f32.mrf.mxu0
      %v518 = vadd.f32 %v366, %v517
      %v519 = vpop.f32.mrf.mxu0
      %520 = vmatprep.mubr.f32.mxu0 %v391
      %521 = vmatmul.mubr.f32.gmra.mxu0 %v324
      %v522 = vpop.f32.mrf.mxu0
      %v523 = vadd.f32 %v366, %v522
      %v524 = vpop.f32.mrf.mxu0
      %525 = vmatprep.mubr.f32.mxu0 %v394
      %526 = vmatmul.mubr.f32.gmra.mxu0 %v326
      %v527 = vpop.f32.mrf.mxu0
      %v528 = vadd.f32 %v366, %v527
      %v529 = vpop.f32.mrf.mxu0
      %530 = vmatprep.mubr.f32.mxu0 %v397
      %531 = vmatmul.mubr.f32.gmra.mxu0 %v328
      %v532 = vpop.f32.mrf.mxu0
      %v533 = vadd.f32 %v366, %v532
      %v534 = vpop.f32.mrf.mxu0
      %535 = vmatprep.mubr.f32.mxu0 %v400
      %536 = vmatmul.mubr.f32.gmra.mxu0 %v330
      %v537 = vpop.f32.mrf.mxu0
      %v538 = vadd.f32 %v366, %v537
      %v539 = vpop.f32.mrf.mxu0
      %540 = vmatprep.mubr.f32.mxu0 %v403
      %541 = vmatmul.mubr.f32.gmra.mxu0 %v332
      %v542 = vpop.f32.mrf.mxu0
      %v543 = vadd.f32 %v366, %v542
      %v544 = vpop.f32.mrf.mxu0
      %545 = vmatprep.mubr.f32.mxu0 %v406
      %546 = vmatmul.mubr.f32.gmra.mxu0 %v334
      %v547 = vpop.f32.mrf.mxu0
      %v548 = vadd.f32 %v366, %v547
      %v549 = vpop.f32.mrf.mxu0
      %550 = vmatprep.mubr.f32.mxu0 %v409
      %551 = vmatmul.mubr.f32.gmra.mxu0 %v336
      %v552 = vpop.f32.mrf.mxu0
      %v553 = vadd.f32 %v366, %v552
      %v554 = vpop.f32.mrf.mxu0
      %555 = vmatprep.mubr.f32.mxu0 %v412
      %556 = vmatmul.mubr.f32.gmra.mxu0 %v338
      %v557 = vpop.f32.mrf.mxu0
      %v558 = vadd.f32 %v366, %v557
      %v559 = vpop.f32.mrf.mxu0
      %560 = vmatprep.mubr.f32.mxu0 %v415
      %561 = vmatmul.mubr.f32.gmra.mxu0 %v340
      %v562 = vpop.f32.mrf.mxu0
      %v563 = vadd.f32 %v366, %v562
      %v564 = vpop.f32.mrf.mxu0
      %565 = vdwg.mxu0
      %v566 = vld [vmem:[%s297] sm:$0x1]
      %v568 = vlaneseq
      %v569 = vshrl.u32 %v568, 7
      %v570 = vsub.s32 0, %v569
      %v571 = vrot.slane %v566, %v570
      %v573 = vmul.f32 %v488, %v571
      %v574 = vmul.f32 %v493, %v571
      %v575 = vmul.f32 %v498, %v571
      %v576 = vmul.f32 %v503, %v571
      %v577 = vmul.f32 %v508, %v571
      %v578 = vmul.f32 %v513, %v571
      %v579 = vmul.f32 %v518, %v571
      %v580 = vmul.f32 %v523, %v571
      %v581 = vmul.f32 %v528, %v571
      %v582 = vmul.f32 %v533, %v571
      %v583 = vmul.f32 %v538, %v571
      %v584 = vmul.f32 %v543, %v571
      %v585 = vmul.f32 %v548, %v571
      %v586 = vmul.f32 %v553, %v571
      %v587 = vmul.f32 %v558, %v571
      %v588 = vmul.f32 %v563, %v571
      %v589 = vld [vmem:[%s300] sm:$0x1]
      %v591 = vlaneseq
      %v592 = vshrl.u32 %v591, 7
      %v593 = vsub.s32 0, %v592
      %v594 = vrot.slane %v589, %v593
      %v596 = vadd.f32 %v573, %v594
      %v597 = vadd.f32 %v574, %v594
      %v598 = vadd.f32 %v575, %v594
      %v599 = vadd.f32 %v576, %v594
      %v600 = vadd.f32 %v577, %v594
      %v601 = vadd.f32 %v578, %v594
      %v602 = vadd.f32 %v579, %v594
      %v603 = vadd.f32 %v580, %v594
      %v604 = vadd.f32 %v581, %v594
      %v605 = vadd.f32 %v582, %v594
      %v606 = vadd.f32 %v583, %v594
      %v607 = vadd.f32 %v584, %v594
      %v608 = vadd.f32 %v585, %v594
      %v609 = vadd.f32 %v586, %v594
      %v610 = vadd.f32 %v587, %v594
      %v611 = vadd.f32 %v588, %v594
      %v612 = vmax.f32 %v596, 0.0
      %v613 = vmax.f32 %v597, 0.0
      %v614 = vmax.f32 %v598, 0.0
      %v615 = vmax.f32 %v599, 0.0
      %v616 = vmax.f32 %v600, 0.0
      %v617 = vmax.f32 %v601, 0.0
      %v618 = vmax.f32 %v602, 0.0
      %v619 = vmax.f32 %v603, 0.0
      %v620 = vmax.f32 %v604, 0.0
      %v621 = vmax.f32 %v605, 0.0
      %v622 = vmax.f32 %v606, 0.0
      %v623 = vmax.f32 %v607, 0.0
      %v624 = vmax.f32 %v608, 0.0
      %v625 = vmax.f32 %v609, 0.0
      %v626 = vmax.f32 %v610, 0.0
      %v627 = vmax.f32 %v611, 0.0
      %vm628 = vcmask 523264
      %629 = vst.msk [vmem:[%s308] sm:$0xff] %vm628, %v612
      %630 = vst.msk [vmem:[%s308 + $0x8] sm:$0xff] %vm628, %v613
      %631 = vst.msk [vmem:[%s308 + $0x10] sm:$0xff] %vm628, %v614
      %632 = vst.msk [vmem:[%s308 + $0x18] sm:$0xff] %vm628, %v615
      %633 = vst.msk [vmem:[%s308 + $0x20] sm:$0xff] %vm628, %v616
      %634 = vst.msk [vmem:[%s308 + $0x28] sm:$0xff] %vm628, %v617
      %635 = vst.msk [vmem:[%s308 + $0x30] sm:$0xff] %vm628, %v618
      %636 = vst.msk [vmem:[%s308 + $0x38] sm:$0xff] %vm628, %v619
      %637 = vst.msk [vmem:[%s308 + $0x40] sm:$0xff] %vm628, %v620
      %638 = vst.msk [vmem:[%s308 + $0x48] sm:$0xff] %vm628, %v621
      %639 = vst.msk [vmem:[%s308 + $0x50] sm:$0xff] %vm628, %v622
      %640 = vst.msk [vmem:[%s308 + $0x58] sm:$0xff] %vm628, %v623
      %641 = vst.msk [vmem:[%s308 + $0x60] sm:$0xff] %vm628, %v624
      %642 = vst.msk [vmem:[%s308 + $0x68] sm:$0xff] %vm628, %v625
      %643 = vst.msk [vmem:[%s308 + $0x70] sm:$0xff] %vm628, %v626
      %644 = vst.msk [vmem:[%s308 + $0x78] sm:$0xff] %vm628, %v627
      %s645 = smul.u32 16, %s20
      %p646 = scmp.lt.s32.totalorder %s645, 63
      %s647 = scalar_select %p646, %s645, 63
      %p648 = scmp.lt.s32.totalorder %s21, 0
      %s649 = scalar_select %p648, %s21, 0
      %s650 = sadd.s32 %s649, %s647
      %s651 = smul.addr %s650, 8
      %s652 = scalar_lea.vmem %s5, %s651
      // Predicated region
      $region41: #{_lambda_.10} parent=39 // pred_check
        %p653 = pneg %p178
      $region42: #{_lambda_.10} parent=39 // pred_check_branch
        %655 = sbr.rel (%p653) target = $region44
      $region43: #{_lambda_.10} parent=39 // pred_region
        %s656 = smul.u32 16, %s20
      $region44: #{_lambda_.10} parent=39 // pred_fallthru
        _
    $region40: #{_lambda_.10} parent=5 // pred_fallthru
      _
    %p657 = scmp.le.s32.totalorder 2, %s11
    // Predicated region
    $region45: #{_lambda_.10} parent=5 // pred_check
      %p658 = pneg %p657
    $region46: #{_lambda_.10} parent=5 // pred_check_branch
      %660 = sbr.rel (%p658) target = $region48
    $region47: #{_lambda_.10} parent=5 // pred_region
      %s661 = ssub.s32 %s11, 2
      // Predicated region
      $region49: #{_lambda_.10} parent=47 // pred_check
        %p662 = pneg %p184
      $region50: #{_lambda_.10} parent=47 // pred_check_branch
        %664 = sbr.rel (%p662) target = $region52
      $region51: #{_lambda_.10} parent=47 // pred_region
        %s665 = smul.u32 16, %s22
        %p666 = scmp.lt.s32.totalorder %s665, 63
        %s667 = scalar_select %p666, %s665, 63
        %p668 = scmp.lt.s32.totalorder %s23, 0
        %s669 = scalar_select %p668, %s23, 0
        %s670 = sadd.s32 %s669, %s667
        %s671 = smul.addr %s670, 8
        %s672 = scalar_lea.vmem %s5, %s671
      $region52: #{_lambda_.10} parent=47 // pred_fallthru
        _
    $region48: #{_lambda_.10} parent=5 // pred_fallthru
      _
  $region6: #{_lambda_.10} parent=0 // loop_footer
    %s15 = sadd.s32 1, %s11
  $region7: #{_lambda_.10} parent=0 // loop_footer_branch
    %10 = sbr.rel target = $region3
  $region8: #{_lambda_.10} parent=0 // loop_exit
    _

// kernel: _lambda_.11
$region0: #{_lambda_.11}
  #allocation0 [shape = 'u32[]', space=smem, size = 0x4, offset = 0x4, fixed_abs, tag = 'smem constant byte address 0x4 - core index']
  #allocation1 [shape = 'u32[144,128]{1,0:T(1,128)}', space=vmem, size = 0x12000, scoped, tag = 'internal scratch']
  %s0 = inlined_call_operand.vmem [shape: f32[128,64], index: 0, kind: input, shape index: {}]
  %s1 = inlined_call_operand.vmem [shape: f32[128,64], index: 1, kind: input, shape index: {}]
  %s2 = inlined_call_operand.vmem [shape: f32[128,64], index: 2, kind: input, shape index: {}]
  %s3 = inlined_call_operand.vmem [shape: f32[128,64], index: 3, kind: input, shape index: {}]
  %s4 = inlined_call_operand.vmem [shape: f32[128,64], index: 4, kind: input, shape index: {}]
  %s5 = inlined_call_operand.vmem [shape: f32[128,64], index: 5, kind: input, shape index: {}]
  %s6 = inlined_call_operand.vmem [shape: f32[128,64], index: 6, kind: input, shape index: {}]
  %s7 = inlined_call_operand.vmem [shape: f32[128,64], index: 7, kind: input, shape index: {}]
  %s8 = inlined_call_operand.vmem [shape: f32[128,64], index: 8, kind: input, shape index: {}]
  %s9 = inlined_call_operand.vmem [shape: f32[128,64], index: 9, kind: output, shape index: {}]
  %s10 = sld [smem:[#allocation0]]
  $region46: #{_lambda_.11} parent=0
    _
  %s12 = ssub.s32 1, %s10
  %s13 = scalar_select 0, %s12, %s10
  // Predicated region
  $region2: #{_lambda_.11} parent=0 // pred_check
    _
  $region3: #{_lambda_.11} parent=0 // pred_check_branch
    %15 = sbr.rel (0) target = $region5
  $region4: #{_lambda_.11} parent=0 // pred_region
    _
  $region5: #{_lambda_.11} parent=0 // pred_fallthru
    _
  // Predicated region
  $region6: #{_lambda_.11} parent=0 // pred_check
    _
  $region7: #{_lambda_.11} parent=0 // pred_check_branch
    %17 = sbr.rel (0) target = $region9
  $region8: #{_lambda_.11} parent=0 // pred_region
    _
  $region9: #{_lambda_.11} parent=0 // pred_fallthru
    _
  // Predicated region
  $region10: #{_lambda_.11} parent=0 // pred_check
    _
  $region11: #{_lambda_.11} parent=0 // pred_check_branch
    %19 = sbr.rel (0) target = $region13
  $region12: #{_lambda_.11} parent=0 // pred_region
    _
  $region13: #{_lambda_.11} parent=0 // pred_fallthru
    _
  // Predicated region
  $region14: #{_lambda_.11} parent=0 // pred_check
    _
  $region15: #{_lambda_.11} parent=0 // pred_check_branch
    %21 = sbr.rel (0) target = $region17
  $region16: #{_lambda_.11} parent=0 // pred_region
    _
  $region17: #{_lambda_.11} parent=0 // pred_fallthru
    _
  // Predicated region
  $region18: #{_lambda_.11} parent=0 // pred_check
    _
  $region19: #{_lambda_.11} parent=0 // pred_check_branch
    %23 = sbr.rel (0) target = $region21
  $region20: #{_lambda_.11} parent=0 // pred_region
    _
  $region21: #{_lambda_.11} parent=0 // pred_fallthru
    _
  // Predicated region
  $region22: #{_lambda_.11} parent=0 // pred_check
    _
  $region23: #{_lambda_.11} parent=0 // pred_check_branch
    %25 = sbr.rel (0) target = $region25
  $region24: #{_lambda_.11} parent=0 // pred_region
    _
  $region25: #{_lambda_.11} parent=0 // pred_fallthru
    _
  // Predicated region
  $region26: #{_lambda_.11} parent=0 // pred_check
    _
  $region27: #{_lambda_.11} parent=0 // pred_check_branch
    %27 = sbr.rel (0) target = $region29
  $region28: #{_lambda_.11} parent=0 // pred_region
    _
  $region29: #{_lambda_.11} parent=0 // pred_fallthru
    _
  // Predicated region
  $region30: #{_lambda_.11} parent=0 // pred_check
    _
  $region31: #{_lambda_.11} parent=0 // pred_check_branch
    %29 = sbr.rel (0) target = $region33
  $region32: #{_lambda_.11} parent=0 // pred_region
    _
  $region33: #{_lambda_.11} parent=0 // pred_fallthru
    _
  // Predicated region
  $region34: #{_lambda_.11} parent=0 // pred_check
    _
  $region35: #{_lambda_.11} parent=0 // pred_check_branch
    %31 = sbr.rel (0) target = $region37
  $region36: #{_lambda_.11} parent=0 // pred_region
    _
  $region37: #{_lambda_.11} parent=0 // pred_fallthru
    _
  %v32 = vld [vmem:[%s0] sm:$0xff]
  %v33 = vld [vmem:[%s0 + $0x8] sm:$0xff]
  %v34 = vld [vmem:[%s0 + $0x10] sm:$0xff]
  %v35 = vld [vmem:[%s0 + $0x18] sm:$0xff]
  %v36 = vld [vmem:[%s0 + $0x20] sm:$0xff]
  %v37 = vld [vmem:[%s0 + $0x28] sm:$0xff]
  %v38 = vld [vmem:[%s0 + $0x30] sm:$0xff]
  %v39 = vld [vmem:[%s0 + $0x38] sm:$0xff]
  %v40 = vld [vmem:[%s0 + $0x40] sm:$0xff]
  %v41 = vld [vmem:[%s0 + $0x48] sm:$0xff]
  %v42 = vld [vmem:[%s0 + $0x50] sm:$0xff]
  %v43 = vld [vmem:[%s0 + $0x58] sm:$0xff]
  %v44 = vld [vmem:[%s0 + $0x60] sm:$0xff]
  %v45 = vld [vmem:[%s0 + $0x68] sm:$0xff]
  %v46 = vld [vmem:[%s0 + $0x70] sm:$0xff]
  %v47 = vld [vmem:[%s0 + $0x78] sm:$0xff]
  %v48 = vld [vmem:[%s1] sm:$0xff]
  %v49 = vld [vmem:[%s1 + $0x8] sm:$0xff]
  %v50 = vld [vmem:[%s1 + $0x10] sm:$0xff]
  %v51 = vld [vmem:[%s1 + $0x18] sm:$0xff]
  %v52 = vld [vmem:[%s1 + $0x20] sm:$0xff]
  %v53 = vld [vmem:[%s1 + $0x28] sm:$0xff]
  %v54 = vld [vmem:[%s1 + $0x30] sm:$0xff]
  %v55 = vld [vmem:[%s1 + $0x38] sm:$0xff]
  %v56 = vld [vmem:[%s1 + $0x40] sm:$0xff]
  %v57 = vld [vmem:[%s1 + $0x48] sm:$0xff]
  %v58 = vld [vmem:[%s1 + $0x50] sm:$0xff]
  %v59 = vld [vmem:[%s1 + $0x58] sm:$0xff]
  %v60 = vld [vmem:[%s1 + $0x60] sm:$0xff]
  %v61 = vld [vmem:[%s1 + $0x68] sm:$0xff]
  %v62 = vld [vmem:[%s1 + $0x70] sm:$0xff]
  %v63 = vld [vmem:[%s1 + $0x78] sm:$0xff]
  %v64 = vmax.f32 %v32, %v48
  %v65 = vmax.f32 %v33, %v49
  %v66 = vmax.f32 %v34, %v50
  %v67 = vmax.f32 %v35, %v51
  %v68 = vmax.f32 %v36, %v52
  %v69 = vmax.f32 %v37, %v53
  %v70 = vmax.f32 %v38, %v54
  %v71 = vmax.f32 %v39, %v55
  %v72 = vmax.f32 %v40, %v56
  %v73 = vmax.f32 %v41, %v57
  %v74 = vmax.f32 %v42, %v58
  %v75 = vmax.f32 %v43, %v59
  %v76 = vmax.f32 %v44, %v60
  %v77 = vmax.f32 %v45, %v61
  %v78 = vmax.f32 %v46, %v62
  %v79 = vmax.f32 %v47, %v63
  %v80 = vld [vmem:[%s2] sm:$0xff]
  %v81 = vld [vmem:[%s2 + $0x8] sm:$0xff]
  %v82 = vld [vmem:[%s2 + $0x10] sm:$0xff]
  %v83 = vld [vmem:[%s2 + $0x18] sm:$0xff]
  %v84 = vld [vmem:[%s2 + $0x20] sm:$0xff]
  %v85 = vld [vmem:[%s2 + $0x28] sm:$0xff]
  %v86 = vld [vmem:[%s2 + $0x30] sm:$0xff]
  %v87 = vld [vmem:[%s2 + $0x38] sm:$0xff]
  %v88 = vld [vmem:[%s2 + $0x40] sm:$0xff]
  %v89 = vld [vmem:[%s2 + $0x48] sm:$0xff]
  %v90 = vld [vmem:[%s2 + $0x50] sm:$0xff]
  %v91 = vld [vmem:[%s2 + $0x58] sm:$0xff]
  %v92 = vld [vmem:[%s2 + $0x60] sm:$0xff]
  %v93 = vld [vmem:[%s2 + $0x68] sm:$0xff]
  %v94 = vld [vmem:[%s2 + $0x70] sm:$0xff]
  %v95 = vld [vmem:[%s2 + $0x78] sm:$0xff]
  %v96 = vmax.f32 %v64, %v80
  %v97 = vmax.f32 %v65, %v81
  %v98 = vmax.f32 %v66, %v82
  %v99 = vmax.f32 %v67, %v83
  %v100 = vmax.f32 %v68, %v84
  %v101 = vmax.f32 %v69, %v85
  %v102 = vmax.f32 %v70, %v86
  %v103 = vmax.f32 %v71, %v87
  %v104 = vmax.f32 %v72, %v88
  %v105 = vmax.f32 %v73, %v89
  %v106 = vmax.f32 %v74, %v90
  %v107 = vmax.f32 %v75, %v91
  %v108 = vmax.f32 %v76, %v92
  %v109 = vmax.f32 %v77, %v93
  %v110 = vmax.f32 %v78, %v94
  %v111 = vmax.f32 %v79, %v95
  %v112 = vld [vmem:[%s3] sm:$0xff]
  %v113 = vld [vmem:[%s3 + $0x8] sm:$0xff]
  %v114 = vld [vmem:[%s3 + $0x10] sm:$0xff]
  %v115 = vld [vmem:[%s3 + $0x18] sm:$0xff]
  %v116 = vld [vmem:[%s3 + $0x20] sm:$0xff]
  %v117 = vld [vmem:[%s3 + $0x28] sm:$0xff]
  %v118 = vld [vmem:[%s3 + $0x30] sm:$0xff]
  %v119 = vld [vmem:[%s3 + $0x38] sm:$0xff]
  %v120 = vld [vmem:[%s3 + $0x40] sm:$0xff]
  %v121 = vld [vmem:[%s3 + $0x48] sm:$0xff]
  %v122 = vld [vmem:[%s3 + $0x50] sm:$0xff]
  %v123 = vld [vmem:[%s3 + $0x58] sm:$0xff]
  %v124 = vld [vmem:[%s3 + $0x60] sm:$0xff]
  %v125 = vld [vmem:[%s3 + $0x68] sm:$0xff]
  %v126 = vld [vmem:[%s3 + $0x70] sm:$0xff]
  %v127 = vld [vmem:[%s3 + $0x78] sm:$0xff]
  %v128 = vmax.f32 %v96, %v112
  %v129 = vmax.f32 %v97, %v113
  %v130 = vmax.f32 %v98, %v114
  %v131 = vmax.f32 %v99, %v115
  %v132 = vmax.f32 %v100, %v116
  %v133 = vmax.f32 %v101, %v117
  %v134 = vmax.f32 %v102, %v118
  %v135 = vmax.f32 %v103, %v119
  %v136 = vmax.f32 %v104, %v120
  %v137 = vmax.f32 %v105, %v121
  %v138 = vmax.f32 %v106, %v122
  %v139 = vmax.f32 %v107, %v123
  %v140 = vmax.f32 %v108, %v124
  %v141 = vmax.f32 %v109, %v125
  %v142 = vmax.f32 %v110, %v126
  %v143 = vmax.f32 %v111, %v127
  %v144 = vld [vmem:[%s4] sm:$0xff]
  %v145 = vld [vmem:[%s4 + $0x8] sm:$0xff]
  %v146 = vld [vmem:[%s4 + $0x10] sm:$0xff]
  %v147 = vld [vmem:[%s4 + $0x18] sm:$0xff]
  %v148 = vld [vmem:[%s4 + $0x20] sm:$0xff]
  %v149 = vld [vmem:[%s4 + $0x28] sm:$0xff]
  %v150 = vld [vmem:[%s4 + $0x30] sm:$0xff]
  %v151 = vld [vmem:[%s4 + $0x38] sm:$0xff]
  %v152 = vld [vmem:[%s4 + $0x40] sm:$0xff]
  %v153 = vld [vmem:[%s4 + $0x48] sm:$0xff]
  %v154 = vld [vmem:[%s4 + $0x50] sm:$0xff]
  %v155 = vld [vmem:[%s4 + $0x58] sm:$0xff]
  %v156 = vld [vmem:[%s4 + $0x60] sm:$0xff]
  %v157 = vld [vmem:[%s4 + $0x68] sm:$0xff]
  %v158 = vld [vmem:[%s4 + $0x70] sm:$0xff]
  %v159 = vld [vmem:[%s4 + $0x78] sm:$0xff]
  %v160 = vmax.f32 %v128, %v144
  %v161 = vmax.f32 %v129, %v145
  %v162 = vmax.f32 %v130, %v146
  %v163 = vmax.f32 %v131, %v147
  %v164 = vmax.f32 %v132, %v148
  %v165 = vmax.f32 %v133, %v149
  %v166 = vmax.f32 %v134, %v150
  %v167 = vmax.f32 %v135, %v151
  %v168 = vmax.f32 %v136, %v152
  %v169 = vmax.f32 %v137, %v153
  %v170 = vmax.f32 %v138, %v154
  %v171 = vmax.f32 %v139, %v155
  %v172 = vmax.f32 %v140, %v156
  %v173 = vmax.f32 %v141, %v157
  %v174 = vmax.f32 %v142, %v158
  %v175 = vmax.f32 %v143, %v159
  %v176 = vld [vmem:[%s5] sm:$0xff]
  %v177 = vld [vmem:[%s5 + $0x8] sm:$0xff]
  %v178 = vld [vmem:[%s5 + $0x10] sm:$0xff]
  %v179 = vld [vmem:[%s5 + $0x18] sm:$0xff]
  %v180 = vld [vmem:[%s5 + $0x20] sm:$0xff]
  %v181 = vld [vmem:[%s5 + $0x28] sm:$0xff]
  %v182 = vld [vmem:[%s5 + $0x30] sm:$0xff]
  %v183 = vld [vmem:[%s5 + $0x38] sm:$0xff]
  %v184 = vld [vmem:[%s5 + $0x40] sm:$0xff]
  %v185 = vld [vmem:[%s5 + $0x48] sm:$0xff]
  %v186 = vld [vmem:[%s5 + $0x50] sm:$0xff]
  %v187 = vld [vmem:[%s5 + $0x58] sm:$0xff]
  %v188 = vld [vmem:[%s5 + $0x60] sm:$0xff]
  %v189 = vld [vmem:[%s5 + $0x68] sm:$0xff]
  %v190 = vld [vmem:[%s5 + $0x70] sm:$0xff]
  %v191 = vld [vmem:[%s5 + $0x78] sm:$0xff]
  %v192 = vmax.f32 %v160, %v176
  %v193 = vmax.f32 %v161, %v177
  %v194 = vmax.f32 %v162, %v178
  %v195 = vmax.f32 %v163, %v179
  %v196 = vmax.f32 %v164, %v180
  %v197 = vmax.f32 %v165, %v181
  %v198 = vmax.f32 %v166, %v182
  %v199 = vmax.f32 %v167, %v183
  %v200 = vmax.f32 %v168, %v184
  %v201 = vmax.f32 %v169, %v185
  %v202 = vmax.f32 %v170, %v186
  %v203 = vmax.f32 %v171, %v187
  %v204 = vmax.f32 %v172, %v188
  %v205 = vmax.f32 %v173, %v189
  %v206 = vmax.f32 %v174, %v190
  %v207 = vmax.f32 %v175, %v191
  %v208 = vld [vmem:[%s6] sm:$0xff]
  %v209 = vld [vmem:[%s6 + $0x8] sm:$0xff]
  %v210 = vld [vmem:[%s6 + $0x10] sm:$0xff]
  %v211 = vld [vmem:[%s6 + $0x18] sm:$0xff]
  %v212 = vld [vmem:[%s6 + $0x20] sm:$0xff]
  %v213 = vld [vmem:[%s6 + $0x28] sm:$0xff]
  %v214 = vld [vmem:[%s6 + $0x30] sm:$0xff]
  %v215 = vld [vmem:[%s6 + $0x38] sm:$0xff]
  %v216 = vld [vmem:[%s6 + $0x40] sm:$0xff]
  %v217 = vld [vmem:[%s6 + $0x48] sm:$0xff]
  %v218 = vld [vmem:[%s6 + $0x50] sm:$0xff]
  %v219 = vld [vmem:[%s6 + $0x58] sm:$0xff]
  %v220 = vld [vmem:[%s6 + $0x60] sm:$0xff]
  %v221 = vld [vmem:[%s6 + $0x68] sm:$0xff]
  %v222 = vld [vmem:[%s6 + $0x70] sm:$0xff]
  %v223 = vld [vmem:[%s6 + $0x78] sm:$0xff]
  %v224 = vmax.f32 %v192, %v208
  %v225 = vmax.f32 %v193, %v209
  %v226 = vmax.f32 %v194, %v210
  %v227 = vmax.f32 %v195, %v211
  %v228 = vmax.f32 %v196, %v212
  %v229 = vmax.f32 %v197, %v213
  %v230 = vmax.f32 %v198, %v214
  %v231 = vmax.f32 %v199, %v215
  %v232 = vmax.f32 %v200, %v216
  %v233 = vmax.f32 %v201, %v217
  %v234 = vmax.f32 %v202, %v218
  %v235 = vmax.f32 %v203, %v219
  %v236 = vmax.f32 %v204, %v220
  %v237 = vmax.f32 %v205, %v221
  %v238 = vmax.f32 %v206, %v222
  %v239 = vmax.f32 %v207, %v223
  %v240 = vld [vmem:[%s7] sm:$0xff]
  %v241 = vld [vmem:[%s7 + $0x8] sm:$0xff]
  %v242 = vld [vmem:[%s7 + $0x10] sm:$0xff]
  %v243 = vld [vmem:[%s7 + $0x18] sm:$0xff]
  %v244 = vld [vmem:[%s7 + $0x20] sm:$0xff]
  %v245 = vld [vmem:[%s7 + $0x28] sm:$0xff]
  %v246 = vld [vmem:[%s7 + $0x30] sm:$0xff]
  %v247 = vld [vmem:[%s7 + $0x38] sm:$0xff]
  %v248 = vld [vmem:[%s7 + $0x40] sm:$0xff]
  %v249 = vld [vmem:[%s7 + $0x48] sm:$0xff]
  %v250 = vld [vmem:[%s7 + $0x50] sm:$0xff]
  %v251 = vld [vmem:[%s7 + $0x58] sm:$0xff]
  %v252 = vld [vmem:[%s7 + $0x60] sm:$0xff]
  %v253 = vld [vmem:[%s7 + $0x68] sm:$0xff]
  %v254 = vld [vmem:[%s7 + $0x70] sm:$0xff]
  %v255 = vld [vmem:[%s7 + $0x78] sm:$0xff]
  %v256 = vmax.f32 %v224, %v240
  %v257 = vmax.f32 %v225, %v241
  %v258 = vmax.f32 %v226, %v242
  %v259 = vmax.f32 %v227, %v243
  %v260 = vmax.f32 %v228, %v244
  %v261 = vmax.f32 %v229, %v245
  %v262 = vmax.f32 %v230, %v246
  %v263 = vmax.f32 %v231, %v247
  %v264 = vmax.f32 %v232, %v248
  %v265 = vmax.f32 %v233, %v249
  %v266 = vmax.f32 %v234, %v250
  %v267 = vmax.f32 %v235, %v251
  %v268 = vmax.f32 %v236, %v252
  %v269 = vmax.f32 %v237, %v253
  %v270 = vmax.f32 %v238, %v254
  %v271 = vmax.f32 %v239, %v255
  %v272 = vld [vmem:[%s8] sm:$0xff]
  %v273 = vld [vmem:[%s8 + $0x8] sm:$0xff]
  %v274 = vld [vmem:[%s8 + $0x10] sm:$0xff]
  %v275 = vld [vmem:[%s8 + $0x18] sm:$0xff]
  %v276 = vld [vmem:[%s8 + $0x20] sm:$0xff]
  %v277 = vld [vmem:[%s8 + $0x28] sm:$0xff]
  %v278 = vld [vmem:[%s8 + $0x30] sm:$0xff]
  %v279 = vld [vmem:[%s8 + $0x38] sm:$0xff]
  %v280 = vld [vmem:[%s8 + $0x40] sm:$0xff]
  %v281 = vld [vmem:[%s8 + $0x48] sm:$0xff]
  %v282 = vld [vmem:[%s8 + $0x50] sm:$0xff]
  %v283 = vld [vmem:[%s8 + $0x58] sm:$0xff]
  %v284 = vld [vmem:[%s8 + $0x60] sm:$0xff]
  %v285 = vld [vmem:[%s8 + $0x68] sm:$0xff]
  %v286 = vld [vmem:[%s8 + $0x70] sm:$0xff]
  %v287 = vld [vmem:[%s8 + $0x78] sm:$0xff]
  %v288 = vmax.f32 %v256, %v272
  %v289 = vmax.f32 %v257, %v273
  %v290 = vmax.f32 %v258, %v274
  %v291 = vmax.f32 %v259, %v275
  %v292 = vmax.f32 %v260, %v276
  %v293 = vmax.f32 %v261, %v277
  %v294 = vmax.f32 %v262, %v278
  %v295 = vmax.f32 %v263, %v279
  %v296 = vmax.f32 %v264, %v280
  %v297 = vmax.f32 %v265, %v281
  %v298 = vmax.f32 %v266, %v282
  %v299 = vmax.f32 %v267, %v283
  %v300 = vmax.f32 %v268, %v284
  %v301 = vmax.f32 %v269, %v285
  %v302 = vmax.f32 %v270, %v286
  %v303 = vmax.f32 %v271, %v287
  %vm304 = vcmask 523264
  %305 = vst.msk [vmem:[%s9] sm:$0xff] %vm304, %v288
  %306 = vst.msk [vmem:[%s9 + $0x8] sm:$0xff] %vm304, %v289
  %307 = vst.msk [vmem:[%s9 + $0x10] sm:$0xff] %vm304, %v290
  %308 = vst.msk [vmem:[%s9 + $0x18] sm:$0xff] %vm304, %v291
  %309 = vst.msk [vmem:[%s9 + $0x20] sm:$0xff] %vm304, %v292
  %310 = vst.msk [vmem:[%s9 + $0x28] sm:$0xff] %vm304, %v293
  %311 = vst.msk [vmem:[%s9 + $0x30] sm:$0xff] %vm304, %v294
  %312 = vst.msk [vmem:[%s9 + $0x38] sm:$0xff] %vm304, %v295
  %313 = vst.msk [vmem:[%s9 + $0x40] sm:$0xff] %vm304, %v296
  %314 = vst.msk [vmem:[%s9 + $0x48] sm:$0xff] %vm304, %v297
  %315 = vst.msk [vmem:[%s9 + $0x50] sm:$0xff] %vm304, %v298
  %316 = vst.msk [vmem:[%s9 + $0x58] sm:$0xff] %vm304, %v299
  %317 = vst.msk [vmem:[%s9 + $0x60] sm:$0xff] %vm304, %v300
  %318 = vst.msk [vmem:[%s9 + $0x68] sm:$0xff] %vm304, %v301
  %319 = vst.msk [vmem:[%s9 + $0x70] sm:$0xff] %vm304, %v302
  %320 = vst.msk [vmem:[%s9 + $0x78] sm:$0xff] %vm304, %v303
  // Predicated region
  $region38: #{_lambda_.11} parent=0 // pred_check
    _
  $region39: #{_lambda_.11} parent=0 // pred_check_branch
    %322 = sbr.rel (0) target = $region41
  $region40: #{_lambda_.11} parent=0 // pred_region
    _
  $region41: #{_lambda_.11} parent=0 // pred_fallthru
    _
  // Predicated region
  $region42: #{_lambda_.11} parent=0 // pred_check
    _
  $region43: #{_lambda_.11} parent=0 // pred_check_branch
    %324 = sbr.rel (0) target = $region45
  $region44: #{_lambda_.11} parent=0 // pred_region
    _
  $region45: #{_lambda_.11} parent=0 // pred_fallthru
    _

// kernel: tile.34
$region0: #{tile.34}
  #allocation0 [shape = 's32[1]{0}', space=sflag, size = 0x4, scoped, tag = 'scoped memory for tile.34']
  %s0 = inlined_call_operand.vmem [shape: f32[64], index: 0, kind: input, shape index: {}]
  %s1 = inlined_call_operand.vmem [shape: f32[9,64], index: 1, kind: output, shape index: {}]
  // Predicated region
  $region2: #{tile.34} parent=0 // pred_check
    _
  $region3: #{tile.34} parent=0 // pred_check_branch
    %3 = sbr.rel (0) target = $region5
  $region4: #{tile.34} parent=0 // pred_region
    _
  $region5: #{tile.34} parent=0 // pred_fallthru
    _
  %v4 = vld [vmem:[%s0] ss:$0 sm:$0xff]
  %5 = vst [vmem:[%s1] sm:$0xff] %v4
  %s6 = scalar_lea.vmem %s1, 8
  %7 = vst [vmem:[%s6] sm:$0xff] %v4

// kernel: tile.38
$region0: #{tile.38}
  %s0 = inlined_call_operand.vmem [shape: f32[9,64], index: 0, kind: input, shape index: {}]
  %s1 = inlined_call_operand.vmem [shape: f32[1,576], index: 1, kind: output, shape index: {}]
  $region1: #{tile.38} parent=0
    #allocation0 [shape = 'u8[20480]{0}', space=vmem, size = 0x5000, scoped, tag = 'scoped mem for output reshape']
    %v2 = vld [vmem:[%s0] ss:$2 sm:$0x1f]
    %vm3 = vcmask 523264
    %4 = vst.msk [vmem:[#allocation0] ss:$8 sm:$0xf] %vm3, %v2
    %s5 = scalar_lea.vmem [#allocation0], 28
    %6 = vst.msk [vmem:[%s5] sm:$0x10] %vm3, %v2
    %s7 = scalar_lea.vmem %s0, 1
    %v8 = vld [vmem:[%s7] ss:$2 sm:$0xf]
    %9 = vrot.lane.b32.xlu0 %v8, 64
    %v10 = vpop.permute.xlu0 %9
    %vm11 = vcmask 1048064
    %12 = vst.msk [vmem:[#allocation0] ss:$8 sm:$0xf] %vm11, %v10
    %s14 = sshll.u32 1, 1
    %s15 = ssub.s32 %s14, 1
    %v17 = vld [vmem:[#allocation0] sm:%s15]
    %s18 = sshll.u32 1, 1
    %s19 = ssub.s32 %s18, 1
    %20 = vst [vmem:[%s1] sm:%s19] %v17
    %s21 = scalar_lea.vmem [#allocation0], 8
    %v22 = vld [vmem:[%s21] sm:%s15]
    %s23 = sshll.u32 1, 1
    %s24 = ssub.s32 %s23, 1
    %s25 = scalar_lea.vmem %s1, 1
    %26 = vst [vmem:[%s25] sm:%s24] %v22
    %s27 = scalar_lea.vmem [#allocation0], 16
    %v28 = vld [vmem:[%s27] sm:%s15]
    %s29 = sshll.u32 1, 1
    %s30 = ssub.s32 %s29, 1
    %s31 = smul.addr 1, 2
    %s32 = scalar_lea.vmem %s1, %s31
    %33 = vst [vmem:[%s32] sm:%s30] %v28
    %s34 = scalar_lea.vmem [#allocation0], 24
    %v35 = vld [vmem:[%s34] sm:%s15]
    %s36 = sshll.u32 1, 1
    %s37 = ssub.s32 %s36, 1
    %s38 = smul.addr 1, 3
    %s39 = scalar_lea.vmem %s1, %s38
    %40 = vst [vmem:[%s39] sm:%s37] %v35
    %s41 = scalar_lea.vmem [#allocation0], 32
    %v42 = vld [vmem:[%s41] sm:%s15]
    %s43 = sshll.u32 1, 1
    %s44 = ssub.s32 %s43, 1
    %s45 = smul.addr 1, 4
    %s46 = scalar_lea.vmem %s1, %s45
    %47 = vst [vmem:[%s46] sm:%s44] %v42

// kernel: _lambda_.12
$region0: #{_lambda_.12}
  #allocation0 [shape = 'u32[]', space=smem, size = 0x4, offset = 0x4, fixed_abs, tag = 'smem constant byte address 0x4 - core index']
  #allocation1 [shape = 'u32[144,128]{1,0:T(1,128)}', space=vmem, size = 0x12000, scoped, tag = 'internal scratch']
  %s0 = inlined_call_operand.vmem [shape: f32[128,576], index: 0, kind: input, shape index: {}]
  %s1 = inlined_call_operand.vmem [shape: f32[576,8], index: 1, kind: input, shape index: {}]
  %s2 = inlined_call_operand.vmem [shape: f32[1,576], index: 2, kind: input, shape index: {}]
  %s3 = inlined_call_operand.vmem [shape: f32[1,576], index: 3, kind: input, shape index: {}]
  %s4 = inlined_call_operand.vmem [shape: f32[128,8], index: 4, kind: output, shape index: {}]
  %s5 = sld [smem:[#allocation0]]
  $region26: #{_lambda_.12} parent=0
    _
  %s7 = ssub.s32 1, %s5
  %s8 = scalar_select 0, %s7, %s5
  // Predicated region
  $region2: #{_lambda_.12} parent=0 // pred_check
    _
  $region3: #{_lambda_.12} parent=0 // pred_check_branch
    %10 = sbr.rel (0) target = $region5
  $region4: #{_lambda_.12} parent=0 // pred_region
    _
  $region5: #{_lambda_.12} parent=0 // pred_fallthru
    _
  // Predicated region
  $region6: #{_lambda_.12} parent=0 // pred_check
    _
  $region7: #{_lambda_.12} parent=0 // pred_check_branch
    %12 = sbr.rel (0) target = $region9
  $region8: #{_lambda_.12} parent=0 // pred_region
    _
  $region9: #{_lambda_.12} parent=0 // pred_fallthru
    _
  // Predicated region
  $region10: #{_lambda_.12} parent=0 // pred_check
    _
  $region11: #{_lambda_.12} parent=0 // pred_check_branch
    %14 = sbr.rel (0) target = $region13
  $region12: #{_lambda_.12} parent=0 // pred_region
    _
  $region13: #{_lambda_.12} parent=0 // pred_fallthru
    _
  // Predicated region
  $region14: #{_lambda_.12} parent=0 // pred_check
    _
  $region15: #{_lambda_.12} parent=0 // pred_check_branch
    %16 = sbr.rel (0) target = $region17
  $region16: #{_lambda_.12} parent=0 // pred_region
    _
  $region17: #{_lambda_.12} parent=0 // pred_fallthru
    _
  %v17 = vld [vmem:[%s0] sm:$0xff]
  %v18 = vld [vmem:[%s0 + $0x8] sm:$0xff]
  %v19 = vld [vmem:[%s0 + $0x10] sm:$0xff]
  %v20 = vld [vmem:[%s0 + $0x18] sm:$0xff]
  %v21 = vld [vmem:[%s0 + $0x20] sm:$0xff]
  %v22 = vld [vmem:[%s0 + $0x28] sm:$0xff]
  %v23 = vld [vmem:[%s0 + $0x30] sm:$0xff]
  %v24 = vld [vmem:[%s0 + $0x38] sm:$0xff]
  %v25 = vld [vmem:[%s0 + $0x40] sm:$0xff]
  %v26 = vld [vmem:[%s0 + $0x48] sm:$0xff]
  %v27 = vld [vmem:[%s0 + $0x50] sm:$0xff]
  %v28 = vld [vmem:[%s0 + $0x58] sm:$0xff]
  %v29 = vld [vmem:[%s0 + $0x60] sm:$0xff]
  %v30 = vld [vmem:[%s0 + $0x68] sm:$0xff]
  %v31 = vld [vmem:[%s0 + $0x70] sm:$0xff]
  %v32 = vld [vmem:[%s0 + $0x78] sm:$0xff]
  %v33 = vld [vmem:[%s0 + $0x80] sm:$0xff]
  %v34 = vld [vmem:[%s0 + $0x88] sm:$0xff]
  %v35 = vld [vmem:[%s0 + $0x90] sm:$0xff]
  %v36 = vld [vmem:[%s0 + $0x98] sm:$0xff]
  %v37 = vld [vmem:[%s0 + $0xa0] sm:$0xff]
  %v38 = vld [vmem:[%s0 + $0xa8] sm:$0xff]
  %v39 = vld [vmem:[%s0 + $0xb0] sm:$0xff]
  %v40 = vld [vmem:[%s0 + $0xb8] sm:$0xff]
  %v41 = vld [vmem:[%s0 + $0xc0] sm:$0xff]
  %v42 = vld [vmem:[%s0 + $0xc8] sm:$0xff]
  %v43 = vld [vmem:[%s0 + $0xd0] sm:$0xff]
  %v44 = vld [vmem:[%s0 + $0xd8] sm:$0xff]
  %v45 = vld [vmem:[%s0 + $0xe0] sm:$0xff]
  %v46 = vld [vmem:[%s0 + $0xe8] sm:$0xff]
  %v47 = vld [vmem:[%s0 + $0xf0] sm:$0xff]
  %v48 = vld [vmem:[%s0 + $0xf8] sm:$0xff]
  %v49 = vld [vmem:[%s0 + $0x100] sm:$0xff]
  %v50 = vld [vmem:[%s0 + $0x108] sm:$0xff]
  %v51 = vld [vmem:[%s0 + $0x110] sm:$0xff]
  %v52 = vld [vmem:[%s0 + $0x118] sm:$0xff]
  %v53 = vld [vmem:[%s0 + $0x120] sm:$0xff]
  %v54 = vld [vmem:[%s0 + $0x128] sm:$0xff]
  %v55 = vld [vmem:[%s0 + $0x130] sm:$0xff]
  %v56 = vld [vmem:[%s0 + $0x138] sm:$0xff]
  %v57 = vld [vmem:[%s0 + $0x140] sm:$0xff]
  %v58 = vld [vmem:[%s0 + $0x148] sm:$0xff]
  %v59 = vld [vmem:[%s0 + $0x150] sm:$0xff]
  %v60 = vld [vmem:[%s0 + $0x158] sm:$0xff]
  %v61 = vld [vmem:[%s0 + $0x160] sm:$0xff]
  %v62 = vld [vmem:[%s0 + $0x168] sm:$0xff]
  %v63 = vld [vmem:[%s0 + $0x170] sm:$0xff]
  %v64 = vld [vmem:[%s0 + $0x178] sm:$0xff]
  %v65 = vld [vmem:[%s0 + $0x180] sm:$0xff]
  %v66 = vld [vmem:[%s0 + $0x188] sm:$0xff]
  %v67 = vld [vmem:[%s0 + $0x190] sm:$0xff]
  %v68 = vld [vmem:[%s0 + $0x198] sm:$0xff]
  %v69 = vld [vmem:[%s0 + $0x1a0] sm:$0xff]
  %v70 = vld [vmem:[%s0 + $0x1a8] sm:$0xff]
  %v71 = vld [vmem:[%s0 + $0x1b0] sm:$0xff]
  %v72 = vld [vmem:[%s0 + $0x1b8] sm:$0xff]
  %v73 = vld [vmem:[%s0 + $0x1c0] sm:$0xff]
  %v74 = vld [vmem:[%s0 + $0x1c8] sm:$0xff]
  %v75 = vld [vmem:[%s0 + $0x1d0] sm:$0xff]
  %v76 = vld [vmem:[%s0 + $0x1d8] sm:$0xff]
  %v77 = vld [vmem:[%s0 + $0x1e0] sm:$0xff]
  %v78 = vld [vmem:[%s0 + $0x1e8] sm:$0xff]
  %v79 = vld [vmem:[%s0 + $0x1f0] sm:$0xff]
  %v80 = vld [vmem:[%s0 + $0x1f8] sm:$0xff]
  %v81 = vld [vmem:[%s0 + $0x200] sm:$0xff]
  %v82 = vld [vmem:[%s0 + $0x208] sm:$0xff]
  %v83 = vld [vmem:[%s0 + $0x210] sm:$0xff]
  %v84 = vld [vmem:[%s0 + $0x218] sm:$0xff]
  %v85 = vld [vmem:[%s0 + $0x220] sm:$0xff]
  %v86 = vld [vmem:[%s0 + $0x228] sm:$0xff]
  %v87 = vld [vmem:[%s0 + $0x230] sm:$0xff]
  %v88 = vld [vmem:[%s0 + $0x238] sm:$0xff]
  %v89 = vld [vmem:[%s0 + $0x240] sm:$0xff]
  %v90 = vld [vmem:[%s0 + $0x248] sm:$0xff]
  %v91 = vld [vmem:[%s0 + $0x250] sm:$0xff]
  %v92 = vld [vmem:[%s0 + $0x258] sm:$0xff]
  %v93 = vld [vmem:[%s0 + $0x260] sm:$0xff]
  %v94 = vld [vmem:[%s0 + $0x268] sm:$0xff]
  %v95 = vld [vmem:[%s0 + $0x270] sm:$0xff]
  %v96 = vld [vmem:[%s0 + $0x278] sm:$0xff]
  %v97 = vld [vmem:[%s2] sm:$0x1f]
  %v99 = vlaneseq
  %v100 = vshrl.u32 %v99, 7
  %v101 = vsub.s32 0, %v100
  %v102 = vrot.slane %v97, %v101
  %v103 = vlaneseq
  %v104 = vshrl.u32 %v103, 7
  %v105 = vsub.s32 1, %v104
  %v106 = vrot.slane %v97, %v105
  %v107 = vlaneseq
  %v108 = vshrl.u32 %v107, 7
  %v109 = vsub.s32 2, %v108
  %v110 = vrot.slane %v97, %v109
  %v111 = vlaneseq
  %v112 = vshrl.u32 %v111, 7
  %v113 = vsub.s32 3, %v112
  %v114 = vrot.slane %v97, %v113
  %v115 = vlaneseq
  %v116 = vshrl.u32 %v115, 7
  %v117 = vsub.s32 4, %v116
  %v118 = vrot.slane %v97, %v117
  %v124 = vmul.f32 %v17, %v102
  %v125 = vmul.f32 %v18, %v106
  %v126 = vmul.f32 %v19, %v110
  %v127 = vmul.f32 %v20, %v114
  %v128 = vmul.f32 %v21, %v118
  %v129 = vmul.f32 %v22, %v102
  %v130 = vmul.f32 %v23, %v106
  %v131 = vmul.f32 %v24, %v110
  %v132 = vmul.f32 %v25, %v114
  %v133 = vmul.f32 %v26, %v118
  %v134 = vmul.f32 %v27, %v102
  %v135 = vmul.f32 %v28, %v106
  %v136 = vmul.f32 %v29, %v110
  %v137 = vmul.f32 %v30, %v114
  %v138 = vmul.f32 %v31, %v118
  %v139 = vmul.f32 %v32, %v102
  %v140 = vmul.f32 %v33, %v106
  %v141 = vmul.f32 %v34, %v110
  %v142 = vmul.f32 %v35, %v114
  %v143 = vmul.f32 %v36, %v118
  %v144 = vmul.f32 %v37, %v102
  %v145 = vmul.f32 %v38, %v106
  %v146 = vmul.f32 %v39, %v110
  %v147 = vmul.f32 %v40, %v114
  %v148 = vmul.f32 %v41, %v118
  %v149 = vmul.f32 %v42, %v102
  %v150 = vmul.f32 %v43, %v106
  %v151 = vmul.f32 %v44, %v110
  %v152 = vmul.f32 %v45, %v114
  %v153 = vmul.f32 %v46, %v118
  %v154 = vmul.f32 %v47, %v102
  %v155 = vmul.f32 %v48, %v106
  %v156 = vmul.f32 %v49, %v110
  %v157 = vmul.f32 %v50, %v114
  %v158 = vmul.f32 %v51, %v118
  %v159 = vmul.f32 %v52, %v102
  %v160 = vmul.f32 %v53, %v106
  %v161 = vmul.f32 %v54, %v110
  %v162 = vmul.f32 %v55, %v114
  %v163 = vmul.f32 %v56, %v118
  %v164 = vmul.f32 %v57, %v102
  %v165 = vmul.f32 %v58, %v106
  %v166 = vmul.f32 %v59, %v110
  %v167 = vmul.f32 %v60, %v114
  %v168 = vmul.f32 %v61, %v118
  %v169 = vmul.f32 %v62, %v102
  %v170 = vmul.f32 %v63, %v106
  %v171 = vmul.f32 %v64, %v110
  %v172 = vmul.f32 %v65, %v114
  %v173 = vmul.f32 %v66, %v118
  %v174 = vmul.f32 %v67, %v102
  %v175 = vmul.f32 %v68, %v106
  %v176 = vmul.f32 %v69, %v110
  %v177 = vmul.f32 %v70, %v114
  %v178 = vmul.f32 %v71, %v118
  %v179 = vmul.f32 %v72, %v102
  %v180 = vmul.f32 %v73, %v106
  %v181 = vmul.f32 %v74, %v110
  %v182 = vmul.f32 %v75, %v114
  %v183 = vmul.f32 %v76, %v118
  %v184 = vmul.f32 %v77, %v102
  %v185 = vmul.f32 %v78, %v106
  %v186 = vmul.f32 %v79, %v110
  %v187 = vmul.f32 %v80, %v114
  %v188 = vmul.f32 %v81, %v118
  %v189 = vmul.f32 %v82, %v102
  %v190 = vmul.f32 %v83, %v106
  %v191 = vmul.f32 %v84, %v110
  %v192 = vmul.f32 %v85, %v114
  %v193 = vmul.f32 %v86, %v118
  %v194 = vmul.f32 %v87, %v102
  %v195 = vmul.f32 %v88, %v106
  %v196 = vmul.f32 %v89, %v110
  %v197 = vmul.f32 %v90, %v114
  %v198 = vmul.f32 %v91, %v118
  %v199 = vmul.f32 %v92, %v102
  %v200 = vmul.f32 %v93, %v106
  %v201 = vmul.f32 %v94, %v110
  %v202 = vmul.f32 %v95, %v114
  %v203 = vmul.f32 %v96, %v118
  %v204 = vld [vmem:[%s3] sm:$0x1f]
  %v206 = vlaneseq
  %v207 = vshrl.u32 %v206, 7
  %v208 = vsub.s32 0, %v207
  %v209 = vrot.slane %v204, %v208
  %v210 = vlaneseq
  %v211 = vshrl.u32 %v210, 7
  %v212 = vsub.s32 1, %v211
  %v213 = vrot.slane %v204, %v212
  %v214 = vlaneseq
  %v215 = vshrl.u32 %v214, 7
  %v216 = vsub.s32 2, %v215
  %v217 = vrot.slane %v204, %v216
  %v218 = vlaneseq
  %v219 = vshrl.u32 %v218, 7
  %v220 = vsub.s32 3, %v219
  %v221 = vrot.slane %v204, %v220
  %v222 = vlaneseq
  %v223 = vshrl.u32 %v222, 7
  %v224 = vsub.s32 4, %v223
  %v225 = vrot.slane %v204, %v224
  %v231 = vadd.f32 %v124, %v209
  %v232 = vadd.f32 %v125, %v213
  %v233 = vadd.f32 %v126, %v217
  %v234 = vadd.f32 %v127, %v221
  %v235 = vadd.f32 %v128, %v225
  %v236 = vadd.f32 %v129, %v209
  %v237 = vadd.f32 %v130, %v213
  %v238 = vadd.f32 %v131, %v217
  %v239 = vadd.f32 %v132, %v221
  %v240 = vadd.f32 %v133, %v225
  %v241 = vadd.f32 %v134, %v209
  %v242 = vadd.f32 %v135, %v213
  %v243 = vadd.f32 %v136, %v217
  %v244 = vadd.f32 %v137, %v221
  %v245 = vadd.f32 %v138, %v225
  %v246 = vadd.f32 %v139, %v209
  %v247 = vadd.f32 %v140, %v213
  %v248 = vadd.f32 %v141, %v217
  %v249 = vadd.f32 %v142, %v221
  %v250 = vadd.f32 %v143, %v225
  %v251 = vadd.f32 %v144, %v209
  %v252 = vadd.f32 %v145, %v213
  %v253 = vadd.f32 %v146, %v217
  %v254 = vadd.f32 %v147, %v221
  %v255 = vadd.f32 %v148, %v225
  %v256 = vadd.f32 %v149, %v209
  %v257 = vadd.f32 %v150, %v213
  %v258 = vadd.f32 %v151, %v217
  %v259 = vadd.f32 %v152, %v221
  %v260 = vadd.f32 %v153, %v225
  %v261 = vadd.f32 %v154, %v209
  %v262 = vadd.f32 %v155, %v213
  %v263 = vadd.f32 %v156, %v217
  %v264 = vadd.f32 %v157, %v221
  %v265 = vadd.f32 %v158, %v225
  %v266 = vadd.f32 %v159, %v209
  %v267 = vadd.f32 %v160, %v213
  %v268 = vadd.f32 %v161, %v217
  %v269 = vadd.f32 %v162, %v221
  %v270 = vadd.f32 %v163, %v225
  %v271 = vadd.f32 %v164, %v209
  %v272 = vadd.f32 %v165, %v213
  %v273 = vadd.f32 %v166, %v217
  %v274 = vadd.f32 %v167, %v221
  %v275 = vadd.f32 %v168, %v225
  %v276 = vadd.f32 %v169, %v209
  %v277 = vadd.f32 %v170, %v213
  %v278 = vadd.f32 %v171, %v217
  %v279 = vadd.f32 %v172, %v221
  %v280 = vadd.f32 %v173, %v225
  %v281 = vadd.f32 %v174, %v209
  %v282 = vadd.f32 %v175, %v213
  %v283 = vadd.f32 %v176, %v217
  %v284 = vadd.f32 %v177, %v221
  %v285 = vadd.f32 %v178, %v225
  %v286 = vadd.f32 %v179, %v209
  %v287 = vadd.f32 %v180, %v213
  %v288 = vadd.f32 %v181, %v217
  %v289 = vadd.f32 %v182, %v221
  %v290 = vadd.f32 %v183, %v225
  %v291 = vadd.f32 %v184, %v209
  %v292 = vadd.f32 %v185, %v213
  %v293 = vadd.f32 %v186, %v217
  %v294 = vadd.f32 %v187, %v221
  %v295 = vadd.f32 %v188, %v225
  %v296 = vadd.f32 %v189, %v209
  %v297 = vadd.f32 %v190, %v213
  %v298 = vadd.f32 %v191, %v217
  %v299 = vadd.f32 %v192, %v221
  %v300 = vadd.f32 %v193, %v225
  %v301 = vadd.f32 %v194, %v209
  %v302 = vadd.f32 %v195, %v213
  %v303 = vadd.f32 %v196, %v217
  %v304 = vadd.f32 %v197, %v221
  %v305 = vadd.f32 %v198, %v225
  %v306 = vadd.f32 %v199, %v209
  %v307 = vadd.f32 %v200, %v213
  %v308 = vadd.f32 %v201, %v217
  %v309 = vadd.f32 %v202, %v221
  %v310 = vadd.f32 %v203, %v225
  %v311 = vmax.f32 %v231, 0.0
  %v312 = vmax.f32 %v232, 0.0
  %v313 = vmax.f32 %v233, 0.0
  %v314 = vmax.f32 %v234, 0.0
  %v315 = vmax.f32 %v235, 0.0
  %v316 = vmax.f32 %v236, 0.0
  %v317 = vmax.f32 %v237, 0.0
  %v318 = vmax.f32 %v238, 0.0
  %v319 = vmax.f32 %v239, 0.0
  %v320 = vmax.f32 %v240, 0.0
  %v321 = vmax.f32 %v241, 0.0
  %v322 = vmax.f32 %v242, 0.0
  %v323 = vmax.f32 %v243, 0.0
  %v324 = vmax.f32 %v244, 0.0
  %v325 = vmax.f32 %v245, 0.0
  %v326 = vmax.f32 %v246, 0.0
  %v327 = vmax.f32 %v247, 0.0
  %v328 = vmax.f32 %v248, 0.0
  %v329 = vmax.f32 %v249, 0.0
  %v330 = vmax.f32 %v250, 0.0
  %v331 = vmax.f32 %v251, 0.0
  %v332 = vmax.f32 %v252, 0.0
  %v333 = vmax.f32 %v253, 0.0
  %v334 = vmax.f32 %v254, 0.0
  %v335 = vmax.f32 %v255, 0.0
  %v336 = vmax.f32 %v256, 0.0
  %v337 = vmax.f32 %v257, 0.0
  %v338 = vmax.f32 %v258, 0.0
  %v339 = vmax.f32 %v259, 0.0
  %v340 = vmax.f32 %v260, 0.0
  %v341 = vmax.f32 %v261, 0.0
  %v342 = vmax.f32 %v262, 0.0
  %v343 = vmax.f32 %v263, 0.0
  %v344 = vmax.f32 %v264, 0.0
  %v345 = vmax.f32 %v265, 0.0
  %v346 = vmax.f32 %v266, 0.0
  %v347 = vmax.f32 %v267, 0.0
  %v348 = vmax.f32 %v268, 0.0
  %v349 = vmax.f32 %v269, 0.0
  %v350 = vmax.f32 %v270, 0.0
  %v351 = vmax.f32 %v271, 0.0
  %v352 = vmax.f32 %v272, 0.0
  %v353 = vmax.f32 %v273, 0.0
  %v354 = vmax.f32 %v274, 0.0
  %v355 = vmax.f32 %v275, 0.0
  %v356 = vmax.f32 %v276, 0.0
  %v357 = vmax.f32 %v277, 0.0
  %v358 = vmax.f32 %v278, 0.0
  %v359 = vmax.f32 %v279, 0.0
  %v360 = vmax.f32 %v280, 0.0
  %v361 = vmax.f32 %v281, 0.0
  %v362 = vmax.f32 %v282, 0.0
  %v363 = vmax.f32 %v283, 0.0
  %v364 = vmax.f32 %v284, 0.0
  %v365 = vmax.f32 %v285, 0.0
  %v366 = vmax.f32 %v286, 0.0
  %v367 = vmax.f32 %v287, 0.0
  %v368 = vmax.f32 %v288, 0.0
  %v369 = vmax.f32 %v289, 0.0
  %v370 = vmax.f32 %v290, 0.0
  %v371 = vmax.f32 %v291, 0.0
  %v372 = vmax.f32 %v292, 0.0
  %v373 = vmax.f32 %v293, 0.0
  %v374 = vmax.f32 %v294, 0.0
  %v375 = vmax.f32 %v295, 0.0
  %v376 = vmax.f32 %v296, 0.0
  %v377 = vmax.f32 %v297, 0.0
  %v378 = vmax.f32 %v298, 0.0
  %v379 = vmax.f32 %v299, 0.0
  %v380 = vmax.f32 %v300, 0.0
  %v381 = vmax.f32 %v301, 0.0
  %v382 = vmax.f32 %v302, 0.0
  %v383 = vmax.f32 %v303, 0.0
  %v384 = vmax.f32 %v304, 0.0
  %v385 = vmax.f32 %v305, 0.0
  %v386 = vmax.f32 %v306, 0.0
  %v387 = vmax.f32 %v307, 0.0
  %v388 = vmax.f32 %v308, 0.0
  %v389 = vmax.f32 %v309, 0.0
  %v390 = vmax.f32 %v310, 0.0
  %v391 = vld [vmem:[%s1] sm:$0xff]
  %v392 = vld [vmem:[%s1 + $0x8] sm:$0xff]
  %v393 = vld [vmem:[%s1 + $0x10] sm:$0xff]
  %v394 = vld [vmem:[%s1 + $0x18] sm:$0xff]
  %v395 = vld [vmem:[%s1 + $0x20] sm:$0xff]
  %v396 = vld [vmem:[%s1 + $0x28] sm:$0xff]
  %v397 = vld [vmem:[%s1 + $0x30] sm:$0xff]
  %v398 = vld [vmem:[%s1 + $0x38] sm:$0xff]
  %v399 = vld [vmem:[%s1 + $0x40] sm:$0xff]
  %v400 = vld [vmem:[%s1 + $0x48] sm:$0xff]
  %v401 = vld [vmem:[%s1 + $0x50] sm:$0xff]
  %v402 = vld [vmem:[%s1 + $0x58] sm:$0xff]
  %v403 = vld [vmem:[%s1 + $0x60] sm:$0xff]
  %v404 = vld [vmem:[%s1 + $0x68] sm:$0xff]
  %v405 = vld [vmem:[%s1 + $0x70] sm:$0xff]
  %v406 = vld [vmem:[%s1 + $0x78] sm:$0xff]
  %v407 = vld [vmem:[%s1 + $0x80] sm:$0xff]
  %v408 = vld [vmem:[%s1 + $0x88] sm:$0xff]
  %v409 = vld [vmem:[%s1 + $0x90] sm:$0xff]
  %v410 = vld [vmem:[%s1 + $0x98] sm:$0xff]
  %v411 = vld [vmem:[%s1 + $0xa0] sm:$0xff]
  %v412 = vld [vmem:[%s1 + $0xa8] sm:$0xff]
  %v413 = vld [vmem:[%s1 + $0xb0] sm:$0xff]
  %v414 = vld [vmem:[%s1 + $0xb8] sm:$0xff]
  %v415 = vld [vmem:[%s1 + $0xc0] sm:$0xff]
  %v416 = vld [vmem:[%s1 + $0xc8] sm:$0xff]
  %v417 = vld [vmem:[%s1 + $0xd0] sm:$0xff]
  %v418 = vld [vmem:[%s1 + $0xd8] sm:$0xff]
  %v419 = vld [vmem:[%s1 + $0xe0] sm:$0xff]
  %v420 = vld [vmem:[%s1 + $0xe8] sm:$0xff]
  %v421 = vld [vmem:[%s1 + $0xf0] sm:$0xff]
  %v422 = vld [vmem:[%s1 + $0xf8] sm:$0xff]
  %v423 = vld [vmem:[%s1 + $0x100] sm:$0xff]
  %v424 = vld [vmem:[%s1 + $0x108] sm:$0xff]
  %v425 = vld [vmem:[%s1 + $0x110] sm:$0xff]
  %v426 = vld [vmem:[%s1 + $0x118] sm:$0xff]
  %v427 = vld [vmem:[%s1 + $0x120] sm:$0xff]
  %v428 = vld [vmem:[%s1 + $0x128] sm:$0xff]
  %v429 = vld [vmem:[%s1 + $0x130] sm:$0xff]
  %v430 = vld [vmem:[%s1 + $0x138] sm:$0xff]
  %v431 = vld [vmem:[%s1 + $0x140] sm:$0xff]
  %v432 = vld [vmem:[%s1 + $0x148] sm:$0xff]
  %v433 = vld [vmem:[%s1 + $0x150] sm:$0xff]
  %v434 = vld [vmem:[%s1 + $0x158] sm:$0xff]
  %v435 = vld [vmem:[%s1 + $0x160] sm:$0xff]
  %v436 = vld [vmem:[%s1 + $0x168] sm:$0xff]
  %v437 = vld [vmem:[%s1 + $0x170] sm:$0xff]
  %v438 = vld [vmem:[%s1 + $0x178] sm:$0xff]
  %v439 = vld [vmem:[%s1 + $0x180] sm:$0xff]
  %v440 = vld [vmem:[%s1 + $0x188] sm:$0xff]
  %v441 = vld [vmem:[%s1 + $0x190] sm:$0xff]
  %v442 = vld [vmem:[%s1 + $0x198] sm:$0xff]
  %v443 = vld [vmem:[%s1 + $0x1a0] sm:$0xff]
  %v444 = vld [vmem:[%s1 + $0x1a8] sm:$0xff]
  %v445 = vld [vmem:[%s1 + $0x1b0] sm:$0xff]
  %v446 = vld [vmem:[%s1 + $0x1b8] sm:$0xff]
  %v447 = vld [vmem:[%s1 + $0x1c0] sm:$0xff]
  %v448 = vld [vmem:[%s1 + $0x1c8] sm:$0xff]
  %v449 = vld [vmem:[%s1 + $0x1d0] sm:$0xff]
  %v450 = vld [vmem:[%s1 + $0x1d8] sm:$0xff]
  %v451 = vld [vmem:[%s1 + $0x1e0] sm:$0xff]
  %v452 = vld [vmem:[%s1 + $0x1e8] sm:$0xff]
  %v453 = vld [vmem:[%s1 + $0x1f0] sm:$0xff]
  %v454 = vld [vmem:[%s1 + $0x1f8] sm:$0xff]
  %v455 = vld [vmem:[%s1 + $0x200] sm:$0xff]
  %v456 = vld [vmem:[%s1 + $0x208] sm:$0xff]
  %v457 = vld [vmem:[%s1 + $0x210] sm:$0xff]
  %v458 = vld [vmem:[%s1 + $0x218] sm:$0xff]
  %v459 = vld [vmem:[%s1 + $0x220] sm:$0xff]
  %v460 = vld [vmem:[%s1 + $0x228] sm:$0xff]
  %v461 = vld [vmem:[%s1 + $0x230] sm:$0xff]
  %v462 = vld [vmem:[%s1 + $0x238] sm:$0xff]
  %vm463 = vcmask 523264
  %v465 = vsel %vm463, %v315, 0
  %v468 = vsel %vm463, %v320, 0
  %v471 = vsel %vm463, %v325, 0
  %v474 = vsel %vm463, %v330, 0
  %v477 = vsel %vm463, %v335, 0
  %v480 = vsel %vm463, %v340, 0
  %v483 = vsel %vm463, %v345, 0
  %v486 = vsel %vm463, %v350, 0
  %v489 = vsel %vm463, %v355, 0
  %v492 = vsel %vm463, %v360, 0
  %v495 = vsel %vm463, %v365, 0
  %v498 = vsel %vm463, %v370, 0
  %v501 = vsel %vm463, %v375, 0
  %v504 = vsel %vm463, %v380, 0
  %v507 = vsel %vm463, %v385, 0
  %v510 = vsel %vm463, %v390, 0
  %512 = vmatprep.subr.mxu0 0.0
  %513 = vmatpush1.msra.mxu0 %v406
  %514 = vmatprep.subr.mxu0 0.0
  %515 = vmatpush1.msra.mxu0 %v405
  %516 = vmatprep.subr.mxu0 0.0
  %517 = vmatpush1.msra.mxu0 %v404
  %518 = vmatprep.subr.mxu0 0.0
  %519 = vmatpush1.msra.mxu0 %v403
  %520 = vmatprep.subr.mxu0 0.0
  %521 = vmatpush1.msra.mxu0 %v402
  %522 = vmatprep.subr.mxu0 0.0
  %523 = vmatpush1.msra.mxu0 %v401
  %524 = vmatprep.subr.mxu0 0.0
  %525 = vmatpush1.msra.mxu0 %v400
  %526 = vmatprep.subr.mxu0 0.0
  %527 = vmatpush1.msra.mxu0 %v399
  %528 = vmatprep.subr.mxu0 0.0
  %529 = vmatpush1.msra.mxu0 %v398
  %530 = vmatprep.subr.mxu0 0.0
  %531 = vmatpush1.msra.mxu0 %v397
  %532 = vmatprep.subr.mxu0 0.0
  %533 = vmatpush1.msra.mxu0 %v396
  %534 = vmatprep.subr.mxu0 0.0
  %535 = vmatpush1.msra.mxu0 %v395
  %536 = vmatprep.subr.mxu0 0.0
  %537 = vmatpush1.msra.mxu0 %v394
  %538 = vmatprep.subr.mxu0 0.0
  %539 = vmatpush1.msra.mxu0 %v393
  %540 = vmatprep.subr.mxu0 0.0
  %541 = vmatpush1.msra.mxu0 %v392
  %542 = vmatprep.subr.mxu0 0.0
  %543 = vmatpush1.msra.mxu0 %v391
  %544 = vmatprep.subr.mxu0 0.0
  %545 = vmatpush2.msra.mxu0 %v422
  %546 = vmatprep.subr.mxu0 0.0
  %547 = vmatpush2.msra.mxu0 %v421
  %548 = vmatprep.subr.mxu0 0.0
  %549 = vmatpush2.msra.mxu0 %v420
  %550 = vmatprep.subr.mxu0 0.0
  %551 = vmatpush2.msra.mxu0 %v419
  %552 = vmatprep.subr.mxu0 0.0
  %553 = vmatpush2.msra.mxu0 %v418
  %554 = vmatprep.subr.mxu0 0.0
  %555 = vmatpush2.msra.mxu0 %v417
  %556 = vmatprep.subr.mxu0 0.0
  %557 = vmatpush2.msra.mxu0 %v416
  %558 = vmatprep.subr.mxu0 0.0
  %559 = vmatpush2.msra.mxu0 %v415
  %560 = vmatprep.subr.mxu0 0.0
  %561 = vmatpush2.msra.mxu0 %v414
  %562 = vmatprep.subr.mxu0 0.0
  %563 = vmatpush2.msra.mxu0 %v413
  %564 = vmatprep.subr.mxu0 0.0
  %565 = vmatpush2.msra.mxu0 %v412
  %566 = vmatprep.subr.mxu0 0.0
  %567 = vmatpush2.msra.mxu0 %v411
  %568 = vmatprep.subr.mxu0 0.0
  %569 = vmatpush2.msra.mxu0 %v410
  %570 = vmatprep.subr.mxu0 0.0
  %571 = vmatpush2.msra.mxu0 %v409
  %572 = vmatprep.subr.mxu0 0.0
  %573 = vmatpush2.msra.mxu0 %v408
  %574 = vmatprep.subr.mxu0 0.0
  %575 = vmatpush2.msra.mxu0 %v407
  %576 = vmatprep.mubr.f32.mxu0 %v312
  %577 = vmatmul.mubr.f32.gmra.mxu0 %v311
  %v578 = vpop.f32.mrf.mxu0
  %v579 = vadd.f32 0.0, %v578
  %v580 = vpop.f32.mrf.mxu0
  %581 = vmatprep.mubr.f32.mxu0 %v317
  %582 = vmatmul.mubr.f32.gmra.mxu0 %v316
  %v583 = vpop.f32.mrf.mxu0
  %v584 = vadd.f32 0.0, %v583
  %v585 = vpop.f32.mrf.mxu0
  %586 = vmatprep.mubr.f32.mxu0 %v322
  %587 = vmatmul.mubr.f32.gmra.mxu0 %v321
  %v588 = vpop.f32.mrf.mxu0
  %v589 = vadd.f32 0.0, %v588
  %v590 = vpop.f32.mrf.mxu0
  %591 = vmatprep.mubr.f32.mxu0 %v327
  %592 = vmatmul.mubr.f32.gmra.mxu0 %v326
  %v593 = vpop.f32.mrf.mxu0
  %v594 = vadd.f32 0.0, %v593
  %v595 = vpop.f32.mrf.mxu0
  %596 = vmatprep.mubr.f32.mxu0 %v332
  %597 = vmatmul.mubr.f32.gmra.mxu0 %v331
  %v598 = vpop.f32.mrf.mxu0
  %v599 = vadd.f32 0.0, %v598
  %v600 = vpop.f32.mrf.mxu0
  %601 = vmatprep.mubr.f32.mxu0 %v337
  %602 = vmatmul.mubr.f32.gmra.mxu0 %v336
  %v603 = vpop.f32.mrf.mxu0
  %v604 = vadd.f32 0.0, %v603
  %v605 = vpop.f32.mrf.mxu0
  %606 = vmatprep.mubr.f32.mxu0 %v342
  %607 = vmatmul.mubr.f32.gmra.mxu0 %v341
  %v608 = vpop.f32.mrf.mxu0
  %v609 = vadd.f32 0.0, %v608
  %v610 = vpop.f32.mrf.mxu0
  %611 = vmatprep.mubr.f32.mxu0 %v347
  %612 = vmatmul.mubr.f32.gmra.mxu0 %v346
  %v613 = vpop.f32.mrf.mxu0
  %v614 = vadd.f32 0.0, %v613
  %v615 = vpop.f32.mrf.mxu0
  %616 = vmatprep.mubr.f32.mxu0 %v352
  %617 = vmatmul.mubr.f32.gmra.mxu0 %v351
  %v618 = vpop.f32.mrf.mxu0
  %v619 = vadd.f32 0.0, %v618
  %v620 = vpop.f32.mrf.mxu0
  %621 = vmatprep.mubr.f32.mxu0 %v357
  %622 = vmatmul.mubr.f32.gmra.mxu0 %v356
  %v623 = vpop.f32.mrf.mxu0
  %v624 = vadd.f32 0.0, %v623
  %v625 = vpop.f32.mrf.mxu0
  %626 = vmatprep.mubr.f32.mxu0 %v362
  %627 = vmatmul.mubr.f32.gmra.mxu0 %v361
  %v628 = vpop.f32.mrf.mxu0
  %v629 = vadd.f32 0.0, %v628
  %v630 = vpop.f32.mrf.mxu0
  %631 = vmatprep.mubr.f32.mxu0 %v367
  %632 = vmatmul.mubr.f32.gmra.mxu0 %v366
  %v633 = vpop.f32.mrf.mxu0
  %v634 = vadd.f32 0.0, %v633
  %v635 = vpop.f32.mrf.mxu0
  %636 = vmatprep.mubr.f32.mxu0 %v372
  %637 = vmatmul.mubr.f32.gmra.mxu0 %v371
  %v638 = vpop.f32.mrf.mxu0
  %v639 = vadd.f32 0.0, %v638
  %v640 = vpop.f32.mrf.mxu0
  %641 = vmatprep.mubr.f32.mxu0 %v377
  %642 = vmatmul.mubr.f32.gmra.mxu0 %v376
  %v643 = vpop.f32.mrf.mxu0
  %v644 = vadd.f32 0.0, %v643
  %v645 = vpop.f32.mrf.mxu0
  %646 = vmatprep.mubr.f32.mxu0 %v382
  %647 = vmatmul.mubr.f32.gmra.mxu0 %v381
  %v648 = vpop.f32.mrf.mxu0
  %v649 = vadd.f32 0.0, %v648
  %v650 = vpop.f32.mrf.mxu0
  %651 = vmatprep.mubr.f32.mxu0 %v387
  %652 = vmatmul.mubr.f32.gmra.mxu0 %v386
  %v653 = vpop.f32.mrf.mxu0
  %v654 = vadd.f32 0.0, %v653
  %v655 = vpop.f32.mrf.mxu0
  %656 = vdwg.mxu0
  %657 = vmatprep.subr.mxu0 0.0
  %658 = vmatpush1.msra.mxu0 %v438
  %659 = vmatprep.subr.mxu0 0.0
  %660 = vmatpush1.msra.mxu0 %v437
  %661 = vmatprep.subr.mxu0 0.0
  %662 = vmatpush1.msra.mxu0 %v436
  %663 = vmatprep.subr.mxu0 0.0
  %664 = vmatpush1.msra.mxu0 %v435
  %665 = vmatprep.subr.mxu0 0.0
  %666 = vmatpush1.msra.mxu0 %v434
  %667 = vmatprep.subr.mxu0 0.0
  %668 = vmatpush1.msra.mxu0 %v433
  %669 = vmatprep.subr.mxu0 0.0
  %670 = vmatpush1.msra.mxu0 %v432
  %671 = vmatprep.subr.mxu0 0.0
  %672 = vmatpush1.msra.mxu0 %v431
  %673 = vmatprep.subr.mxu0 0.0
  %674 = vmatpush1.msra.mxu0 %v430
  %675 = vmatprep.subr.mxu0 0.0
  %676 = vmatpush1.msra.mxu0 %v429
  %677 = vmatprep.subr.mxu0 0.0
  %678 = vmatpush1.msra.mxu0 %v428
  %679 = vmatprep.subr.mxu0 0.0
  %680 = vmatpush1.msra.mxu0 %v427
  %681 = vmatprep.subr.mxu0 0.0
  %682 = vmatpush1.msra.mxu0 %v426
  %683 = vmatprep.subr.mxu0 0.0
  %684 = vmatpush1.msra.mxu0 %v425
  %685 = vmatprep.subr.mxu0 0.0
  %686 = vmatpush1.msra.mxu0 %v424
  %687 = vmatprep.subr.mxu0 0.0
  %688 = vmatpush1.msra.mxu0 %v423
  %689 = vmatprep.subr.mxu0 0.0
  %690 = vmatpush2.msra.mxu0 %v454
  %691 = vmatprep.subr.mxu0 0.0
  %692 = vmatpush2.msra.mxu0 %v453
  %693 = vmatprep.subr.mxu0 0.0
  %694 = vmatpush2.msra.mxu0 %v452
  %695 = vmatprep.subr.mxu0 0.0
  %696 = vmatpush2.msra.mxu0 %v451
  %697 = vmatprep.subr.mxu0 0.0
  %698 = vmatpush2.msra.mxu0 %v450
  %699 = vmatprep.subr.mxu0 0.0
  %700 = vmatpush2.msra.mxu0 %v449
  %701 = vmatprep.subr.mxu0 0.0
  %702 = vmatpush2.msra.mxu0 %v448
  %703 = vmatprep.subr.mxu0 0.0
  %704 = vmatpush2.msra.mxu0 %v447
  %705 = vmatprep.subr.mxu0 0.0
  %706 = vmatpush2.msra.mxu0 %v446
  %707 = vmatprep.subr.mxu0 0.0
  %708 = vmatpush2.msra.mxu0 %v445
  %709 = vmatprep.subr.mxu0 0.0
  %710 = vmatpush2.msra.mxu0 %v444
  %711 = vmatprep.subr.mxu0 0.0
  %712 = vmatpush2.msra.mxu0 %v443
  %713 = vmatprep.subr.mxu0 0.0
  %714 = vmatpush2.msra.mxu0 %v442
  %715 = vmatprep.subr.mxu0 0.0
  %716 = vmatpush2.msra.mxu0 %v441
  %717 = vmatprep.subr.mxu0 0.0
  %718 = vmatpush2.msra.mxu0 %v440
  %719 = vmatprep.subr.mxu0 0.0
  %720 = vmatpush2.msra.mxu0 %v439
  %721 = vmatprep.mubr.f32.mxu0 %v314
  %722 = vmatmul.mubr.f32.gmra.mxu0 %v313
  %v723 = vpop.f32.mrf.mxu0
  %v724 = vadd.f32 %v579, %v723
  %v725 = vpop.f32.mrf.mxu0
  %726 = vmatprep.mubr.f32.mxu0 %v319
  %727 = vmatmul.mubr.f32.gmra.mxu0 %v318
  %v728 = vpop.f32.mrf.mxu0
  %v729 = vadd.f32 %v584, %v728
  %v730 = vpop.f32.mrf.mxu0
  %731 = vmatprep.mubr.f32.mxu0 %v324
  %732 = vmatmul.mubr.f32.gmra.mxu0 %v323
  %v733 = vpop.f32.mrf.mxu0
  %v734 = vadd.f32 %v589, %v733
  %v735 = vpop.f32.mrf.mxu0
  %736 = vmatprep.mubr.f32.mxu0 %v329
  %737 = vmatmul.mubr.f32.gmra.mxu0 %v328
  %v738 = vpop.f32.mrf.mxu0
  %v739 = vadd.f32 %v594, %v738
  %v740 = vpop.f32.mrf.mxu0
  %741 = vmatprep.mubr.f32.mxu0 %v334
  %742 = vmatmul.mubr.f32.gmra.mxu0 %v333
  %v743 = vpop.f32.mrf.mxu0
  %v744 = vadd.f32 %v599, %v743
  %v745 = vpop.f32.mrf.mxu0
  %746 = vmatprep.mubr.f32.mxu0 %v339
  %747 = vmatmul.mubr.f32.gmra.mxu0 %v338
  %v748 = vpop.f32.mrf.mxu0
  %v749 = vadd.f32 %v604, %v748
  %v750 = vpop.f32.mrf.mxu0
  %751 = vmatprep.mubr.f32.mxu0 %v344
  %752 = vmatmul.mubr.f32.gmra.mxu0 %v343
  %v753 = vpop.f32.mrf.mxu0
  %v754 = vadd.f32 %v609, %v753
  %v755 = vpop.f32.mrf.mxu0
  %756 = vmatprep.mubr.f32.mxu0 %v349
  %757 = vmatmul.mubr.f32.gmra.mxu0 %v348
  %v758 = vpop.f32.mrf.mxu0
  %v759 = vadd.f32 %v614, %v758
  %v760 = vpop.f32.mrf.mxu0
  %761 = vmatprep.mubr.f32.mxu0 %v354
  %762 = vmatmul.mubr.f32.gmra.mxu0 %v353
  %v763 = vpop.f32.mrf.mxu0
  %v764 = vadd.f32 %v619, %v763
  %v765 = vpop.f32.mrf.mxu0
  %766 = vmatprep.mubr.f32.mxu0 %v359
  %767 = vmatmul.mubr.f32.gmra.mxu0 %v358
  %v768 = vpop.f32.mrf.mxu0
  %v769 = vadd.f32 %v624, %v768
  %v770 = vpop.f32.mrf.mxu0
  %771 = vmatprep.mubr.f32.mxu0 %v364
  %772 = vmatmul.mubr.f32.gmra.mxu0 %v363
  %v773 = vpop.f32.mrf.mxu0
  %v774 = vadd.f32 %v629, %v773
  %v775 = vpop.f32.mrf.mxu0
  %776 = vmatprep.mubr.f32.mxu0 %v369
  %777 = vmatmul.mubr.f32.gmra.mxu0 %v368
  %v778 = vpop.f32.mrf.mxu0
  %v779 = vadd.f32 %v634, %v778
  %v780 = vpop.f32.mrf.mxu0
  %781 = vmatprep.mubr.f32.mxu0 %v374
  %782 = vmatmul.mubr.f32.gmra.mxu0 %v373
  %v783 = vpop.f32.mrf.mxu0
  %v784 = vadd.f32 %v639, %v783
  %v785 = vpop.f32.mrf.mxu0
  %786 = vmatprep.mubr.f32.mxu0 %v379
  %787 = vmatmul.mubr.f32.gmra.mxu0 %v378
  %v788 = vpop.f32.mrf.mxu0
  %v789 = vadd.f32 %v644, %v788
  %v790 = vpop.f32.mrf.mxu0
  %791 = vmatprep.mubr.f32.mxu0 %v384
  %792 = vmatmul.mubr.f32.gmra.mxu0 %v383
  %v793 = vpop.f32.mrf.mxu0
  %v794 = vadd.f32 %v649, %v793
  %v795 = vpop.f32.mrf.mxu0
  %796 = vmatprep.mubr.f32.mxu0 %v389
  %797 = vmatmul.mubr.f32.gmra.mxu0 %v388
  %v798 = vpop.f32.mrf.mxu0
  %v799 = vadd.f32 %v654, %v798
  %v800 = vpop.f32.mrf.mxu0
  %801 = vdwg.mxu0
  %802 = vmatprep.subr.mxu0 0.0
  %803 = vmatpush1.msra.mxu0 0.0
  %804 = vmatprep.subr.mxu0 0.0
  %805 = vmatpush1.msra.mxu0 0.0
  %806 = vmatprep.subr.mxu0 0.0
  %807 = vmatpush1.msra.mxu0 0.0
  %808 = vmatprep.subr.mxu0 0.0
  %809 = vmatpush1.msra.mxu0 0.0
  %810 = vmatprep.subr.mxu0 0.0
  %811 = vmatpush1.msra.mxu0 0.0
  %812 = vmatprep.subr.mxu0 0.0
  %813 = vmatpush1.msra.mxu0 0.0
  %814 = vmatprep.subr.mxu0 0.0
  %815 = vmatpush1.msra.mxu0 0.0
  %816 = vmatprep.subr.mxu0 0.0
  %817 = vmatpush1.msra.mxu0 0.0
  %818 = vmatprep.subr.mxu0 0.0
  %819 = vmatpush1.msra.mxu0 %v462
  %820 = vmatprep.subr.mxu0 0.0
  %821 = vmatpush1.msra.mxu0 %v461
  %822 = vmatprep.subr.mxu0 0.0
  %823 = vmatpush1.msra.mxu0 %v460
  %824 = vmatprep.subr.mxu0 0.0
  %825 = vmatpush1.msra.mxu0 %v459
  %826 = vmatprep.subr.mxu0 0.0
  %827 = vmatpush1.msra.mxu0 %v458
  %828 = vmatprep.subr.mxu0 0.0
  %829 = vmatpush1.msra.mxu0 %v457
  %830 = vmatprep.subr.mxu0 0.0
  %831 = vmatpush1.msra.mxu0 %v456
  %832 = vmatprep.subr.mxu0 0.0
  %833 = vmatpush1.msra.mxu0 %v455
  %834 = vmatprep.subr.mxu0 0.0
  %835 = vmatpush2.msra.mxu0 0.0
  %836 = vmatprep.subr.mxu0 0.0
  %837 = vmatpush2.msra.mxu0 0.0
  %838 = vmatprep.subr.mxu0 0.0
  %839 = vmatpush2.msra.mxu0 0.0
  %840 = vmatprep.subr.mxu0 0.0
  %841 = vmatpush2.msra.mxu0 0.0
  %842 = vmatprep.subr.mxu0 0.0
  %843 = vmatpush2.msra.mxu0 0.0
  %844 = vmatprep.subr.mxu0 0.0
  %845 = vmatpush2.msra.mxu0 0.0
  %846 = vmatprep.subr.mxu0 0.0
  %847 = vmatpush2.msra.mxu0 0.0
  %848 = vmatprep.subr.mxu0 0.0
  %849 = vmatpush2.msra.mxu0 0.0
  %850 = vmatprep.subr.mxu0 0.0
  %851 = vmatpush2.msra.mxu0 0.0
  %852 = vmatprep.subr.mxu0 0.0
  %853 = vmatpush2.msra.mxu0 0.0
  %854 = vmatprep.subr.mxu0 0.0
  %855 = vmatpush2.msra.mxu0 0.0
  %856 = vmatprep.subr.mxu0 0.0
  %857 = vmatpush2.msra.mxu0 0.0
  %858 = vmatprep.subr.mxu0 0.0
  %859 = vmatpush2.msra.mxu0 0.0
  %860 = vmatprep.subr.mxu0 0.0
  %861 = vmatpush2.msra.mxu0 0.0
  %862 = vmatprep.subr.mxu0 0.0
  %863 = vmatpush2.msra.mxu0 0.0
  %864 = vmatprep.subr.mxu0 0.0
  %865 = vmatpush2.msra.mxu0 0.0
  %866 = vmatprep.mubr.f32.mxu0 0.0
  %867 = vmatmul.mubr.f32.gmra.mxu0 %v465
  %v868 = vpop.f32.mrf.mxu0
  %v869 = vadd.f32 %v724, %v868
  %v870 = vpop.f32.mrf.mxu0
  %871 = vmatprep.mubr.f32.mxu0 0.0
  %872 = vmatmul.mubr.f32.gmra.mxu0 %v468
  %v873 = vpop.f32.mrf.mxu0
  %v874 = vadd.f32 %v729, %v873
  %v875 = vpop.f32.mrf.mxu0
  %876 = vmatprep.mubr.f32.mxu0 0.0
  %877 = vmatmul.mubr.f32.gmra.mxu0 %v471
  %v878 = vpop.f32.mrf.mxu0
  %v879 = vadd.f32 %v734, %v878
  %v880 = vpop.f32.mrf.mxu0
  %881 = vmatprep.mubr.f32.mxu0 0.0
  %882 = vmatmul.mubr.f32.gmra.mxu0 %v474
  %v883 = vpop.f32.mrf.mxu0
  %v884 = vadd.f32 %v739, %v883
  %v885 = vpop.f32.mrf.mxu0
  %886 = vmatprep.mubr.f32.mxu0 0.0
  %887 = vmatmul.mubr.f32.gmra.mxu0 %v477
  %v888 = vpop.f32.mrf.mxu0
  %v889 = vadd.f32 %v744, %v888
  %v890 = vpop.f32.mrf.mxu0
  %891 = vmatprep.mubr.f32.mxu0 0.0
  %892 = vmatmul.mubr.f32.gmra.mxu0 %v480
  %v893 = vpop.f32.mrf.mxu0
  %v894 = vadd.f32 %v749, %v893
  %v895 = vpop.f32.mrf.mxu0
  %896 = vmatprep.mubr.f32.mxu0 0.0
  %897 = vmatmul.mubr.f32.gmra.mxu0 %v483
  %v898 = vpop.f32.mrf.mxu0
  %v899 = vadd.f32 %v754, %v898
  %v900 = vpop.f32.mrf.mxu0
  %901 = vmatprep.mubr.f32.mxu0 0.0
  %902 = vmatmul.mubr.f32.gmra.mxu0 %v486
  %v903 = vpop.f32.mrf.mxu0
  %v904 = vadd.f32 %v759, %v903
  %v905 = vpop.f32.mrf.mxu0
  %906 = vmatprep.mubr.f32.mxu0 0.0
  %907 = vmatmul.mubr.f32.gmra.mxu0 %v489
  %v908 = vpop.f32.mrf.mxu0
  %v909 = vadd.f32 %v764, %v908
  %v910 = vpop.f32.mrf.mxu0
  %911 = vmatprep.mubr.f32.mxu0 0.0
  %912 = vmatmul.mubr.f32.gmra.mxu0 %v492
  %v913 = vpop.f32.mrf.mxu0
  %v914 = vadd.f32 %v769, %v913
  %v915 = vpop.f32.mrf.mxu0
  %916 = vmatprep.mubr.f32.mxu0 0.0
  %917 = vmatmul.mubr.f32.gmra.mxu0 %v495
  %v918 = vpop.f32.mrf.mxu0
  %v919 = vadd.f32 %v774, %v918
  %v920 = vpop.f32.mrf.mxu0
  %921 = vmatprep.mubr.f32.mxu0 0.0
  %922 = vmatmul.mubr.f32.gmra.mxu0 %v498
  %v923 = vpop.f32.mrf.mxu0
  %v924 = vadd.f32 %v779, %v923
  %v925 = vpop.f32.mrf.mxu0
  %926 = vmatprep.mubr.f32.mxu0 0.0
  %927 = vmatmul.mubr.f32.gmra.mxu0 %v501
  %v928 = vpop.f32.mrf.mxu0
  %v929 = vadd.f32 %v784, %v928
  %v930 = vpop.f32.mrf.mxu0
  %931 = vmatprep.mubr.f32.mxu0 0.0
  %932 = vmatmul.mubr.f32.gmra.mxu0 %v504
  %v933 = vpop.f32.mrf.mxu0
  %v934 = vadd.f32 %v789, %v933
  %v935 = vpop.f32.mrf.mxu0
  %936 = vmatprep.mubr.f32.mxu0 0.0
  %937 = vmatmul.mubr.f32.gmra.mxu0 %v507
  %v938 = vpop.f32.mrf.mxu0
  %v939 = vadd.f32 %v794, %v938
  %v940 = vpop.f32.mrf.mxu0
  %941 = vmatprep.mubr.f32.mxu0 0.0
  %942 = vmatmul.mubr.f32.gmra.mxu0 %v510
  %v943 = vpop.f32.mrf.mxu0
  %v944 = vadd.f32 %v799, %v943
  %v945 = vpop.f32.mrf.mxu0
  %946 = vdwg.mxu0
  %vm947 = vcmask 64512
  %948 = vst.msk [vmem:[%s4] sm:$0xff] %vm947, %v869
  %949 = vst.msk [vmem:[%s4 + $0x8] sm:$0xff] %vm947, %v874
  %950 = vst.msk [vmem:[%s4 + $0x10] sm:$0xff] %vm947, %v879
  %951 = vst.msk [vmem:[%s4 + $0x18] sm:$0xff] %vm947, %v884
  %952 = vst.msk [vmem:[%s4 + $0x20] sm:$0xff] %vm947, %v889
  %953 = vst.msk [vmem:[%s4 + $0x28] sm:$0xff] %vm947, %v894
  %954 = vst.msk [vmem:[%s4 + $0x30] sm:$0xff] %vm947, %v899
  %955 = vst.msk [vmem:[%s4 + $0x38] sm:$0xff] %vm947, %v904
  %956 = vst.msk [vmem:[%s4 + $0x40] sm:$0xff] %vm947, %v909
  %957 = vst.msk [vmem:[%s4 + $0x48] sm:$0xff] %vm947, %v914
  %958 = vst.msk [vmem:[%s4 + $0x50] sm:$0xff] %vm947, %v919
  %959 = vst.msk [vmem:[%s4 + $0x58] sm:$0xff] %vm947, %v924
  %960 = vst.msk [vmem:[%s4 + $0x60] sm:$0xff] %vm947, %v929
  %961 = vst.msk [vmem:[%s4 + $0x68] sm:$0xff] %vm947, %v934
  %962 = vst.msk [vmem:[%s4 + $0x70] sm:$0xff] %vm947, %v939
  %963 = vst.msk [vmem:[%s4 + $0x78] sm:$0xff] %vm947, %v944
  // Predicated region
  $region18: #{_lambda_.12} parent=0 // pred_check
    _
  $region19: #{_lambda_.12} parent=0 // pred_check_branch
    %965 = sbr.rel (0) target = $region21
  $region20: #{_lambda_.12} parent=0 // pred_region
    _
  $region21: #{_lambda_.12} parent=0 // pred_fallthru
    _
  // Predicated region
  $region22: #{_lambda_.12} parent=0 // pred_check
    _
  $region23: #{_lambda_.12} parent=0 // pred_check_branch
    %967 = sbr.rel (0) target = $region25
  $region24: #{_lambda_.12} parent=0 // pred_region
    _
  $region25: #{_lambda_.12} parent=0 // pred_fallthru
    _

// kernel: tile.42
$region0: #{tile.42}
  #allocation0 [shape = 's32[1]{0}', space=sflag, size = 0x4, scoped, tag = 'scoped memory for tile.42']
  %s0 = inlined_call_operand.vmem [shape: f32[72], index: 0, kind: input, shape index: {}]
  %s1 = inlined_call_operand.vmem [shape: f32[9,72], index: 1, kind: output, shape index: {}]
  // Predicated region
  $region2: #{tile.42} parent=0 // pred_check
    _
  $region3: #{tile.42} parent=0 // pred_check_branch
    %3 = sbr.rel (0) target = $region5
  $region4: #{tile.42} parent=0 // pred_region
    _
  $region5: #{tile.42} parent=0 // pred_fallthru
    _
  %v4 = vld [vmem:[%s0] ss:$0 sm:$0xff]
  %5 = vst [vmem:[%s1] sm:$0xff] %v4
  %s6 = scalar_lea.vmem %s1, 8
  %7 = vst [vmem:[%s6] sm:$0xff] %v4

// kernel: tile.46
$region0: #{tile.46}
  %s0 = inlined_call_operand.vmem [shape: f32[9,72], index: 0, kind: input, shape index: {}]
  %s1 = inlined_call_operand.vmem [shape: f32[1,648], index: 1, kind: output, shape index: {}]
  $region1: #{tile.46} parent=0
    #allocation0 [shape = 'u8[24576]{0}', space=vmem, size = 0x6000, scoped, tag = 'scoped mem for output reshape']
    %v2 = vld [vmem:[%s0] sm:$0x1]
    %vm3 = vcmask 588800
    %4 = vst.msk [vmem:[#allocation0] sm:$0x1] %vm3, %v2
    %s5 = scalar_lea.vmem %s0, 7
    %v6 = vld [vmem:[%s5] sm:$0x1]
    %s7 = scalar_lea.vmem %s0, 7
    %v8 = vld [vmem:[%s7] sm:$0x1]
    %vm9 = vcmask 64512
    %v10 = vsel %vm9, %v8, %v6
    %11 = vrot.lane.b32.xlu0 %v10, 120
    %v12 = vpop.permute.xlu0 %11
    %vm13 = vcmask 523264
    %s14 = scalar_lea.vmem [#allocation0], 32
    %15 = vst.msk [vmem:[%s14] sm:$0x1] %vm13, %v12
    %vm16 = vcmask 1048512
    %s17 = scalar_lea.vmem [#allocation0], 24
    %18 = vst.msk [vmem:[%s17] sm:$0x1] %vm16, %v12
    %s19 = scalar_lea.vmem %s0, 5
    %v20 = vld [vmem:[%s19] sm:$0x1]
    %s21 = scalar_lea.vmem %s0, 5
    %v22 = vld [vmem:[%s21] sm:$0x1]
    %vm23 = vcmask 195584
    %v24 = vsel %vm23, %v22, %v20
    %25 = vrot.lane.b32.xlu0 %v24, 104
    %v26 = vpop.permute.xlu0 %25
    %vm27 = vcmask 392192
    %s28 = scalar_lea.vmem [#allocation0], 24
    %29 = vst.msk [vmem:[%s28] sm:$0x1] %vm27, %v26
    %vm30 = vcmask 1048384
    %s31 = scalar_lea.vmem [#allocation0], 16
    %32 = vst.msk [vmem:[%s31] sm:$0x1] %vm30, %v26
    %s33 = scalar_lea.vmem %s0, 3
    %v34 = vld [vmem:[%s33] sm:$0x1]
    %s35 = scalar_lea.vmem %s0, 3
    %v36 = vld [vmem:[%s35] sm:$0x1]
    %vm37 = vcmask 326656
    %v38 = vsel %vm37, %v36, %v34
    %39 = vrot.lane.b32.xlu0 %v38, 88
    %v40 = vpop.permute.xlu0 %39
    %vm41 = vcmask 261120
    %s42 = scalar_lea.vmem [#allocation0], 16
    %43 = vst.msk [vmem:[%s42] sm:$0x1] %vm41, %v40
    %vm44 = vcmask 1048256
    %s45 = scalar_lea.vmem [#allocation0], 8
    %46 = vst.msk [vmem:[%s45] sm:$0x1] %vm44, %v40
    %s47 = scalar_lea.vmem %s0, 1
    %v48 = vld [vmem:[%s47] sm:$0x1]
    %s49 = scalar_lea.vmem %s0, 1
    %v50 = vld [vmem:[%s49] sm:$0x1]
    %vm51 = vcmask 457728
    %v52 = vsel %vm51, %v50, %v48
    %53 = vrot.lane.b32.xlu0 %v52, 72
    %v54 = vpop.permute.xlu0 %53
    %vm55 = vcmask 130048
    %s56 = scalar_lea.vmem [#allocation0], 8
    %57 = vst.msk [vmem:[%s56] sm:$0x1] %vm55, %v54
    %vm58 = vcmask 1048128
    %59 = vst.msk [vmem:[#allocation0] sm:$0x1] %vm58, %v54
    %s60 = scalar_lea.vmem %s0, 8
    %v61 = vld [vmem:[%s60] sm:$0x1]
    %s62 = scalar_lea.vmem %s0, 8
    %v63 = vld [vmem:[%s62] sm:$0x1]
    %vm64 = vcmask 523264
    %v65 = vsel %vm64, %v63, %v61
    %66 = vrot.lane.b32.xlu0 %v65, 64
    %v67 = vpop.permute.xlu0 %66
    %vm68 = vcmask 64512
    %s69 = scalar_lea.vmem [#allocation0], 40
    %70 = vst.msk [vmem:[%s69] sm:$0x1] %vm68, %v67
    %vm71 = vcmask 1048064
    %s72 = scalar_lea.vmem [#allocation0], 32
    %73 = vst.msk [vmem:[%s72] sm:$0x1] %vm71, %v67
    %s74 = scalar_lea.vmem %s0, 6
    %v75 = vld [vmem:[%s74] sm:$0x1]
    %76 = vrot.lane.b32.xlu0 %v75, 48
    %v77 = vpop.permute.xlu0 %76
    %vm78 = vcmask 982400
    %s79 = scalar_lea.vmem [#allocation0], 24
    %80 = vst.msk [vmem:[%s79] sm:$0x1] %vm78, %v77
    %s81 = scalar_lea.vmem %s0, 4
    %v82 = vld [vmem:[%s81] sm:$0x1]
    %83 = vrot.lane.b32.xlu0 %v82, 32
    %v84 = vpop.permute.xlu0 %83
    %vm85 = vcmask 851200
    %s86 = scalar_lea.vmem [#allocation0], 16
    %87 = vst.msk [vmem:[%s86] sm:$0x1] %vm85, %v84
    %s88 = scalar_lea.vmem %s0, 2
    %v89 = vld [vmem:[%s88] sm:$0x1]
    %90 = vrot.lane.b32.xlu0 %v89, 16
    %v91 = vpop.permute.xlu0 %90
    %vm92 = vcmask 720000
    %s93 = scalar_lea.vmem [#allocation0], 8
    %94 = vst.msk [vmem:[%s93] sm:$0x1] %vm92, %v91
    %s96 = sshll.u32 1, 1
    %s97 = ssub.s32 %s96, 1
    %v99 = vld [vmem:[#allocation0] sm:%s97]
    %s100 = sshll.u32 1, 1
    %s101 = ssub.s32 %s100, 1
    %102 = vst [vmem:[%s1] sm:%s101] %v99
    %s103 = scalar_lea.vmem [#allocation0], 8
    %v104 = vld [vmem:[%s103] sm:%s97]
    %s105 = sshll.u32 1, 1
    %s106 = ssub.s32 %s105, 1
    %s107 = scalar_lea.vmem %s1, 1
    %108 = vst [vmem:[%s107] sm:%s106] %v104
    %s109 = scalar_lea.vmem [#allocation0], 16
    %v110 = vld [vmem:[%s109] sm:%s97]
    %s111 = sshll.u32 1, 1
    %s112 = ssub.s32 %s111, 1
    %s113 = smul.addr 1, 2
    %s114 = scalar_lea.vmem %s1, %s113
    %115 = vst [vmem:[%s114] sm:%s112] %v110
    %s116 = scalar_lea.vmem [#allocation0], 24
    %v117 = vld [vmem:[%s116] sm:%s97]
    %s118 = sshll.u32 1, 1
    %s119 = ssub.s32 %s118, 1
    %s120 = smul.addr 1, 3
    %s121 = scalar_lea.vmem %s1, %s120
    %122 = vst [vmem:[%s121] sm:%s119] %v117
    %s123 = scalar_lea.vmem [#allocation0], 32
    %v124 = vld [vmem:[%s123] sm:%s97]
    %s125 = sshll.u32 1, 1
    %s126 = ssub.s32 %s125, 1
    %s127 = smul.addr 1, 4
    %s128 = scalar_lea.vmem %s1, %s127
    %129 = vst [vmem:[%s128] sm:%s126] %v124
    %s130 = scalar_lea.vmem [#allocation0], 40
    %v131 = vld [vmem:[%s130] sm:%s97]
    %s132 = sshll.u32 1, 1
    %s133 = ssub.s32 %s132, 1
    %s134 = smul.addr 1, 5
    %s135 = scalar_lea.vmem %s1, %s134
    %136 = vst [vmem:[%s135] sm:%s133] %v131

// kernel: _lambda_.13
$region0: #{_lambda_.13}
  #allocation0 [shape = 'u32[]', space=smem, size = 0x4, offset = 0x4, fixed_abs, tag = 'smem constant byte address 0x4 - core index']
  #allocation1 [shape = 'u32[144,128]{1,0:T(1,128)}', space=vmem, size = 0x12000, scoped, tag = 'internal scratch']
  %s0 = inlined_call_operand.vmem [shape: f32[128,648], index: 0, kind: input, shape index: {}]
  %s1 = inlined_call_operand.vmem [shape: f32[648,8], index: 1, kind: input, shape index: {}]
  %s2 = inlined_call_operand.vmem [shape: f32[1,648], index: 2, kind: input, shape index: {}]
  %s3 = inlined_call_operand.vmem [shape: f32[1,648], index: 3, kind: input, shape index: {}]
  %s4 = inlined_call_operand.vmem [shape: f32[128,8], index: 4, kind: output, shape index: {}]
  %s5 = sld [smem:[#allocation0]]
  $region26: #{_lambda_.13} parent=0
    _
  %s7 = ssub.s32 1, %s5
  %s8 = scalar_select 0, %s7, %s5
  // Predicated region
  $region2: #{_lambda_.13} parent=0 // pred_check
    _
  $region3: #{_lambda_.13} parent=0 // pred_check_branch
    %10 = sbr.rel (0) target = $region5
  $region4: #{_lambda_.13} parent=0 // pred_region
    _
  $region5: #{_lambda_.13} parent=0 // pred_fallthru
    _
  // Predicated region
  $region6: #{_lambda_.13} parent=0 // pred_check
    _
  $region7: #{_lambda_.13} parent=0 // pred_check_branch
    %12 = sbr.rel (0) target = $region9
  $region8: #{_lambda_.13} parent=0 // pred_region
    _
  $region9: #{_lambda_.13} parent=0 // pred_fallthru
    _
  // Predicated region
  $region10: #{_lambda_.13} parent=0 // pred_check
    _
  $region11: #{_lambda_.13} parent=0 // pred_check_branch
    %14 = sbr.rel (0) target = $region13
  $region12: #{_lambda_.13} parent=0 // pred_region
    _
  $region13: #{_lambda_.13} parent=0 // pred_fallthru
    _
  // Predicated region
  $region14: #{_lambda_.13} parent=0 // pred_check
    _
  $region15: #{_lambda_.13} parent=0 // pred_check_branch
    %16 = sbr.rel (0) target = $region17
  $region16: #{_lambda_.13} parent=0 // pred_region
    _
  $region17: #{_lambda_.13} parent=0 // pred_fallthru
    _
  %v17 = vld [vmem:[%s0] sm:$0xff]
  %v18 = vld [vmem:[%s0 + $0x8] sm:$0xff]
  %v19 = vld [vmem:[%s0 + $0x10] sm:$0xff]
  %v20 = vld [vmem:[%s0 + $0x18] sm:$0xff]
  %v21 = vld [vmem:[%s0 + $0x20] sm:$0xff]
  %v22 = vld [vmem:[%s0 + $0x28] sm:$0xff]
  %v23 = vld [vmem:[%s0 + $0x30] sm:$0xff]
  %v24 = vld [vmem:[%s0 + $0x38] sm:$0xff]
  %v25 = vld [vmem:[%s0 + $0x40] sm:$0xff]
  %v26 = vld [vmem:[%s0 + $0x48] sm:$0xff]
  %v27 = vld [vmem:[%s0 + $0x50] sm:$0xff]
  %v28 = vld [vmem:[%s0 + $0x58] sm:$0xff]
  %v29 = vld [vmem:[%s0 + $0x60] sm:$0xff]
  %v30 = vld [vmem:[%s0 + $0x68] sm:$0xff]
  %v31 = vld [vmem:[%s0 + $0x70] sm:$0xff]
  %v32 = vld [vmem:[%s0 + $0x78] sm:$0xff]
  %v33 = vld [vmem:[%s0 + $0x80] sm:$0xff]
  %v34 = vld [vmem:[%s0 + $0x88] sm:$0xff]
  %v35 = vld [vmem:[%s0 + $0x90] sm:$0xff]
  %v36 = vld [vmem:[%s0 + $0x98] sm:$0xff]
  %v37 = vld [vmem:[%s0 + $0xa0] sm:$0xff]
  %v38 = vld [vmem:[%s0 + $0xa8] sm:$0xff]
  %v39 = vld [vmem:[%s0 + $0xb0] sm:$0xff]
  %v40 = vld [vmem:[%s0 + $0xb8] sm:$0xff]
  %v41 = vld [vmem:[%s0 + $0xc0] sm:$0xff]
  %v42 = vld [vmem:[%s0 + $0xc8] sm:$0xff]
  %v43 = vld [vmem:[%s0 + $0xd0] sm:$0xff]
  %v44 = vld [vmem:[%s0 + $0xd8] sm:$0xff]
  %v45 = vld [vmem:[%s0 + $0xe0] sm:$0xff]
  %v46 = vld [vmem:[%s0 + $0xe8] sm:$0xff]
  %v47 = vld [vmem:[%s0 + $0xf0] sm:$0xff]
  %v48 = vld [vmem:[%s0 + $0xf8] sm:$0xff]
  %v49 = vld [vmem:[%s0 + $0x100] sm:$0xff]
  %v50 = vld [vmem:[%s0 + $0x108] sm:$0xff]
  %v51 = vld [vmem:[%s0 + $0x110] sm:$0xff]
  %v52 = vld [vmem:[%s0 + $0x118] sm:$0xff]
  %v53 = vld [vmem:[%s0 + $0x120] sm:$0xff]
  %v54 = vld [vmem:[%s0 + $0x128] sm:$0xff]
  %v55 = vld [vmem:[%s0 + $0x130] sm:$0xff]
  %v56 = vld [vmem:[%s0 + $0x138] sm:$0xff]
  %v57 = vld [vmem:[%s0 + $0x140] sm:$0xff]
  %v58 = vld [vmem:[%s0 + $0x148] sm:$0xff]
  %v59 = vld [vmem:[%s0 + $0x150] sm:$0xff]
  %v60 = vld [vmem:[%s0 + $0x158] sm:$0xff]
  %v61 = vld [vmem:[%s0 + $0x160] sm:$0xff]
  %v62 = vld [vmem:[%s0 + $0x168] sm:$0xff]
  %v63 = vld [vmem:[%s0 + $0x170] sm:$0xff]
  %v64 = vld [vmem:[%s0 + $0x178] sm:$0xff]
  %v65 = vld [vmem:[%s0 + $0x180] sm:$0xff]
  %v66 = vld [vmem:[%s0 + $0x188] sm:$0xff]
  %v67 = vld [vmem:[%s0 + $0x190] sm:$0xff]
  %v68 = vld [vmem:[%s0 + $0x198] sm:$0xff]
  %v69 = vld [vmem:[%s0 + $0x1a0] sm:$0xff]
  %v70 = vld [vmem:[%s0 + $0x1a8] sm:$0xff]
  %v71 = vld [vmem:[%s0 + $0x1b0] sm:$0xff]
  %v72 = vld [vmem:[%s0 + $0x1b8] sm:$0xff]
  %v73 = vld [vmem:[%s0 + $0x1c0] sm:$0xff]
  %v74 = vld [vmem:[%s0 + $0x1c8] sm:$0xff]
  %v75 = vld [vmem:[%s0 + $0x1d0] sm:$0xff]
  %v76 = vld [vmem:[%s0 + $0x1d8] sm:$0xff]
  %v77 = vld [vmem:[%s0 + $0x1e0] sm:$0xff]
  %v78 = vld [vmem:[%s0 + $0x1e8] sm:$0xff]
  %v79 = vld [vmem:[%s0 + $0x1f0] sm:$0xff]
  %v80 = vld [vmem:[%s0 + $0x1f8] sm:$0xff]
  %v81 = vld [vmem:[%s0 + $0x200] sm:$0xff]
  %v82 = vld [vmem:[%s0 + $0x208] sm:$0xff]
  %v83 = vld [vmem:[%s0 + $0x210] sm:$0xff]
  %v84 = vld [vmem:[%s0 + $0x218] sm:$0xff]
  %v85 = vld [vmem:[%s0 + $0x220] sm:$0xff]
  %v86 = vld [vmem:[%s0 + $0x228] sm:$0xff]
  %v87 = vld [vmem:[%s0 + $0x230] sm:$0xff]
  %v88 = vld [vmem:[%s0 + $0x238] sm:$0xff]
  %v89 = vld [vmem:[%s0 + $0x240] sm:$0xff]
  %v90 = vld [vmem:[%s0 + $0x248] sm:$0xff]
  %v91 = vld [vmem:[%s0 + $0x250] sm:$0xff]
  %v92 = vld [vmem:[%s0 + $0x258] sm:$0xff]
  %v93 = vld [vmem:[%s0 + $0x260] sm:$0xff]
  %v94 = vld [vmem:[%s0 + $0x268] sm:$0xff]
  %v95 = vld [vmem:[%s0 + $0x270] sm:$0xff]
  %v96 = vld [vmem:[%s0 + $0x278] sm:$0xff]
  %v97 = vld [vmem:[%s0 + $0x280] sm:$0xff]
  %v98 = vld [vmem:[%s0 + $0x288] sm:$0xff]
  %v99 = vld [vmem:[%s0 + $0x290] sm:$0xff]
  %v100 = vld [vmem:[%s0 + $0x298] sm:$0xff]
  %v101 = vld [vmem:[%s0 + $0x2a0] sm:$0xff]
  %v102 = vld [vmem:[%s0 + $0x2a8] sm:$0xff]
  %v103 = vld [vmem:[%s0 + $0x2b0] sm:$0xff]
  %v104 = vld [vmem:[%s0 + $0x2b8] sm:$0xff]
  %v105 = vld [vmem:[%s0 + $0x2c0] sm:$0xff]
  %v106 = vld [vmem:[%s0 + $0x2c8] sm:$0xff]
  %v107 = vld [vmem:[%s0 + $0x2d0] sm:$0xff]
  %v108 = vld [vmem:[%s0 + $0x2d8] sm:$0xff]
  %v109 = vld [vmem:[%s0 + $0x2e0] sm:$0xff]
  %v110 = vld [vmem:[%s0 + $0x2e8] sm:$0xff]
  %v111 = vld [vmem:[%s0 + $0x2f0] sm:$0xff]
  %v112 = vld [vmem:[%s0 + $0x2f8] sm:$0xff]
  %v113 = vld [vmem:[%s2] sm:$0x3f]
  %v115 = vlaneseq
  %v116 = vshrl.u32 %v115, 7
  %v117 = vsub.s32 0, %v116
  %v118 = vrot.slane %v113, %v117
  %v119 = vlaneseq
  %v120 = vshrl.u32 %v119, 7
  %v121 = vsub.s32 1, %v120
  %v122 = vrot.slane %v113, %v121
  %v123 = vlaneseq
  %v124 = vshrl.u32 %v123, 7
  %v125 = vsub.s32 2, %v124
  %v126 = vrot.slane %v113, %v125
  %v127 = vlaneseq
  %v128 = vshrl.u32 %v127, 7
  %v129 = vsub.s32 3, %v128
  %v130 = vrot.slane %v113, %v129
  %v131 = vlaneseq
  %v132 = vshrl.u32 %v131, 7
  %v133 = vsub.s32 4, %v132
  %v134 = vrot.slane %v113, %v133
  %v135 = vlaneseq
  %v136 = vshrl.u32 %v135, 7
  %v137 = vsub.s32 5, %v136
  %v138 = vrot.slane %v113, %v137
  %v145 = vmul.f32 %v17, %v118
  %v146 = vmul.f32 %v18, %v122
  %v147 = vmul.f32 %v19, %v126
  %v148 = vmul.f32 %v20, %v130
  %v149 = vmul.f32 %v21, %v134
  %v150 = vmul.f32 %v22, %v138
  %v151 = vmul.f32 %v23, %v118
  %v152 = vmul.f32 %v24, %v122
  %v153 = vmul.f32 %v25, %v126
  %v154 = vmul.f32 %v26, %v130
  %v155 = vmul.f32 %v27, %v134
  %v156 = vmul.f32 %v28, %v138
  %v157 = vmul.f32 %v29, %v118
  %v158 = vmul.f32 %v30, %v122
  %v159 = vmul.f32 %v31, %v126
  %v160 = vmul.f32 %v32, %v130
  %v161 = vmul.f32 %v33, %v134
  %v162 = vmul.f32 %v34, %v138
  %v163 = vmul.f32 %v35, %v118
  %v164 = vmul.f32 %v36, %v122
  %v165 = vmul.f32 %v37, %v126
  %v166 = vmul.f32 %v38, %v130
  %v167 = vmul.f32 %v39, %v134
  %v168 = vmul.f32 %v40, %v138
  %v169 = vmul.f32 %v41, %v118
  %v170 = vmul.f32 %v42, %v122
  %v171 = vmul.f32 %v43, %v126
  %v172 = vmul.f32 %v44, %v130
  %v173 = vmul.f32 %v45, %v134
  %v174 = vmul.f32 %v46, %v138
  %v175 = vmul.f32 %v47, %v118
  %v176 = vmul.f32 %v48, %v122
  %v177 = vmul.f32 %v49, %v126
  %v178 = vmul.f32 %v50, %v130
  %v179 = vmul.f32 %v51, %v134
  %v180 = vmul.f32 %v52, %v138
  %v181 = vmul.f32 %v53, %v118
  %v182 = vmul.f32 %v54, %v122
  %v183 = vmul.f32 %v55, %v126
  %v184 = vmul.f32 %v56, %v130
  %v185 = vmul.f32 %v57, %v134
  %v186 = vmul.f32 %v58, %v138
  %v187 = vmul.f32 %v59, %v118
  %v188 = vmul.f32 %v60, %v122
  %v189 = vmul.f32 %v61, %v126
  %v190 = vmul.f32 %v62, %v130
  %v191 = vmul.f32 %v63, %v134
  %v192 = vmul.f32 %v64, %v138
  %v193 = vmul.f32 %v65, %v118
  %v194 = vmul.f32 %v66, %v122
  %v195 = vmul.f32 %v67, %v126
  %v196 = vmul.f32 %v68, %v130
  %v197 = vmul.f32 %v69, %v134
  %v198 = vmul.f32 %v70, %v138
  %v199 = vmul.f32 %v71, %v118
  %v200 = vmul.f32 %v72, %v122
  %v201 = vmul.f32 %v73, %v126
  %v202 = vmul.f32 %v74, %v130
  %v203 = vmul.f32 %v75, %v134
  %v204 = vmul.f32 %v76, %v138
  %v205 = vmul.f32 %v77, %v118
  %v206 = vmul.f32 %v78, %v122
  %v207 = vmul.f32 %v79, %v126
  %v208 = vmul.f32 %v80, %v130
  %v209 = vmul.f32 %v81, %v134
  %v210 = vmul.f32 %v82, %v138
  %v211 = vmul.f32 %v83, %v118
  %v212 = vmul.f32 %v84, %v122
  %v213 = vmul.f32 %v85, %v126
  %v214 = vmul.f32 %v86, %v130
  %v215 = vmul.f32 %v87, %v134
  %v216 = vmul.f32 %v88, %v138
  %v217 = vmul.f32 %v89, %v118
  %v218 = vmul.f32 %v90, %v122
  %v219 = vmul.f32 %v91, %v126
  %v220 = vmul.f32 %v92, %v130
  %v221 = vmul.f32 %v93, %v134
  %v222 = vmul.f32 %v94, %v138
  %v223 = vmul.f32 %v95, %v118
  %v224 = vmul.f32 %v96, %v122
  %v225 = vmul.f32 %v97, %v126
  %v226 = vmul.f32 %v98, %v130
  %v227 = vmul.f32 %v99, %v134
  %v228 = vmul.f32 %v100, %v138
  %v229 = vmul.f32 %v101, %v118
  %v230 = vmul.f32 %v102, %v122
  %v231 = vmul.f32 %v103, %v126
  %v232 = vmul.f32 %v104, %v130
  %v233 = vmul.f32 %v105, %v134
  %v234 = vmul.f32 %v106, %v138
  %v235 = vmul.f32 %v107, %v118
  %v236 = vmul.f32 %v108, %v122
  %v237 = vmul.f32 %v109, %v126
  %v238 = vmul.f32 %v110, %v130
  %v239 = vmul.f32 %v111, %v134
  %v240 = vmul.f32 %v112, %v138
  %v241 = vld [vmem:[%s3] sm:$0x3f]
  %v243 = vlaneseq
  %v244 = vshrl.u32 %v243, 7
  %v245 = vsub.s32 0, %v244
  %v246 = vrot.slane %v241, %v245
  %v247 = vlaneseq
  %v248 = vshrl.u32 %v247, 7
  %v249 = vsub.s32 1, %v248
  %v250 = vrot.slane %v241, %v249
  %v251 = vlaneseq
  %v252 = vshrl.u32 %v251, 7
  %v253 = vsub.s32 2, %v252
  %v254 = vrot.slane %v241, %v253
  %v255 = vlaneseq
  %v256 = vshrl.u32 %v255, 7
  %v257 = vsub.s32 3, %v256
  %v258 = vrot.slane %v241, %v257
  %v259 = vlaneseq
  %v260 = vshrl.u32 %v259, 7
  %v261 = vsub.s32 4, %v260
  %v262 = vrot.slane %v241, %v261
  %v263 = vlaneseq
  %v264 = vshrl.u32 %v263, 7
  %v265 = vsub.s32 5, %v264
  %v266 = vrot.slane %v241, %v265
  %v273 = vadd.f32 %v145, %v246
  %v274 = vadd.f32 %v146, %v250
  %v275 = vadd.f32 %v147, %v254
  %v276 = vadd.f32 %v148, %v258
  %v277 = vadd.f32 %v149, %v262
  %v278 = vadd.f32 %v150, %v266
  %v279 = vadd.f32 %v151, %v246
  %v280 = vadd.f32 %v152, %v250
  %v281 = vadd.f32 %v153, %v254
  %v282 = vadd.f32 %v154, %v258
  %v283 = vadd.f32 %v155, %v262
  %v284 = vadd.f32 %v156, %v266
  %v285 = vadd.f32 %v157, %v246
  %v286 = vadd.f32 %v158, %v250
  %v287 = vadd.f32 %v159, %v254
  %v288 = vadd.f32 %v160, %v258
  %v289 = vadd.f32 %v161, %v262
  %v290 = vadd.f32 %v162, %v266
  %v291 = vadd.f32 %v163, %v246
  %v292 = vadd.f32 %v164, %v250
  %v293 = vadd.f32 %v165, %v254
  %v294 = vadd.f32 %v166, %v258
  %v295 = vadd.f32 %v167, %v262
  %v296 = vadd.f32 %v168, %v266
  %v297 = vadd.f32 %v169, %v246
  %v298 = vadd.f32 %v170, %v250
  %v299 = vadd.f32 %v171, %v254
  %v300 = vadd.f32 %v172, %v258
  %v301 = vadd.f32 %v173, %v262
  %v302 = vadd.f32 %v174, %v266
  %v303 = vadd.f32 %v175, %v246
  %v304 = vadd.f32 %v176, %v250
  %v305 = vadd.f32 %v177, %v254
  %v306 = vadd.f32 %v178, %v258
  %v307 = vadd.f32 %v179, %v262
  %v308 = vadd.f32 %v180, %v266
  %v309 = vadd.f32 %v181, %v246
  %v310 = vadd.f32 %v182, %v250
  %v311 = vadd.f32 %v183, %v254
  %v312 = vadd.f32 %v184, %v258
  %v313 = vadd.f32 %v185, %v262
  %v314 = vadd.f32 %v186, %v266
  %v315 = vadd.f32 %v187, %v246
  %v316 = vadd.f32 %v188, %v250
  %v317 = vadd.f32 %v189, %v254
  %v318 = vadd.f32 %v190, %v258
  %v319 = vadd.f32 %v191, %v262
  %v320 = vadd.f32 %v192, %v266
  %v321 = vadd.f32 %v193, %v246
  %v322 = vadd.f32 %v194, %v250
  %v323 = vadd.f32 %v195, %v254
  %v324 = vadd.f32 %v196, %v258
  %v325 = vadd.f32 %v197, %v262
  %v326 = vadd.f32 %v198, %v266
  %v327 = vadd.f32 %v199, %v246
  %v328 = vadd.f32 %v200, %v250
  %v329 = vadd.f32 %v201, %v254
  %v330 = vadd.f32 %v202, %v258
  %v331 = vadd.f32 %v203, %v262
  %v332 = vadd.f32 %v204, %v266
  %v333 = vadd.f32 %v205, %v246
  %v334 = vadd.f32 %v206, %v250
  %v335 = vadd.f32 %v207, %v254
  %v336 = vadd.f32 %v208, %v258
  %v337 = vadd.f32 %v209, %v262
  %v338 = vadd.f32 %v210, %v266
  %v339 = vadd.f32 %v211, %v246
  %v340 = vadd.f32 %v212, %v250
  %v341 = vadd.f32 %v213, %v254
  %v342 = vadd.f32 %v214, %v258
  %v343 = vadd.f32 %v215, %v262
  %v344 = vadd.f32 %v216, %v266
  %v345 = vadd.f32 %v217, %v246
  %v346 = vadd.f32 %v218, %v250
  %v347 = vadd.f32 %v219, %v254
  %v348 = vadd.f32 %v220, %v258
  %v349 = vadd.f32 %v221, %v262
  %v350 = vadd.f32 %v222, %v266
  %v351 = vadd.f32 %v223, %v246
  %v352 = vadd.f32 %v224, %v250
  %v353 = vadd.f32 %v225, %v254
  %v354 = vadd.f32 %v226, %v258
  %v355 = vadd.f32 %v227, %v262
  %v356 = vadd.f32 %v228, %v266
  %v357 = vadd.f32 %v229, %v246
  %v358 = vadd.f32 %v230, %v250
  %v359 = vadd.f32 %v231, %v254
  %v360 = vadd.f32 %v232, %v258
  %v361 = vadd.f32 %v233, %v262
  %v362 = vadd.f32 %v234, %v266
  %v363 = vadd.f32 %v235, %v246
  %v364 = vadd.f32 %v236, %v250
  %v365 = vadd.f32 %v237, %v254
  %v366 = vadd.f32 %v238, %v258
  %v367 = vadd.f32 %v239, %v262
  %v368 = vadd.f32 %v240, %v266
  %v369 = vmax.f32 %v273, 0.0
  %v370 = vmax.f32 %v274, 0.0
  %v371 = vmax.f32 %v275, 0.0
  %v372 = vmax.f32 %v276, 0.0
  %v373 = vmax.f32 %v277, 0.0
  %v374 = vmax.f32 %v278, 0.0
  %v375 = vmax.f32 %v279, 0.0
  %v376 = vmax.f32 %v280, 0.0
  %v377 = vmax.f32 %v281, 0.0
  %v378 = vmax.f32 %v282, 0.0
  %v379 = vmax.f32 %v283, 0.0
  %v380 = vmax.f32 %v284, 0.0
  %v381 = vmax.f32 %v285, 0.0
  %v382 = vmax.f32 %v286, 0.0
  %v383 = vmax.f32 %v287, 0.0
  %v384 = vmax.f32 %v288, 0.0
  %v385 = vmax.f32 %v289, 0.0
  %v386 = vmax.f32 %v290, 0.0
  %v387 = vmax.f32 %v291, 0.0
  %v388 = vmax.f32 %v292, 0.0
  %v389 = vmax.f32 %v293, 0.0
  %v390 = vmax.f32 %v294, 0.0
  %v391 = vmax.f32 %v295, 0.0
  %v392 = vmax.f32 %v296, 0.0
  %v393 = vmax.f32 %v297, 0.0
  %v394 = vmax.f32 %v298, 0.0
  %v395 = vmax.f32 %v299, 0.0
  %v396 = vmax.f32 %v300, 0.0
  %v397 = vmax.f32 %v301, 0.0
  %v398 = vmax.f32 %v302, 0.0
  %v399 = vmax.f32 %v303, 0.0
  %v400 = vmax.f32 %v304, 0.0
  %v401 = vmax.f32 %v305, 0.0
  %v402 = vmax.f32 %v306, 0.0
  %v403 = vmax.f32 %v307, 0.0
  %v404 = vmax.f32 %v308, 0.0
  %v405 = vmax.f32 %v309, 0.0
  %v406 = vmax.f32 %v310, 0.0
  %v407 = vmax.f32 %v311, 0.0
  %v408 = vmax.f32 %v312, 0.0
  %v409 = vmax.f32 %v313, 0.0
  %v410 = vmax.f32 %v314, 0.0
  %v411 = vmax.f32 %v315, 0.0
  %v412 = vmax.f32 %v316, 0.0
  %v413 = vmax.f32 %v317, 0.0
  %v414 = vmax.f32 %v318, 0.0
  %v415 = vmax.f32 %v319, 0.0
  %v416 = vmax.f32 %v320, 0.0
  %v417 = vmax.f32 %v321, 0.0
  %v418 = vmax.f32 %v322, 0.0
  %v419 = vmax.f32 %v323, 0.0
  %v420 = vmax.f32 %v324, 0.0
  %v421 = vmax.f32 %v325, 0.0
  %v422 = vmax.f32 %v326, 0.0
  %v423 = vmax.f32 %v327, 0.0
  %v424 = vmax.f32 %v328, 0.0
  %v425 = vmax.f32 %v329, 0.0
  %v426 = vmax.f32 %v330, 0.0
  %v427 = vmax.f32 %v331, 0.0
  %v428 = vmax.f32 %v332, 0.0
  %v429 = vmax.f32 %v333, 0.0
  %v430 = vmax.f32 %v334, 0.0
  %v431 = vmax.f32 %v335, 0.0
  %v432 = vmax.f32 %v336, 0.0
  %v433 = vmax.f32 %v337, 0.0
  %v434 = vmax.f32 %v338, 0.0
  %v435 = vmax.f32 %v339, 0.0
  %v436 = vmax.f32 %v340, 0.0
  %v437 = vmax.f32 %v341, 0.0
  %v438 = vmax.f32 %v342, 0.0
  %v439 = vmax.f32 %v343, 0.0
  %v440 = vmax.f32 %v344, 0.0
  %v441 = vmax.f32 %v345, 0.0
  %v442 = vmax.f32 %v346, 0.0
  %v443 = vmax.f32 %v347, 0.0
  %v444 = vmax.f32 %v348, 0.0
  %v445 = vmax.f32 %v349, 0.0
  %v446 = vmax.f32 %v350, 0.0
  %v447 = vmax.f32 %v351, 0.0
  %v448 = vmax.f32 %v352, 0.0
  %v449 = vmax.f32 %v353, 0.0
  %v450 = vmax.f32 %v354, 0.0
  %v451 = vmax.f32 %v355, 0.0
  %v452 = vmax.f32 %v356, 0.0
  %v453 = vmax.f32 %v357, 0.0
  %v454 = vmax.f32 %v358, 0.0
  %v455 = vmax.f32 %v359, 0.0
  %v456 = vmax.f32 %v360, 0.0
  %v457 = vmax.f32 %v361, 0.0
  %v458 = vmax.f32 %v362, 0.0
  %v459 = vmax.f32 %v363, 0.0
  %v460 = vmax.f32 %v364, 0.0
  %v461 = vmax.f32 %v365, 0.0
  %v462 = vmax.f32 %v366, 0.0
  %v463 = vmax.f32 %v367, 0.0
  %v464 = vmax.f32 %v368, 0.0
  %v465 = vld [vmem:[%s1] sm:$0xff]
  %v466 = vld [vmem:[%s1 + $0x8] sm:$0xff]
  %v467 = vld [vmem:[%s1 + $0x10] sm:$0xff]
  %v468 = vld [vmem:[%s1 + $0x18] sm:$0xff]
  %v469 = vld [vmem:[%s1 + $0x20] sm:$0xff]
  %v470 = vld [vmem:[%s1 + $0x28] sm:$0xff]
  %v471 = vld [vmem:[%s1 + $0x30] sm:$0xff]
  %v472 = vld [vmem:[%s1 + $0x38] sm:$0xff]
  %v473 = vld [vmem:[%s1 + $0x40] sm:$0xff]
  %v474 = vld [vmem:[%s1 + $0x48] sm:$0xff]
  %v475 = vld [vmem:[%s1 + $0x50] sm:$0xff]
  %v476 = vld [vmem:[%s1 + $0x58] sm:$0xff]
  %v477 = vld [vmem:[%s1 + $0x60] sm:$0xff]
  %v478 = vld [vmem:[%s1 + $0x68] sm:$0xff]
  %v479 = vld [vmem:[%s1 + $0x70] sm:$0xff]
  %v480 = vld [vmem:[%s1 + $0x78] sm:$0xff]
  %v481 = vld [vmem:[%s1 + $0x80] sm:$0xff]
  %v482 = vld [vmem:[%s1 + $0x88] sm:$0xff]
  %v483 = vld [vmem:[%s1 + $0x90] sm:$0xff]
  %v484 = vld [vmem:[%s1 + $0x98] sm:$0xff]
  %v485 = vld [vmem:[%s1 + $0xa0] sm:$0xff]
  %v486 = vld [vmem:[%s1 + $0xa8] sm:$0xff]
  %v487 = vld [vmem:[%s1 + $0xb0] sm:$0xff]
  %v488 = vld [vmem:[%s1 + $0xb8] sm:$0xff]
  %v489 = vld [vmem:[%s1 + $0xc0] sm:$0xff]
  %v490 = vld [vmem:[%s1 + $0xc8] sm:$0xff]
  %v491 = vld [vmem:[%s1 + $0xd0] sm:$0xff]
  %v492 = vld [vmem:[%s1 + $0xd8] sm:$0xff]
  %v493 = vld [vmem:[%s1 + $0xe0] sm:$0xff]
  %v494 = vld [vmem:[%s1 + $0xe8] sm:$0xff]
  %v495 = vld [vmem:[%s1 + $0xf0] sm:$0xff]
  %v496 = vld [vmem:[%s1 + $0xf8] sm:$0xff]
  %v497 = vld [vmem:[%s1 + $0x100] sm:$0xff]
  %v498 = vld [vmem:[%s1 + $0x108] sm:$0xff]
  %v499 = vld [vmem:[%s1 + $0x110] sm:$0xff]
  %v500 = vld [vmem:[%s1 + $0x118] sm:$0xff]
  %v501 = vld [vmem:[%s1 + $0x120] sm:$0xff]
  %v502 = vld [vmem:[%s1 + $0x128] sm:$0xff]
  %v503 = vld [vmem:[%s1 + $0x130] sm:$0xff]
  %v504 = vld [vmem:[%s1 + $0x138] sm:$0xff]
  %v505 = vld [vmem:[%s1 + $0x140] sm:$0xff]
  %v506 = vld [vmem:[%s1 + $0x148] sm:$0xff]
  %v507 = vld [vmem:[%s1 + $0x150] sm:$0xff]
  %v508 = vld [vmem:[%s1 + $0x158] sm:$0xff]
  %v509 = vld [vmem:[%s1 + $0x160] sm:$0xff]
  %v510 = vld [vmem:[%s1 + $0x168] sm:$0xff]
  %v511 = vld [vmem:[%s1 + $0x170] sm:$0xff]
  %v512 = vld [vmem:[%s1 + $0x178] sm:$0xff]
  %v513 = vld [vmem:[%s1 + $0x180] sm:$0xff]
  %v514 = vld [vmem:[%s1 + $0x188] sm:$0xff]
  %v515 = vld [vmem:[%s1 + $0x190] sm:$0xff]
  %v516 = vld [vmem:[%s1 + $0x198] sm:$0xff]
  %v517 = vld [vmem:[%s1 + $0x1a0] sm:$0xff]
  %v518 = vld [vmem:[%s1 + $0x1a8] sm:$0xff]
  %v519 = vld [vmem:[%s1 + $0x1b0] sm:$0xff]
  %v520 = vld [vmem:[%s1 + $0x1b8] sm:$0xff]
  %v521 = vld [vmem:[%s1 + $0x1c0] sm:$0xff]
  %v522 = vld [vmem:[%s1 + $0x1c8] sm:$0xff]
  %v523 = vld [vmem:[%s1 + $0x1d0] sm:$0xff]
  %v524 = vld [vmem:[%s1 + $0x1d8] sm:$0xff]
  %v525 = vld [vmem:[%s1 + $0x1e0] sm:$0xff]
  %v526 = vld [vmem:[%s1 + $0x1e8] sm:$0xff]
  %v527 = vld [vmem:[%s1 + $0x1f0] sm:$0xff]
  %v528 = vld [vmem:[%s1 + $0x1f8] sm:$0xff]
  %v529 = vld [vmem:[%s1 + $0x200] sm:$0xff]
  %v530 = vld [vmem:[%s1 + $0x208] sm:$0xff]
  %v531 = vld [vmem:[%s1 + $0x210] sm:$0xff]
  %v532 = vld [vmem:[%s1 + $0x218] sm:$0xff]
  %v533 = vld [vmem:[%s1 + $0x220] sm:$0xff]
  %v534 = vld [vmem:[%s1 + $0x228] sm:$0xff]
  %v535 = vld [vmem:[%s1 + $0x230] sm:$0xff]
  %v536 = vld [vmem:[%s1 + $0x238] sm:$0xff]
  %v537 = vld [vmem:[%s1 + $0x240] sm:$0xff]
  %v538 = vld [vmem:[%s1 + $0x248] sm:$0xff]
  %v539 = vld [vmem:[%s1 + $0x250] sm:$0xff]
  %v540 = vld [vmem:[%s1 + $0x258] sm:$0xff]
  %v541 = vld [vmem:[%s1 + $0x260] sm:$0xff]
  %v542 = vld [vmem:[%s1 + $0x268] sm:$0xff]
  %v543 = vld [vmem:[%s1 + $0x270] sm:$0xff]
  %v544 = vld [vmem:[%s1 + $0x278] sm:$0xff]
  %v545 = vld [vmem:[%s1 + $0x280] sm:$0xff]
  %vm546 = vcmask 64512
  %v548 = vsel %vm546, %v374, 0
  %v551 = vsel %vm546, %v380, 0
  %v554 = vsel %vm546, %v386, 0
  %v557 = vsel %vm546, %v392, 0
  %v560 = vsel %vm546, %v398, 0
  %v563 = vsel %vm546, %v404, 0
  %v566 = vsel %vm546, %v410, 0
  %v569 = vsel %vm546, %v416, 0
  %v572 = vsel %vm546, %v422, 0
  %v575 = vsel %vm546, %v428, 0
  %v578 = vsel %vm546, %v434, 0
  %v581 = vsel %vm546, %v440, 0
  %v584 = vsel %vm546, %v446, 0
  %v587 = vsel %vm546, %v452, 0
  %v590 = vsel %vm546, %v458, 0
  %v593 = vsel %vm546, %v464, 0
  %595 = vmatprep.subr.mxu0 0.0
  %596 = vmatpush1.msra.mxu0 %v480
  %597 = vmatprep.subr.mxu0 0.0
  %598 = vmatpush1.msra.mxu0 %v479
  %599 = vmatprep.subr.mxu0 0.0
  %600 = vmatpush1.msra.mxu0 %v478
  %601 = vmatprep.subr.mxu0 0.0
  %602 = vmatpush1.msra.mxu0 %v477
  %603 = vmatprep.subr.mxu0 0.0
  %604 = vmatpush1.msra.mxu0 %v476
  %605 = vmatprep.subr.mxu0 0.0
  %606 = vmatpush1.msra.mxu0 %v475
  %607 = vmatprep.subr.mxu0 0.0
  %608 = vmatpush1.msra.mxu0 %v474
  %609 = vmatprep.subr.mxu0 0.0
  %610 = vmatpush1.msra.mxu0 %v473
  %611 = vmatprep.subr.mxu0 0.0
  %612 = vmatpush1.msra.mxu0 %v472
  %613 = vmatprep.subr.mxu0 0.0
  %614 = vmatpush1.msra.mxu0 %v471
  %615 = vmatprep.subr.mxu0 0.0
  %616 = vmatpush1.msra.mxu0 %v470
  %617 = vmatprep.subr.mxu0 0.0
  %618 = vmatpush1.msra.mxu0 %v469
  %619 = vmatprep.subr.mxu0 0.0
  %620 = vmatpush1.msra.mxu0 %v468
  %621 = vmatprep.subr.mxu0 0.0
  %622 = vmatpush1.msra.mxu0 %v467
  %623 = vmatprep.subr.mxu0 0.0
  %624 = vmatpush1.msra.mxu0 %v466
  %625 = vmatprep.subr.mxu0 0.0
  %626 = vmatpush1.msra.mxu0 %v465
  %627 = vmatprep.subr.mxu0 0.0
  %628 = vmatpush2.msra.mxu0 %v496
  %629 = vmatprep.subr.mxu0 0.0
  %630 = vmatpush2.msra.mxu0 %v495
  %631 = vmatprep.subr.mxu0 0.0
  %632 = vmatpush2.msra.mxu0 %v494
  %633 = vmatprep.subr.mxu0 0.0
  %634 = vmatpush2.msra.mxu0 %v493
  %635 = vmatprep.subr.mxu0 0.0
  %636 = vmatpush2.msra.mxu0 %v492
  %637 = vmatprep.subr.mxu0 0.0
  %638 = vmatpush2.msra.mxu0 %v491
  %639 = vmatprep.subr.mxu0 0.0
  %640 = vmatpush2.msra.mxu0 %v490
  %641 = vmatprep.subr.mxu0 0.0
  %642 = vmatpush2.msra.mxu0 %v489
  %643 = vmatprep.subr.mxu0 0.0
  %644 = vmatpush2.msra.mxu0 %v488
  %645 = vmatprep.subr.mxu0 0.0
  %646 = vmatpush2.msra.mxu0 %v487
  %647 = vmatprep.subr.mxu0 0.0
  %648 = vmatpush2.msra.mxu0 %v486
  %649 = vmatprep.subr.mxu0 0.0
  %650 = vmatpush2.msra.mxu0 %v485
  %651 = vmatprep.subr.mxu0 0.0
  %652 = vmatpush2.msra.mxu0 %v484
  %653 = vmatprep.subr.mxu0 0.0
  %654 = vmatpush2.msra.mxu0 %v483
  %655 = vmatprep.subr.mxu0 0.0
  %656 = vmatpush2.msra.mxu0 %v482
  %657 = vmatprep.subr.mxu0 0.0
  %658 = vmatpush2.msra.mxu0 %v481
  %659 = vmatprep.mubr.f32.mxu0 %v370
  %660 = vmatmul.mubr.f32.gmra.mxu0 %v369
  %v661 = vpop.f32.mrf.mxu0
  %v662 = vadd.f32 0.0, %v661
  %v663 = vpop.f32.mrf.mxu0
  %664 = vmatprep.mubr.f32.mxu0 %v376
  %665 = vmatmul.mubr.f32.gmra.mxu0 %v375
  %v666 = vpop.f32.mrf.mxu0
  %v667 = vadd.f32 0.0, %v666
  %v668 = vpop.f32.mrf.mxu0
  %669 = vmatprep.mubr.f32.mxu0 %v382
  %670 = vmatmul.mubr.f32.gmra.mxu0 %v381
  %v671 = vpop.f32.mrf.mxu0
  %v672 = vadd.f32 0.0, %v671
  %v673 = vpop.f32.mrf.mxu0
  %674 = vmatprep.mubr.f32.mxu0 %v388
  %675 = vmatmul.mubr.f32.gmra.mxu0 %v387
  %v676 = vpop.f32.mrf.mxu0
  %v677 = vadd.f32 0.0, %v676
  %v678 = vpop.f32.mrf.mxu0
  %679 = vmatprep.mubr.f32.mxu0 %v394
  %680 = vmatmul.mubr.f32.gmra.mxu0 %v393
  %v681 = vpop.f32.mrf.mxu0
  %v682 = vadd.f32 0.0, %v681
  %v683 = vpop.f32.mrf.mxu0
  %684 = vmatprep.mubr.f32.mxu0 %v400
  %685 = vmatmul.mubr.f32.gmra.mxu0 %v399
  %v686 = vpop.f32.mrf.mxu0
  %v687 = vadd.f32 0.0, %v686
  %v688 = vpop.f32.mrf.mxu0
  %689 = vmatprep.mubr.f32.mxu0 %v406
  %690 = vmatmul.mubr.f32.gmra.mxu0 %v405
  %v691 = vpop.f32.mrf.mxu0
  %v692 = vadd.f32 0.0, %v691
  %v693 = vpop.f32.mrf.mxu0
  %694 = vmatprep.mubr.f32.mxu0 %v412
  %695 = vmatmul.mubr.f32.gmra.mxu0 %v411
  %v696 = vpop.f32.mrf.mxu0
  %v697 = vadd.f32 0.0, %v696
  %v698 = vpop.f32.mrf.mxu0
  %699 = vmatprep.mubr.f32.mxu0 %v418
  %700 = vmatmul.mubr.f32.gmra.mxu0 %v417
  %v701 = vpop.f32.mrf.mxu0
  %v702 = vadd.f32 0.0, %v701
  %v703 = vpop.f32.mrf.mxu0
  %704 = vmatprep.mubr.f32.mxu0 %v424
  %705 = vmatmul.mubr.f32.gmra.mxu0 %v423
  %v706 = vpop.f32.mrf.mxu0
  %v707 = vadd.f32 0.0, %v706
  %v708 = vpop.f32.mrf.mxu0
  %709 = vmatprep.mubr.f32.mxu0 %v430
  %710 = vmatmul.mubr.f32.gmra.mxu0 %v429
  %v711 = vpop.f32.mrf.mxu0
  %v712 = vadd.f32 0.0, %v711
  %v713 = vpop.f32.mrf.mxu0
  %714 = vmatprep.mubr.f32.mxu0 %v436
  %715 = vmatmul.mubr.f32.gmra.mxu0 %v435
  %v716 = vpop.f32.mrf.mxu0
  %v717 = vadd.f32 0.0, %v716
  %v718 = vpop.f32.mrf.mxu0
  %719 = vmatprep.mubr.f32.mxu0 %v442
  %720 = vmatmul.mubr.f32.gmra.mxu0 %v441
  %v721 = vpop.f32.mrf.mxu0
  %v722 = vadd.f32 0.0, %v721
  %v723 = vpop.f32.mrf.mxu0
  %724 = vmatprep.mubr.f32.mxu0 %v448
  %725 = vmatmul.mubr.f32.gmra.mxu0 %v447
  %v726 = vpop.f32.mrf.mxu0
  %v727 = vadd.f32 0.0, %v726
  %v728 = vpop.f32.mrf.mxu0
  %729 = vmatprep.mubr.f32.mxu0 %v454
  %730 = vmatmul.mubr.f32.gmra.mxu0 %v453
  %v731 = vpop.f32.mrf.mxu0
  %v732 = vadd.f32 0.0, %v731
  %v733 = vpop.f32.mrf.mxu0
  %734 = vmatprep.mubr.f32.mxu0 %v460
  %735 = vmatmul.mubr.f32.gmra.mxu0 %v459
  %v736 = vpop.f32.mrf.mxu0
  %v737 = vadd.f32 0.0, %v736
  %v738 = vpop.f32.mrf.mxu0
  %739 = vdwg.mxu0
  %740 = vmatprep.subr.mxu0 0.0
  %741 = vmatpush1.msra.mxu0 %v512
  %742 = vmatprep.subr.mxu0 0.0
  %743 = vmatpush1.msra.mxu0 %v511
  %744 = vmatprep.subr.mxu0 0.0
  %745 = vmatpush1.msra.mxu0 %v510
  %746 = vmatprep.subr.mxu0 0.0
  %747 = vmatpush1.msra.mxu0 %v509
  %748 = vmatprep.subr.mxu0 0.0
  %749 = vmatpush1.msra.mxu0 %v508
  %750 = vmatprep.subr.mxu0 0.0
  %751 = vmatpush1.msra.mxu0 %v507
  %752 = vmatprep.subr.mxu0 0.0
  %753 = vmatpush1.msra.mxu0 %v506
  %754 = vmatprep.subr.mxu0 0.0
  %755 = vmatpush1.msra.mxu0 %v505
  %756 = vmatprep.subr.mxu0 0.0
  %757 = vmatpush1.msra.mxu0 %v504
  %758 = vmatprep.subr.mxu0 0.0
  %759 = vmatpush1.msra.mxu0 %v503
  %760 = vmatprep.subr.mxu0 0.0
  %761 = vmatpush1.msra.mxu0 %v502
  %762 = vmatprep.subr.mxu0 0.0
  %763 = vmatpush1.msra.mxu0 %v501
  %764 = vmatprep.subr.mxu0 0.0
  %765 = vmatpush1.msra.mxu0 %v500
  %766 = vmatprep.subr.mxu0 0.0
  %767 = vmatpush1.msra.mxu0 %v499
  %768 = vmatprep.subr.mxu0 0.0
  %769 = vmatpush1.msra.mxu0 %v498
  %770 = vmatprep.subr.mxu0 0.0
  %771 = vmatpush1.msra.mxu0 %v497
  %772 = vmatprep.subr.mxu0 0.0
  %773 = vmatpush2.msra.mxu0 %v528
  %774 = vmatprep.subr.mxu0 0.0
  %775 = vmatpush2.msra.mxu0 %v527
  %776 = vmatprep.subr.mxu0 0.0
  %777 = vmatpush2.msra.mxu0 %v526
  %778 = vmatprep.subr.mxu0 0.0
  %779 = vmatpush2.msra.mxu0 %v525
  %780 = vmatprep.subr.mxu0 0.0
  %781 = vmatpush2.msra.mxu0 %v524
  %782 = vmatprep.subr.mxu0 0.0
  %783 = vmatpush2.msra.mxu0 %v523
  %784 = vmatprep.subr.mxu0 0.0
  %785 = vmatpush2.msra.mxu0 %v522
  %786 = vmatprep.subr.mxu0 0.0
  %787 = vmatpush2.msra.mxu0 %v521
  %788 = vmatprep.subr.mxu0 0.0
  %789 = vmatpush2.msra.mxu0 %v520
  %790 = vmatprep.subr.mxu0 0.0
  %791 = vmatpush2.msra.mxu0 %v519
  %792 = vmatprep.subr.mxu0 0.0
  %793 = vmatpush2.msra.mxu0 %v518
  %794 = vmatprep.subr.mxu0 0.0
  %795 = vmatpush2.msra.mxu0 %v517
  %796 = vmatprep.subr.mxu0 0.0
  %797 = vmatpush2.msra.mxu0 %v516
  %798 = vmatprep.subr.mxu0 0.0
  %799 = vmatpush2.msra.mxu0 %v515
  %800 = vmatprep.subr.mxu0 0.0
  %801 = vmatpush2.msra.mxu0 %v514
  %802 = vmatprep.subr.mxu0 0.0
  %803 = vmatpush2.msra.mxu0 %v513
  %804 = vmatprep.mubr.f32.mxu0 %v372
  %805 = vmatmul.mubr.f32.gmra.mxu0 %v371
  %v806 = vpop.f32.mrf.mxu0
  %v807 = vadd.f32 %v662, %v806
  %v808 = vpop.f32.mrf.mxu0
  %809 = vmatprep.mubr.f32.mxu0 %v378
  %810 = vmatmul.mubr.f32.gmra.mxu0 %v377
  %v811 = vpop.f32.mrf.mxu0
  %v812 = vadd.f32 %v667, %v811
  %v813 = vpop.f32.mrf.mxu0
  %814 = vmatprep.mubr.f32.mxu0 %v384
  %815 = vmatmul.mubr.f32.gmra.mxu0 %v383
  %v816 = vpop.f32.mrf.mxu0
  %v817 = vadd.f32 %v672, %v816
  %v818 = vpop.f32.mrf.mxu0
  %819 = vmatprep.mubr.f32.mxu0 %v390
  %820 = vmatmul.mubr.f32.gmra.mxu0 %v389
  %v821 = vpop.f32.mrf.mxu0
  %v822 = vadd.f32 %v677, %v821
  %v823 = vpop.f32.mrf.mxu0
  %824 = vmatprep.mubr.f32.mxu0 %v396
  %825 = vmatmul.mubr.f32.gmra.mxu0 %v395
  %v826 = vpop.f32.mrf.mxu0
  %v827 = vadd.f32 %v682, %v826
  %v828 = vpop.f32.mrf.mxu0
  %829 = vmatprep.mubr.f32.mxu0 %v402
  %830 = vmatmul.mubr.f32.gmra.mxu0 %v401
  %v831 = vpop.f32.mrf.mxu0
  %v832 = vadd.f32 %v687, %v831
  %v833 = vpop.f32.mrf.mxu0
  %834 = vmatprep.mubr.f32.mxu0 %v408
  %835 = vmatmul.mubr.f32.gmra.mxu0 %v407
  %v836 = vpop.f32.mrf.mxu0
  %v837 = vadd.f32 %v692, %v836
  %v838 = vpop.f32.mrf.mxu0
  %839 = vmatprep.mubr.f32.mxu0 %v414
  %840 = vmatmul.mubr.f32.gmra.mxu0 %v413
  %v841 = vpop.f32.mrf.mxu0
  %v842 = vadd.f32 %v697, %v841
  %v843 = vpop.f32.mrf.mxu0
  %844 = vmatprep.mubr.f32.mxu0 %v420
  %845 = vmatmul.mubr.f32.gmra.mxu0 %v419
  %v846 = vpop.f32.mrf.mxu0
  %v847 = vadd.f32 %v702, %v846
  %v848 = vpop.f32.mrf.mxu0
  %849 = vmatprep.mubr.f32.mxu0 %v426
  %850 = vmatmul.mubr.f32.gmra.mxu0 %v425
  %v851 = vpop.f32.mrf.mxu0
  %v852 = vadd.f32 %v707, %v851
  %v853 = vpop.f32.mrf.mxu0
  %854 = vmatprep.mubr.f32.mxu0 %v432
  %855 = vmatmul.mubr.f32.gmra.mxu0 %v431
  %v856 = vpop.f32.mrf.mxu0
  %v857 = vadd.f32 %v712, %v856
  %v858 = vpop.f32.mrf.mxu0
  %859 = vmatprep.mubr.f32.mxu0 %v438
  %860 = vmatmul.mubr.f32.gmra.mxu0 %v437
  %v861 = vpop.f32.mrf.mxu0
  %v862 = vadd.f32 %v717, %v861
  %v863 = vpop.f32.mrf.mxu0
  %864 = vmatprep.mubr.f32.mxu0 %v444
  %865 = vmatmul.mubr.f32.gmra.mxu0 %v443
  %v866 = vpop.f32.mrf.mxu0
  %v867 = vadd.f32 %v722, %v866
  %v868 = vpop.f32.mrf.mxu0
  %869 = vmatprep.mubr.f32.mxu0 %v450
  %870 = vmatmul.mubr.f32.gmra.mxu0 %v449
  %v871 = vpop.f32.mrf.mxu0
  %v872 = vadd.f32 %v727, %v871
  %v873 = vpop.f32.mrf.mxu0
  %874 = vmatprep.mubr.f32.mxu0 %v456
  %875 = vmatmul.mubr.f32.gmra.mxu0 %v455
  %v876 = vpop.f32.mrf.mxu0
  %v877 = vadd.f32 %v732, %v876
  %v878 = vpop.f32.mrf.mxu0
  %879 = vmatprep.mubr.f32.mxu0 %v462
  %880 = vmatmul.mubr.f32.gmra.mxu0 %v461
  %v881 = vpop.f32.mrf.mxu0
  %v882 = vadd.f32 %v737, %v881
  %v883 = vpop.f32.mrf.mxu0
  %884 = vdwg.mxu0
  %885 = vmatprep.subr.mxu0 0.0
  %886 = vmatpush1.msra.mxu0 %v544
  %887 = vmatprep.subr.mxu0 0.0
  %888 = vmatpush1.msra.mxu0 %v543
  %889 = vmatprep.subr.mxu0 0.0
  %890 = vmatpush1.msra.mxu0 %v542
  %891 = vmatprep.subr.mxu0 0.0
  %892 = vmatpush1.msra.mxu0 %v541
  %893 = vmatprep.subr.mxu0 0.0
  %894 = vmatpush1.msra.mxu0 %v540
  %895 = vmatprep.subr.mxu0 0.0
  %896 = vmatpush1.msra.mxu0 %v539
  %897 = vmatprep.subr.mxu0 0.0
  %898 = vmatpush1.msra.mxu0 %v538
  %899 = vmatprep.subr.mxu0 0.0
  %900 = vmatpush1.msra.mxu0 %v537
  %901 = vmatprep.subr.mxu0 0.0
  %902 = vmatpush1.msra.mxu0 %v536
  %903 = vmatprep.subr.mxu0 0.0
  %904 = vmatpush1.msra.mxu0 %v535
  %905 = vmatprep.subr.mxu0 0.0
  %906 = vmatpush1.msra.mxu0 %v534
  %907 = vmatprep.subr.mxu0 0.0
  %908 = vmatpush1.msra.mxu0 %v533
  %909 = vmatprep.subr.mxu0 0.0
  %910 = vmatpush1.msra.mxu0 %v532
  %911 = vmatprep.subr.mxu0 0.0
  %912 = vmatpush1.msra.mxu0 %v531
  %913 = vmatprep.subr.mxu0 0.0
  %914 = vmatpush1.msra.mxu0 %v530
  %915 = vmatprep.subr.mxu0 0.0
  %916 = vmatpush1.msra.mxu0 %v529
  %917 = vmatprep.subr.mxu0 0.0
  %918 = vmatpush2.msra.mxu0 0.0
  %919 = vmatprep.subr.mxu0 0.0
  %920 = vmatpush2.msra.mxu0 0.0
  %921 = vmatprep.subr.mxu0 0.0
  %922 = vmatpush2.msra.mxu0 0.0
  %923 = vmatprep.subr.mxu0 0.0
  %924 = vmatpush2.msra.mxu0 0.0
  %925 = vmatprep.subr.mxu0 0.0
  %926 = vmatpush2.msra.mxu0 0.0
  %927 = vmatprep.subr.mxu0 0.0
  %928 = vmatpush2.msra.mxu0 0.0
  %929 = vmatprep.subr.mxu0 0.0
  %930 = vmatpush2.msra.mxu0 0.0
  %931 = vmatprep.subr.mxu0 0.0
  %932 = vmatpush2.msra.mxu0 0.0
  %933 = vmatprep.subr.mxu0 0.0
  %934 = vmatpush2.msra.mxu0 0.0
  %935 = vmatprep.subr.mxu0 0.0
  %936 = vmatpush2.msra.mxu0 0.0
  %937 = vmatprep.subr.mxu0 0.0
  %938 = vmatpush2.msra.mxu0 0.0
  %939 = vmatprep.subr.mxu0 0.0
  %940 = vmatpush2.msra.mxu0 0.0
  %941 = vmatprep.subr.mxu0 0.0
  %942 = vmatpush2.msra.mxu0 0.0
  %943 = vmatprep.subr.mxu0 0.0
  %944 = vmatpush2.msra.mxu0 0.0
  %945 = vmatprep.subr.mxu0 0.0
  %946 = vmatpush2.msra.mxu0 0.0
  %947 = vmatprep.subr.mxu0 0.0
  %948 = vmatpush2.msra.mxu0 %v545
  %949 = vmatprep.mubr.f32.mxu0 %v548
  %950 = vmatmul.mubr.f32.gmra.mxu0 %v373
  %v951 = vpop.f32.mrf.mxu0
  %v952 = vadd.f32 %v807, %v951
  %v953 = vpop.f32.mrf.mxu0
  %954 = vmatprep.mubr.f32.mxu0 %v551
  %955 = vmatmul.mubr.f32.gmra.mxu0 %v379
  %v956 = vpop.f32.mrf.mxu0
  %v957 = vadd.f32 %v812, %v956
  %v958 = vpop.f32.mrf.mxu0
  %959 = vmatprep.mubr.f32.mxu0 %v554
  %960 = vmatmul.mubr.f32.gmra.mxu0 %v385
  %v961 = vpop.f32.mrf.mxu0
  %v962 = vadd.f32 %v817, %v961
  %v963 = vpop.f32.mrf.mxu0
  %964 = vmatprep.mubr.f32.mxu0 %v557
  %965 = vmatmul.mubr.f32.gmra.mxu0 %v391
  %v966 = vpop.f32.mrf.mxu0
  %v967 = vadd.f32 %v822, %v966
  %v968 = vpop.f32.mrf.mxu0
  %969 = vmatprep.mubr.f32.mxu0 %v560
  %970 = vmatmul.mubr.f32.gmra.mxu0 %v397
  %v971 = vpop.f32.mrf.mxu0
  %v972 = vadd.f32 %v827, %v971
  %v973 = vpop.f32.mrf.mxu0
  %974 = vmatprep.mubr.f32.mxu0 %v563
  %975 = vmatmul.mubr.f32.gmra.mxu0 %v403
  %v976 = vpop.f32.mrf.mxu0
  %v977 = vadd.f32 %v832, %v976
  %v978 = vpop.f32.mrf.mxu0
  %979 = vmatprep.mubr.f32.mxu0 %v566
  %980 = vmatmul.mubr.f32.gmra.mxu0 %v409
  %v981 = vpop.f32.mrf.mxu0
  %v982 = vadd.f32 %v837, %v981
  %v983 = vpop.f32.mrf.mxu0
  %984 = vmatprep.mubr.f32.mxu0 %v569
  %985 = vmatmul.mubr.f32.gmra.mxu0 %v415
  %v986 = vpop.f32.mrf.mxu0
  %v987 = vadd.f32 %v842, %v986
  %v988 = vpop.f32.mrf.mxu0
  %989 = vmatprep.mubr.f32.mxu0 %v572
  %990 = vmatmul.mubr.f32.gmra.mxu0 %v421
  %v991 = vpop.f32.mrf.mxu0
  %v992 = vadd.f32 %v847, %v991
  %v993 = vpop.f32.mrf.mxu0
  %994 = vmatprep.mubr.f32.mxu0 %v575
  %995 = vmatmul.mubr.f32.gmra.mxu0 %v427
  %v996 = vpop.f32.mrf.mxu0
  %v997 = vadd.f32 %v852, %v996
  %v998 = vpop.f32.mrf.mxu0
  %999 = vmatprep.mubr.f32.mxu0 %v578
  %1000 = vmatmul.mubr.f32.gmra.mxu0 %v433
  %v1001 = vpop.f32.mrf.mxu0
  %v1002 = vadd.f32 %v857, %v1001
  %v1003 = vpop.f32.mrf.mxu0
  %1004 = vmatprep.mubr.f32.mxu0 %v581
  %1005 = vmatmul.mubr.f32.gmra.mxu0 %v439
  %v1006 = vpop.f32.mrf.mxu0
  %v1007 = vadd.f32 %v862, %v1006
  %v1008 = vpop.f32.mrf.mxu0
  %1009 = vmatprep.mubr.f32.mxu0 %v584
  %1010 = vmatmul.mubr.f32.gmra.mxu0 %v445
  %v1011 = vpop.f32.mrf.mxu0
  %v1012 = vadd.f32 %v867, %v1011
  %v1013 = vpop.f32.mrf.mxu0
  %1014 = vmatprep.mubr.f32.mxu0 %v587
  %1015 = vmatmul.mubr.f32.gmra.mxu0 %v451
  %v1016 = vpop.f32.mrf.mxu0
  %v1017 = vadd.f32 %v872, %v1016
  %v1018 = vpop.f32.mrf.mxu0
  %1019 = vmatprep.mubr.f32.mxu0 %v590
  %1020 = vmatmul.mubr.f32.gmra.mxu0 %v457
  %v1021 = vpop.f32.mrf.mxu0
  %v1022 = vadd.f32 %v877, %v1021
  %v1023 = vpop.f32.mrf.mxu0
  %1024 = vmatprep.mubr.f32.mxu0 %v593
  %1025 = vmatmul.mubr.f32.gmra.mxu0 %v463
  %v1026 = vpop.f32.mrf.mxu0
  %v1027 = vadd.f32 %v882, %v1026
  %v1028 = vpop.f32.mrf.mxu0
  %1029 = vdwg.mxu0
  %1030 = vst.msk [vmem:[%s4] sm:$0xff] %vm546, %v952
  %1031 = vst.msk [vmem:[%s4 + $0x8] sm:$0xff] %vm546, %v957
  %1032 = vst.msk [vmem:[%s4 + $0x10] sm:$0xff] %vm546, %v962
  %1033 = vst.msk [vmem:[%s4 + $0x18] sm:$0xff] %vm546, %v967
  %1034 = vst.msk [vmem:[%s4 + $0x20] sm:$0xff] %vm546, %v972
  %1035 = vst.msk [vmem:[%s4 + $0x28] sm:$0xff] %vm546, %v977
  %1036 = vst.msk [vmem:[%s4 + $0x30] sm:$0xff] %vm546, %v982
  %1037 = vst.msk [vmem:[%s4 + $0x38] sm:$0xff] %vm546, %v987
  %1038 = vst.msk [vmem:[%s4 + $0x40] sm:$0xff] %vm546, %v992
  %1039 = vst.msk [vmem:[%s4 + $0x48] sm:$0xff] %vm546, %v997
  %1040 = vst.msk [vmem:[%s4 + $0x50] sm:$0xff] %vm546, %v1002
  %1041 = vst.msk [vmem:[%s4 + $0x58] sm:$0xff] %vm546, %v1007
  %1042 = vst.msk [vmem:[%s4 + $0x60] sm:$0xff] %vm546, %v1012
  %1043 = vst.msk [vmem:[%s4 + $0x68] sm:$0xff] %vm546, %v1017
  %1044 = vst.msk [vmem:[%s4 + $0x70] sm:$0xff] %vm546, %v1022
  %1045 = vst.msk [vmem:[%s4 + $0x78] sm:$0xff] %vm546, %v1027
  // Predicated region
  $region18: #{_lambda_.13} parent=0 // pred_check
    _
  $region19: #{_lambda_.13} parent=0 // pred_check_branch
    %1047 = sbr.rel (0) target = $region21
  $region20: #{_lambda_.13} parent=0 // pred_region
    _
  $region21: #{_lambda_.13} parent=0 // pred_fallthru
    _
  // Predicated region
  $region22: #{_lambda_.13} parent=0 // pred_check
    _
  $region23: #{_lambda_.13} parent=0 // pred_check_branch
    %1049 = sbr.rel (0) target = $region25
  $region24: #{_lambda_.13} parent=0 // pred_region
    _
  $region25: #{_lambda_.13} parent=0 // pred_fallthru
    _

// kernel: _lambda_.15
$region0: #{_lambda_.15}
  #allocation0 [shape = 'u32[]', space=smem, size = 0x4, offset = 0x4, fixed_abs, tag = 'smem constant byte address 0x4 - core index']
  #allocation1 [shape = 'u32[144,128]{1,0:T(1,128)}', space=vmem, size = 0x12000, scoped, tag = 'internal scratch']
  %s0 = inlined_call_operand.vmem [shape: f32[32,40], index: 0, kind: input, shape index: {}]
  %s1 = inlined_call_operand.vmem [shape: f32[32,40], index: 1, kind: input, shape index: {}]
  %s2 = inlined_call_operand.vmem [shape: f32[32,40], index: 2, kind: input, shape index: {}]
  %s3 = inlined_call_operand.vmem [shape: f32[32,40], index: 3, kind: input, shape index: {}]
  %s4 = inlined_call_operand.vmem [shape: f32[32,40], index: 4, kind: output, shape index: {}]
  %s5 = sld [smem:[#allocation0]]
  $region26: #{_lambda_.15} parent=0
    _
  %s7 = ssub.s32 1, %s5
  %s8 = scalar_select 0, %s7, %s5
  // Predicated region
  $region2: #{_lambda_.15} parent=0 // pred_check
    _
  $region3: #{_lambda_.15} parent=0 // pred_check_branch
    %10 = sbr.rel (0) target = $region5
  $region4: #{_lambda_.15} parent=0 // pred_region
    _
  $region5: #{_lambda_.15} parent=0 // pred_fallthru
    _
  // Predicated region
  $region6: #{_lambda_.15} parent=0 // pred_check
    _
  $region7: #{_lambda_.15} parent=0 // pred_check_branch
    %12 = sbr.rel (0) target = $region9
  $region8: #{_lambda_.15} parent=0 // pred_region
    _
  $region9: #{_lambda_.15} parent=0 // pred_fallthru
    _
  // Predicated region
  $region10: #{_lambda_.15} parent=0 // pred_check
    _
  $region11: #{_lambda_.15} parent=0 // pred_check_branch
    %14 = sbr.rel (0) target = $region13
  $region12: #{_lambda_.15} parent=0 // pred_region
    _
  $region13: #{_lambda_.15} parent=0 // pred_fallthru
    _
  // Predicated region
  $region14: #{_lambda_.15} parent=0 // pred_check
    _
  $region15: #{_lambda_.15} parent=0 // pred_check_branch
    %16 = sbr.rel (0) target = $region17
  $region16: #{_lambda_.15} parent=0 // pred_region
    _
  $region17: #{_lambda_.15} parent=0 // pred_fallthru
    _
  %v17 = vld [vmem:[%s0] sm:$0xff]
  %v18 = vld [vmem:[%s0 + $0x8] sm:$0xff]
  %v19 = vld [vmem:[%s0 + $0x10] sm:$0xff]
  %v20 = vld [vmem:[%s0 + $0x18] sm:$0xff]
  %v21 = vld [vmem:[%s1] sm:$0xff]
  %v22 = vld [vmem:[%s1 + $0x8] sm:$0xff]
  %v23 = vld [vmem:[%s1 + $0x10] sm:$0xff]
  %v24 = vld [vmem:[%s1 + $0x18] sm:$0xff]
  %v25 = vadd.f32 %v17, %v21
  %v26 = vadd.f32 %v18, %v22
  %v27 = vadd.f32 %v19, %v23
  %v28 = vadd.f32 %v20, %v24
  %v29 = vld [vmem:[%s2] sm:$0xff]
  %v30 = vld [vmem:[%s2 + $0x8] sm:$0xff]
  %v31 = vld [vmem:[%s2 + $0x10] sm:$0xff]
  %v32 = vld [vmem:[%s2 + $0x18] sm:$0xff]
  %v33 = vadd.f32 %v25, %v29
  %v34 = vadd.f32 %v26, %v30
  %v35 = vadd.f32 %v27, %v31
  %v36 = vadd.f32 %v28, %v32
  %v37 = vld [vmem:[%s3] sm:$0xff]
  %v38 = vld [vmem:[%s3 + $0x8] sm:$0xff]
  %v39 = vld [vmem:[%s3 + $0x10] sm:$0xff]
  %v40 = vld [vmem:[%s3 + $0x18] sm:$0xff]
  %v41 = vadd.f32 %v33, %v37
  %v42 = vadd.f32 %v34, %v38
  %v43 = vadd.f32 %v35, %v39
  %v44 = vadd.f32 %v36, %v40
  %v45 = vmul.f32 %v41, 0.25
  %v46 = vmul.f32 %v42, 0.25
  %v47 = vmul.f32 %v43, 0.25
  %v48 = vmul.f32 %v44, 0.25
  %vm49 = vcmask 326656
  %50 = vst.msk [vmem:[%s4] sm:$0xff] %vm49, %v45
  %51 = vst.msk [vmem:[%s4 + $0x8] sm:$0xff] %vm49, %v46
  %52 = vst.msk [vmem:[%s4 + $0x10] sm:$0xff] %vm49, %v47
  %53 = vst.msk [vmem:[%s4 + $0x18] sm:$0xff] %vm49, %v48
  // Predicated region
  $region18: #{_lambda_.15} parent=0 // pred_check
    _
  $region19: #{_lambda_.15} parent=0 // pred_check_branch
    %55 = sbr.rel (0) target = $region21
  $region20: #{_lambda_.15} parent=0 // pred_region
    _
  $region21: #{_lambda_.15} parent=0 // pred_fallthru
    _
  // Predicated region
  $region22: #{_lambda_.15} parent=0 // pred_check
    _
  $region23: #{_lambda_.15} parent=0 // pred_check_branch
    %57 = sbr.rel (0) target = $region25
  $region24: #{_lambda_.15} parent=0 // pred_region
    _
  $region25: #{_lambda_.15} parent=0 // pred_fallthru
    _

// kernel: _lambda_.14
$region0: #{_lambda_.14}
  #allocation0 [shape = 'u32[]', space=smem, size = 0x4, offset = 0x4, fixed_abs, tag = 'smem constant byte address 0x4 - core index']
  #allocation1 [shape = 'u32[144,128]{1,0:T(1,128)}', space=vmem, size = 0x12000, scoped, tag = 'internal scratch']
  %s0 = inlined_call_operand.vmem [shape: f32[128,80], index: 0, kind: input, shape index: {}]
  %s1 = inlined_call_operand.vmem [shape: f32[80,40], index: 1, kind: input, shape index: {}]
  %s2 = inlined_call_operand.vmem [shape: f32[1,80], index: 2, kind: input, shape index: {}]
  %s3 = inlined_call_operand.vmem [shape: f32[1,80], index: 3, kind: input, shape index: {}]
  %s4 = inlined_call_operand.vmem [shape: f32[1,40], index: 4, kind: input, shape index: {}]
  %s5 = inlined_call_operand.vmem [shape: f32[128,40], index: 5, kind: output, shape index: {}]
  %s6 = sld [smem:[#allocation0]]
  $region30: #{_lambda_.14} parent=0
    _
  %s8 = ssub.s32 1, %s6
  %s9 = scalar_select 0, %s8, %s6
  // Predicated region
  $region2: #{_lambda_.14} parent=0 // pred_check
    _
  $region3: #{_lambda_.14} parent=0 // pred_check_branch
    %11 = sbr.rel (0) target = $region5
  $region4: #{_lambda_.14} parent=0 // pred_region
    _
  $region5: #{_lambda_.14} parent=0 // pred_fallthru
    _
  // Predicated region
  $region6: #{_lambda_.14} parent=0 // pred_check
    _
  $region7: #{_lambda_.14} parent=0 // pred_check_branch
    %13 = sbr.rel (0) target = $region9
  $region8: #{_lambda_.14} parent=0 // pred_region
    _
  $region9: #{_lambda_.14} parent=0 // pred_fallthru
    _
  // Predicated region
  $region10: #{_lambda_.14} parent=0 // pred_check
    _
  $region11: #{_lambda_.14} parent=0 // pred_check_branch
    %15 = sbr.rel (0) target = $region13
  $region12: #{_lambda_.14} parent=0 // pred_region
    _
  $region13: #{_lambda_.14} parent=0 // pred_fallthru
    _
  // Predicated region
  $region14: #{_lambda_.14} parent=0 // pred_check
    _
  $region15: #{_lambda_.14} parent=0 // pred_check_branch
    %17 = sbr.rel (0) target = $region17
  $region16: #{_lambda_.14} parent=0 // pred_region
    _
  $region17: #{_lambda_.14} parent=0 // pred_fallthru
    _
  // Predicated region
  $region18: #{_lambda_.14} parent=0 // pred_check
    _
  $region19: #{_lambda_.14} parent=0 // pred_check_branch
    %19 = sbr.rel (0) target = $region21
  $region20: #{_lambda_.14} parent=0 // pred_region
    _
  $region21: #{_lambda_.14} parent=0 // pred_fallthru
    _
  %v20 = vld [vmem:[%s0] sm:$0xff]
  %v21 = vld [vmem:[%s0 + $0x8] sm:$0xff]
  %v22 = vld [vmem:[%s0 + $0x10] sm:$0xff]
  %v23 = vld [vmem:[%s0 + $0x18] sm:$0xff]
  %v24 = vld [vmem:[%s0 + $0x20] sm:$0xff]
  %v25 = vld [vmem:[%s0 + $0x28] sm:$0xff]
  %v26 = vld [vmem:[%s0 + $0x30] sm:$0xff]
  %v27 = vld [vmem:[%s0 + $0x38] sm:$0xff]
  %v28 = vld [vmem:[%s0 + $0x40] sm:$0xff]
  %v29 = vld [vmem:[%s0 + $0x48] sm:$0xff]
  %v30 = vld [vmem:[%s0 + $0x50] sm:$0xff]
  %v31 = vld [vmem:[%s0 + $0x58] sm:$0xff]
  %v32 = vld [vmem:[%s0 + $0x60] sm:$0xff]
  %v33 = vld [vmem:[%s0 + $0x68] sm:$0xff]
  %v34 = vld [vmem:[%s0 + $0x70] sm:$0xff]
  %v35 = vld [vmem:[%s0 + $0x78] sm:$0xff]
  %v36 = vld [vmem:[%s2] sm:$0x1]
  %v38 = vlaneseq
  %v39 = vshrl.u32 %v38, 7
  %v40 = vsub.s32 0, %v39
  %v41 = vrot.slane %v36, %v40
  %v43 = vmul.f32 %v20, %v41
  %v44 = vmul.f32 %v21, %v41
  %v45 = vmul.f32 %v22, %v41
  %v46 = vmul.f32 %v23, %v41
  %v47 = vmul.f32 %v24, %v41
  %v48 = vmul.f32 %v25, %v41
  %v49 = vmul.f32 %v26, %v41
  %v50 = vmul.f32 %v27, %v41
  %v51 = vmul.f32 %v28, %v41
  %v52 = vmul.f32 %v29, %v41
  %v53 = vmul.f32 %v30, %v41
  %v54 = vmul.f32 %v31, %v41
  %v55 = vmul.f32 %v32, %v41
  %v56 = vmul.f32 %v33, %v41
  %v57 = vmul.f32 %v34, %v41
  %v58 = vmul.f32 %v35, %v41
  %v59 = vld [vmem:[%s3] sm:$0x1]
  %v61 = vlaneseq
  %v62 = vshrl.u32 %v61, 7
  %v63 = vsub.s32 0, %v62
  %v64 = vrot.slane %v59, %v63
  %v66 = vadd.f32 %v43, %v64
  %v67 = vadd.f32 %v44, %v64
  %v68 = vadd.f32 %v45, %v64
  %v69 = vadd.f32 %v46, %v64
  %v70 = vadd.f32 %v47, %v64
  %v71 = vadd.f32 %v48, %v64
  %v72 = vadd.f32 %v49, %v64
  %v73 = vadd.f32 %v50, %v64
  %v74 = vadd.f32 %v51, %v64
  %v75 = vadd.f32 %v52, %v64
  %v76 = vadd.f32 %v53, %v64
  %v77 = vadd.f32 %v54, %v64
  %v78 = vadd.f32 %v55, %v64
  %v79 = vadd.f32 %v56, %v64
  %v80 = vadd.f32 %v57, %v64
  %v81 = vadd.f32 %v58, %v64
  %v82 = vmax.f32 %v66, 0.0
  %v83 = vmax.f32 %v67, 0.0
  %v84 = vmax.f32 %v68, 0.0
  %v85 = vmax.f32 %v69, 0.0
  %v86 = vmax.f32 %v70, 0.0
  %v87 = vmax.f32 %v71, 0.0
  %v88 = vmax.f32 %v72, 0.0
  %v89 = vmax.f32 %v73, 0.0
  %v90 = vmax.f32 %v74, 0.0
  %v91 = vmax.f32 %v75, 0.0
  %v92 = vmax.f32 %v76, 0.0
  %v93 = vmax.f32 %v77, 0.0
  %v94 = vmax.f32 %v78, 0.0
  %v95 = vmax.f32 %v79, 0.0
  %v96 = vmax.f32 %v80, 0.0
  %v97 = vmax.f32 %v81, 0.0
  %v98 = vld [vmem:[%s1] sm:$0xff]
  %v99 = vld [vmem:[%s1 + $0x8] sm:$0xff]
  %v100 = vld [vmem:[%s1 + $0x10] sm:$0xff]
  %v101 = vld [vmem:[%s1 + $0x18] sm:$0xff]
  %v102 = vld [vmem:[%s1 + $0x20] sm:$0xff]
  %v103 = vld [vmem:[%s1 + $0x28] sm:$0xff]
  %v104 = vld [vmem:[%s1 + $0x30] sm:$0xff]
  %v105 = vld [vmem:[%s1 + $0x38] sm:$0xff]
  %v106 = vld [vmem:[%s1 + $0x40] sm:$0xff]
  %v107 = vld [vmem:[%s1 + $0x48] sm:$0xff]
  %v108 = vld [vmem:[%s4] sm:$0x1]
  %v110 = vlaneseq
  %v111 = vshrl.u32 %v110, 7
  %v112 = vsub.s32 0, %v111
  %v113 = vrot.slane %v108, %v112
  %vm115 = vcmask 654336
  %v117 = vsel %vm115, %v82, 0
  %v120 = vsel %vm115, %v83, 0
  %v123 = vsel %vm115, %v84, 0
  %v126 = vsel %vm115, %v85, 0
  %v129 = vsel %vm115, %v86, 0
  %v132 = vsel %vm115, %v87, 0
  %v135 = vsel %vm115, %v88, 0
  %v138 = vsel %vm115, %v89, 0
  %v141 = vsel %vm115, %v90, 0
  %v144 = vsel %vm115, %v91, 0
  %v147 = vsel %vm115, %v92, 0
  %v150 = vsel %vm115, %v93, 0
  %v153 = vsel %vm115, %v94, 0
  %v156 = vsel %vm115, %v95, 0
  %v159 = vsel %vm115, %v96, 0
  %v162 = vsel %vm115, %v97, 0
  %164 = vmatprep.subr.mxu0 0.0
  %165 = vmatpush1.msra.mxu0 0.0
  %166 = vmatprep.subr.mxu0 0.0
  %167 = vmatpush1.msra.mxu0 0.0
  %168 = vmatprep.subr.mxu0 0.0
  %169 = vmatpush1.msra.mxu0 0.0
  %170 = vmatprep.subr.mxu0 0.0
  %171 = vmatpush1.msra.mxu0 0.0
  %172 = vmatprep.subr.mxu0 0.0
  %173 = vmatpush1.msra.mxu0 0.0
  %174 = vmatprep.subr.mxu0 0.0
  %175 = vmatpush1.msra.mxu0 0.0
  %176 = vmatprep.subr.mxu0 0.0
  %177 = vmatpush1.msra.mxu0 %v107
  %178 = vmatprep.subr.mxu0 0.0
  %179 = vmatpush1.msra.mxu0 %v106
  %180 = vmatprep.subr.mxu0 0.0
  %181 = vmatpush1.msra.mxu0 %v105
  %182 = vmatprep.subr.mxu0 0.0
  %183 = vmatpush1.msra.mxu0 %v104
  %184 = vmatprep.subr.mxu0 0.0
  %185 = vmatpush1.msra.mxu0 %v103
  %186 = vmatprep.subr.mxu0 0.0
  %187 = vmatpush1.msra.mxu0 %v102
  %188 = vmatprep.subr.mxu0 0.0
  %189 = vmatpush1.msra.mxu0 %v101
  %190 = vmatprep.subr.mxu0 0.0
  %191 = vmatpush1.msra.mxu0 %v100
  %192 = vmatprep.subr.mxu0 0.0
  %193 = vmatpush1.msra.mxu0 %v99
  %194 = vmatprep.subr.mxu0 0.0
  %195 = vmatpush1.msra.mxu0 %v98
  %196 = vmatprep.subr.mxu0 0.0
  %197 = vmatpush2.msra.mxu0 0.0
  %198 = vmatprep.subr.mxu0 0.0
  %199 = vmatpush2.msra.mxu0 0.0
  %200 = vmatprep.subr.mxu0 0.0
  %201 = vmatpush2.msra.mxu0 0.0
  %202 = vmatprep.subr.mxu0 0.0
  %203 = vmatpush2.msra.mxu0 0.0
  %204 = vmatprep.subr.mxu0 0.0
  %205 = vmatpush2.msra.mxu0 0.0
  %206 = vmatprep.subr.mxu0 0.0
  %207 = vmatpush2.msra.mxu0 0.0
  %208 = vmatprep.subr.mxu0 0.0
  %209 = vmatpush2.msra.mxu0 0.0
  %210 = vmatprep.subr.mxu0 0.0
  %211 = vmatpush2.msra.mxu0 0.0
  %212 = vmatprep.subr.mxu0 0.0
  %213 = vmatpush2.msra.mxu0 0.0
  %214 = vmatprep.subr.mxu0 0.0
  %215 = vmatpush2.msra.mxu0 0.0
  %216 = vmatprep.subr.mxu0 0.0
  %217 = vmatpush2.msra.mxu0 0.0
  %218 = vmatprep.subr.mxu0 0.0
  %219 = vmatpush2.msra.mxu0 0.0
  %220 = vmatprep.subr.mxu0 0.0
  %221 = vmatpush2.msra.mxu0 0.0
  %222 = vmatprep.subr.mxu0 0.0
  %223 = vmatpush2.msra.mxu0 0.0
  %224 = vmatprep.subr.mxu0 0.0
  %225 = vmatpush2.msra.mxu0 0.0
  %226 = vmatprep.subr.mxu0 0.0
  %227 = vmatpush2.msra.mxu0 0.0
  %228 = vmatprep.mubr.f32.mxu0 0.0
  %229 = vmatmul.mubr.f32.gmra.mxu0 %v117
  %v230 = vpop.f32.mrf.mxu0
  %v231 = vadd.f32 %v113, %v230
  %v232 = vpop.f32.mrf.mxu0
  %233 = vmatprep.mubr.f32.mxu0 0.0
  %234 = vmatmul.mubr.f32.gmra.mxu0 %v120
  %v235 = vpop.f32.mrf.mxu0
  %v236 = vadd.f32 %v113, %v235
  %v237 = vpop.f32.mrf.mxu0
  %238 = vmatprep.mubr.f32.mxu0 0.0
  %239 = vmatmul.mubr.f32.gmra.mxu0 %v123
  %v240 = vpop.f32.mrf.mxu0
  %v241 = vadd.f32 %v113, %v240
  %v242 = vpop.f32.mrf.mxu0
  %243 = vmatprep.mubr.f32.mxu0 0.0
  %244 = vmatmul.mubr.f32.gmra.mxu0 %v126
  %v245 = vpop.f32.mrf.mxu0
  %v246 = vadd.f32 %v113, %v245
  %v247 = vpop.f32.mrf.mxu0
  %248 = vmatprep.mubr.f32.mxu0 0.0
  %249 = vmatmul.mubr.f32.gmra.mxu0 %v129
  %v250 = vpop.f32.mrf.mxu0
  %v251 = vadd.f32 %v113, %v250
  %v252 = vpop.f32.mrf.mxu0
  %253 = vmatprep.mubr.f32.mxu0 0.0
  %254 = vmatmul.mubr.f32.gmra.mxu0 %v132
  %v255 = vpop.f32.mrf.mxu0
  %v256 = vadd.f32 %v113, %v255
  %v257 = vpop.f32.mrf.mxu0
  %258 = vmatprep.mubr.f32.mxu0 0.0
  %259 = vmatmul.mubr.f32.gmra.mxu0 %v135
  %v260 = vpop.f32.mrf.mxu0
  %v261 = vadd.f32 %v113, %v260
  %v262 = vpop.f32.mrf.mxu0
  %263 = vmatprep.mubr.f32.mxu0 0.0
  %264 = vmatmul.mubr.f32.gmra.mxu0 %v138
  %v265 = vpop.f32.mrf.mxu0
  %v266 = vadd.f32 %v113, %v265
  %v267 = vpop.f32.mrf.mxu0
  %268 = vmatprep.mubr.f32.mxu0 0.0
  %269 = vmatmul.mubr.f32.gmra.mxu0 %v141
  %v270 = vpop.f32.mrf.mxu0
  %v271 = vadd.f32 %v113, %v270
  %v272 = vpop.f32.mrf.mxu0
  %273 = vmatprep.mubr.f32.mxu0 0.0
  %274 = vmatmul.mubr.f32.gmra.mxu0 %v144
  %v275 = vpop.f32.mrf.mxu0
  %v276 = vadd.f32 %v113, %v275
  %v277 = vpop.f32.mrf.mxu0
  %278 = vmatprep.mubr.f32.mxu0 0.0
  %279 = vmatmul.mubr.f32.gmra.mxu0 %v147
  %v280 = vpop.f32.mrf.mxu0
  %v281 = vadd.f32 %v113, %v280
  %v282 = vpop.f32.mrf.mxu0
  %283 = vmatprep.mubr.f32.mxu0 0.0
  %284 = vmatmul.mubr.f32.gmra.mxu0 %v150
  %v285 = vpop.f32.mrf.mxu0
  %v286 = vadd.f32 %v113, %v285
  %v287 = vpop.f32.mrf.mxu0
  %288 = vmatprep.mubr.f32.mxu0 0.0
  %289 = vmatmul.mubr.f32.gmra.mxu0 %v153
  %v290 = vpop.f32.mrf.mxu0
  %v291 = vadd.f32 %v113, %v290
  %v292 = vpop.f32.mrf.mxu0
  %293 = vmatprep.mubr.f32.mxu0 0.0
  %294 = vmatmul.mubr.f32.gmra.mxu0 %v156
  %v295 = vpop.f32.mrf.mxu0
  %v296 = vadd.f32 %v113, %v295
  %v297 = vpop.f32.mrf.mxu0
  %298 = vmatprep.mubr.f32.mxu0 0.0
  %299 = vmatmul.mubr.f32.gmra.mxu0 %v159
  %v300 = vpop.f32.mrf.mxu0
  %v301 = vadd.f32 %v113, %v300
  %v302 = vpop.f32.mrf.mxu0
  %303 = vmatprep.mubr.f32.mxu0 0.0
  %304 = vmatmul.mubr.f32.gmra.mxu0 %v162
  %v305 = vpop.f32.mrf.mxu0
  %v306 = vadd.f32 %v113, %v305
  %v307 = vpop.f32.mrf.mxu0
  %308 = vdwg.mxu0
  %vm309 = vcmask 326656
  %310 = vst.msk [vmem:[%s5] sm:$0xff] %vm309, %v231
  %311 = vst.msk [vmem:[%s5 + $0x8] sm:$0xff] %vm309, %v236
  %312 = vst.msk [vmem:[%s5 + $0x10] sm:$0xff] %vm309, %v241
  %313 = vst.msk [vmem:[%s5 + $0x18] sm:$0xff] %vm309, %v246
  %314 = vst.msk [vmem:[%s5 + $0x20] sm:$0xff] %vm309, %v251
  %315 = vst.msk [vmem:[%s5 + $0x28] sm:$0xff] %vm309, %v256
  %316 = vst.msk [vmem:[%s5 + $0x30] sm:$0xff] %vm309, %v261
  %317 = vst.msk [vmem:[%s5 + $0x38] sm:$0xff] %vm309, %v266
  %318 = vst.msk [vmem:[%s5 + $0x40] sm:$0xff] %vm309, %v271
  %319 = vst.msk [vmem:[%s5 + $0x48] sm:$0xff] %vm309, %v276
  %320 = vst.msk [vmem:[%s5 + $0x50] sm:$0xff] %vm309, %v281
  %321 = vst.msk [vmem:[%s5 + $0x58] sm:$0xff] %vm309, %v286
  %322 = vst.msk [vmem:[%s5 + $0x60] sm:$0xff] %vm309, %v291
  %323 = vst.msk [vmem:[%s5 + $0x68] sm:$0xff] %vm309, %v296
  %324 = vst.msk [vmem:[%s5 + $0x70] sm:$0xff] %vm309, %v301
  %325 = vst.msk [vmem:[%s5 + $0x78] sm:$0xff] %vm309, %v306
  // Predicated region
  $region22: #{_lambda_.14} parent=0 // pred_check
    _
  $region23: #{_lambda_.14} parent=0 // pred_check_branch
    %327 = sbr.rel (0) target = $region25
  $region24: #{_lambda_.14} parent=0 // pred_region
    _
  $region25: #{_lambda_.14} parent=0 // pred_fallthru
    _
  // Predicated region
  $region26: #{_lambda_.14} parent=0 // pred_check
    _
  $region27: #{_lambda_.14} parent=0 // pred_check_branch
    %329 = sbr.rel (0) target = $region29
  $region28: #{_lambda_.14} parent=0 // pred_region
    _
  $region29: #{_lambda_.14} parent=0 // pred_fallthru
    _

// kernel: tile.50
$region0: #{tile.50}
  #allocation0 [shape = 's32[1]{0}', space=sflag, size = 0x4, scoped, tag = 'scoped memory for tile.50']
  %s0 = inlined_call_operand.vmem [shape: f32[40], index: 0, kind: input, shape index: {}]
  %s1 = inlined_call_operand.vmem [shape: f32[9,40], index: 1, kind: output, shape index: {}]
  // Predicated region
  $region2: #{tile.50} parent=0 // pred_check
    _
  $region3: #{tile.50} parent=0 // pred_check_branch
    %3 = sbr.rel (0) target = $region5
  $region4: #{tile.50} parent=0 // pred_region
    _
  $region5: #{tile.50} parent=0 // pred_fallthru
    _
  %v4 = vld [vmem:[%s0] ss:$0 sm:$0xff]
  %5 = vst [vmem:[%s1] sm:$0xff] %v4
  %s6 = scalar_lea.vmem %s1, 8
  %7 = vst [vmem:[%s6] sm:$0xff] %v4

// kernel: tile.54
$region0: #{tile.54}
  %s0 = inlined_call_operand.vmem [shape: f32[9,40], index: 0, kind: input, shape index: {}]
  %s1 = inlined_call_operand.vmem [shape: f32[1,360], index: 1, kind: output, shape index: {}]
  $region1: #{tile.54} parent=0
    #allocation0 [shape = 'u8[12288]{0}', space=vmem, size = 0x3000, scoped, tag = 'scoped mem for output reshape']
    %v2 = vld [vmem:[%s0] sm:$0x1]
    %vm3 = vcmask 326656
    %4 = vst.msk [vmem:[#allocation0] sm:$0x1] %vm3, %v2
    %s5 = scalar_lea.vmem %s0, 3
    %v6 = vld [vmem:[%s5] sm:$0x1]
    %s7 = scalar_lea.vmem %s0, 3
    %v8 = vld [vmem:[%s7] sm:$0x1]
    %vm9 = vcmask 64512
    %v10 = vsel %vm9, %v8, %v6
    %11 = vrot.lane.b32.xlu0 %v10, 120
    %v12 = vpop.permute.xlu0 %11
    %vm13 = vcmask 261120
    %s14 = scalar_lea.vmem [#allocation0], 8
    %15 = vst.msk [vmem:[%s14] sm:$0x1] %vm13, %v12
    %vm16 = vcmask 1048512
    %17 = vst.msk [vmem:[#allocation0] sm:$0x1] %vm16, %v12
    %s18 = scalar_lea.vmem %s0, 6
    %v19 = vld [vmem:[%s18] sm:$0x1]
    %s20 = scalar_lea.vmem %s0, 6
    %v21 = vld [vmem:[%s20] sm:$0x1]
    %vm22 = vcmask 130048
    %v23 = vsel %vm22, %v21, %v19
    %24 = vrot.lane.b32.xlu0 %v23, 112
    %v25 = vpop.permute.xlu0 %24
    %vm26 = vcmask 195584
    %s27 = scalar_lea.vmem [#allocation0], 16
    %28 = vst.msk [vmem:[%s27] sm:$0x1] %vm26, %v25
    %vm29 = vcmask 1048448
    %s30 = scalar_lea.vmem [#allocation0], 8
    %31 = vst.msk [vmem:[%s30] sm:$0x1] %vm29, %v25
    %s32 = scalar_lea.vmem %s0, 2
    %v33 = vld [vmem:[%s32] sm:$0x1]
    %34 = vrot.lane.b32.xlu0 %v33, 80
    %v35 = vpop.permute.xlu0 %34
    %vm36 = vcmask 982656
    %37 = vst.msk [vmem:[#allocation0] sm:$0x1] %vm36, %v35
    %s38 = scalar_lea.vmem %s0, 5
    %v39 = vld [vmem:[%s38] sm:$0x1]
    %40 = vrot.lane.b32.xlu0 %v39, 72
    %v41 = vpop.permute.xlu0 %40
    %vm42 = vcmask 917056
    %s43 = scalar_lea.vmem [#allocation0], 8
    %44 = vst.msk [vmem:[%s43] sm:$0x1] %vm42, %v41
    %s45 = scalar_lea.vmem %s0, 8
    %v46 = vld [vmem:[%s45] sm:$0x1]
    %47 = vrot.lane.b32.xlu0 %v46, 64
    %v48 = vpop.permute.xlu0 %47
    %vm49 = vcmask 851456
    %s50 = scalar_lea.vmem [#allocation0], 16
    %51 = vst.msk [vmem:[%s50] sm:$0x1] %vm49, %v48
    %s52 = scalar_lea.vmem %s0, 1
    %v53 = vld [vmem:[%s52] sm:$0x1]
    %54 = vrot.lane.b32.xlu0 %v53, 40
    %v55 = vpop.permute.xlu0 %54
    %vm56 = vcmask 654656
    %57 = vst.msk [vmem:[#allocation0] sm:$0x1] %vm56, %v55
    %s58 = scalar_lea.vmem %s0, 4
    %v59 = vld [vmem:[%s58] sm:$0x1]
    %60 = vrot.lane.b32.xlu0 %v59, 32
    %v61 = vpop.permute.xlu0 %60
    %vm62 = vcmask 589056
    %s63 = scalar_lea.vmem [#allocation0], 8
    %64 = vst.msk [vmem:[%s63] sm:$0x1] %vm62, %v61
    %s65 = scalar_lea.vmem %s0, 7
    %v66 = vld [vmem:[%s65] sm:$0x1]
    %67 = vrot.lane.b32.xlu0 %v66, 24
    %v68 = vpop.permute.xlu0 %67
    %vm69 = vcmask 523456
    %s70 = scalar_lea.vmem [#allocation0], 16
    %71 = vst.msk [vmem:[%s70] sm:$0x1] %vm69, %v68
    %s73 = sshll.u32 1, 1
    %s74 = ssub.s32 %s73, 1
    %v76 = vld [vmem:[#allocation0] sm:%s74]
    %s77 = sshll.u32 1, 1
    %s78 = ssub.s32 %s77, 1
    %79 = vst [vmem:[%s1] sm:%s78] %v76
    %s80 = scalar_lea.vmem [#allocation0], 8
    %v81 = vld [vmem:[%s80] sm:%s74]
    %s82 = sshll.u32 1, 1
    %s83 = ssub.s32 %s82, 1
    %s84 = scalar_lea.vmem %s1, 1
    %85 = vst [vmem:[%s84] sm:%s83] %v81
    %s86 = scalar_lea.vmem [#allocation0], 16
    %v87 = vld [vmem:[%s86] sm:%s74]
    %s88 = sshll.u32 1, 1
    %s89 = ssub.s32 %s88, 1
    %s90 = smul.addr 1, 2
    %s91 = scalar_lea.vmem %s1, %s90
    %92 = vst [vmem:[%s91] sm:%s89] %v87

// kernel: _lambda_.16
$region0: #{_lambda_.16}
  #allocation0 [shape = 'u32[]', space=smem, size = 0x4, offset = 0x4, fixed_abs, tag = 'smem constant byte address 0x4 - core index']
  #allocation1 [shape = 'u32[144,128]{1,0:T(1,128)}', space=vmem, size = 0x12000, scoped, tag = 'internal scratch']
  %s0 = inlined_call_operand.vmem [shape: f32[32,360], index: 0, kind: input, shape index: {}]
  %s1 = inlined_call_operand.vmem [shape: f32[360,8], index: 1, kind: input, shape index: {}]
  %s2 = inlined_call_operand.vmem [shape: f32[1,360], index: 2, kind: input, shape index: {}]
  %s3 = inlined_call_operand.vmem [shape: f32[1,360], index: 3, kind: input, shape index: {}]
  %s4 = inlined_call_operand.vmem [shape: f32[32,8], index: 4, kind: output, shape index: {}]
  %s5 = sld [smem:[#allocation0]]
  $region26: #{_lambda_.16} parent=0
    _
  %s7 = ssub.s32 1, %s5
  %s8 = scalar_select 0, %s7, %s5
  // Predicated region
  $region2: #{_lambda_.16} parent=0 // pred_check
    _
  $region3: #{_lambda_.16} parent=0 // pred_check_branch
    %10 = sbr.rel (0) target = $region5
  $region4: #{_lambda_.16} parent=0 // pred_region
    _
  $region5: #{_lambda_.16} parent=0 // pred_fallthru
    _
  // Predicated region
  $region6: #{_lambda_.16} parent=0 // pred_check
    _
  $region7: #{_lambda_.16} parent=0 // pred_check_branch
    %12 = sbr.rel (0) target = $region9
  $region8: #{_lambda_.16} parent=0 // pred_region
    _
  $region9: #{_lambda_.16} parent=0 // pred_fallthru
    _
  // Predicated region
  $region10: #{_lambda_.16} parent=0 // pred_check
    _
  $region11: #{_lambda_.16} parent=0 // pred_check_branch
    %14 = sbr.rel (0) target = $region13
  $region12: #{_lambda_.16} parent=0 // pred_region
    _
  $region13: #{_lambda_.16} parent=0 // pred_fallthru
    _
  // Predicated region
  $region14: #{_lambda_.16} parent=0 // pred_check
    _
  $region15: #{_lambda_.16} parent=0 // pred_check_branch
    %16 = sbr.rel (0) target = $region17
  $region16: #{_lambda_.16} parent=0 // pred_region
    _
  $region17: #{_lambda_.16} parent=0 // pred_fallthru
    _
  %v17 = vld [vmem:[%s0] sm:$0xff]
  %v18 = vld [vmem:[%s0 + $0x8] sm:$0xff]
  %v19 = vld [vmem:[%s0 + $0x10] sm:$0xff]
  %v20 = vld [vmem:[%s0 + $0x18] sm:$0xff]
  %v21 = vld [vmem:[%s0 + $0x20] sm:$0xff]
  %v22 = vld [vmem:[%s0 + $0x28] sm:$0xff]
  %v23 = vld [vmem:[%s0 + $0x30] sm:$0xff]
  %v24 = vld [vmem:[%s0 + $0x38] sm:$0xff]
  %v25 = vld [vmem:[%s0 + $0x40] sm:$0xff]
  %v26 = vld [vmem:[%s0 + $0x48] sm:$0xff]
  %v27 = vld [vmem:[%s0 + $0x50] sm:$0xff]
  %v28 = vld [vmem:[%s0 + $0x58] sm:$0xff]
  %v29 = vld [vmem:[%s2] sm:$0x7]
  %v31 = vlaneseq
  %v32 = vshrl.u32 %v31, 7
  %v33 = vsub.s32 0, %v32
  %v34 = vrot.slane %v29, %v33
  %v35 = vlaneseq
  %v36 = vshrl.u32 %v35, 7
  %v37 = vsub.s32 1, %v36
  %v38 = vrot.slane %v29, %v37
  %v39 = vlaneseq
  %v40 = vshrl.u32 %v39, 7
  %v41 = vsub.s32 2, %v40
  %v42 = vrot.slane %v29, %v41
  %v46 = vmul.f32 %v17, %v34
  %v47 = vmul.f32 %v18, %v38
  %v48 = vmul.f32 %v19, %v42
  %v49 = vmul.f32 %v20, %v34
  %v50 = vmul.f32 %v21, %v38
  %v51 = vmul.f32 %v22, %v42
  %v52 = vmul.f32 %v23, %v34
  %v53 = vmul.f32 %v24, %v38
  %v54 = vmul.f32 %v25, %v42
  %v55 = vmul.f32 %v26, %v34
  %v56 = vmul.f32 %v27, %v38
  %v57 = vmul.f32 %v28, %v42
  %v58 = vld [vmem:[%s3] sm:$0x7]
  %v60 = vlaneseq
  %v61 = vshrl.u32 %v60, 7
  %v62 = vsub.s32 0, %v61
  %v63 = vrot.slane %v58, %v62
  %v64 = vlaneseq
  %v65 = vshrl.u32 %v64, 7
  %v66 = vsub.s32 1, %v65
  %v67 = vrot.slane %v58, %v66
  %v68 = vlaneseq
  %v69 = vshrl.u32 %v68, 7
  %v70 = vsub.s32 2, %v69
  %v71 = vrot.slane %v58, %v70
  %v75 = vadd.f32 %v46, %v63
  %v76 = vadd.f32 %v47, %v67
  %v77 = vadd.f32 %v48, %v71
  %v78 = vadd.f32 %v49, %v63
  %v79 = vadd.f32 %v50, %v67
  %v80 = vadd.f32 %v51, %v71
  %v81 = vadd.f32 %v52, %v63
  %v82 = vadd.f32 %v53, %v67
  %v83 = vadd.f32 %v54, %v71
  %v84 = vadd.f32 %v55, %v63
  %v85 = vadd.f32 %v56, %v67
  %v86 = vadd.f32 %v57, %v71
  %v87 = vmax.f32 %v75, 0.0
  %v88 = vmax.f32 %v76, 0.0
  %v89 = vmax.f32 %v77, 0.0
  %v90 = vmax.f32 %v78, 0.0
  %v91 = vmax.f32 %v79, 0.0
  %v92 = vmax.f32 %v80, 0.0
  %v93 = vmax.f32 %v81, 0.0
  %v94 = vmax.f32 %v82, 0.0
  %v95 = vmax.f32 %v83, 0.0
  %v96 = vmax.f32 %v84, 0.0
  %v97 = vmax.f32 %v85, 0.0
  %v98 = vmax.f32 %v86, 0.0
  %v99 = vld [vmem:[%s1] sm:$0xff]
  %v100 = vld [vmem:[%s1 + $0x8] sm:$0xff]
  %v101 = vld [vmem:[%s1 + $0x10] sm:$0xff]
  %v102 = vld [vmem:[%s1 + $0x18] sm:$0xff]
  %v103 = vld [vmem:[%s1 + $0x20] sm:$0xff]
  %v104 = vld [vmem:[%s1 + $0x28] sm:$0xff]
  %v105 = vld [vmem:[%s1 + $0x30] sm:$0xff]
  %v106 = vld [vmem:[%s1 + $0x38] sm:$0xff]
  %v107 = vld [vmem:[%s1 + $0x40] sm:$0xff]
  %v108 = vld [vmem:[%s1 + $0x48] sm:$0xff]
  %v109 = vld [vmem:[%s1 + $0x50] sm:$0xff]
  %v110 = vld [vmem:[%s1 + $0x58] sm:$0xff]
  %v111 = vld [vmem:[%s1 + $0x60] sm:$0xff]
  %v112 = vld [vmem:[%s1 + $0x68] sm:$0xff]
  %v113 = vld [vmem:[%s1 + $0x70] sm:$0xff]
  %v114 = vld [vmem:[%s1 + $0x78] sm:$0xff]
  %v115 = vld [vmem:[%s1 + $0x80] sm:$0xff]
  %v116 = vld [vmem:[%s1 + $0x88] sm:$0xff]
  %v117 = vld [vmem:[%s1 + $0x90] sm:$0xff]
  %v118 = vld [vmem:[%s1 + $0x98] sm:$0xff]
  %v119 = vld [vmem:[%s1 + $0xa0] sm:$0xff]
  %v120 = vld [vmem:[%s1 + $0xa8] sm:$0xff]
  %v121 = vld [vmem:[%s1 + $0xb0] sm:$0xff]
  %v122 = vld [vmem:[%s1 + $0xb8] sm:$0xff]
  %v123 = vld [vmem:[%s1 + $0xc0] sm:$0xff]
  %v124 = vld [vmem:[%s1 + $0xc8] sm:$0xff]
  %v125 = vld [vmem:[%s1 + $0xd0] sm:$0xff]
  %v126 = vld [vmem:[%s1 + $0xd8] sm:$0xff]
  %v127 = vld [vmem:[%s1 + $0xe0] sm:$0xff]
  %v128 = vld [vmem:[%s1 + $0xe8] sm:$0xff]
  %v129 = vld [vmem:[%s1 + $0xf0] sm:$0xff]
  %v130 = vld [vmem:[%s1 + $0xf8] sm:$0xff]
  %v131 = vld [vmem:[%s1 + $0x100] sm:$0xff]
  %v132 = vld [vmem:[%s1 + $0x108] sm:$0xff]
  %v133 = vld [vmem:[%s1 + $0x110] sm:$0xff]
  %v134 = vld [vmem:[%s1 + $0x118] sm:$0xff]
  %v135 = vld [vmem:[%s1 + $0x120] sm:$0xff]
  %v136 = vld [vmem:[%s1 + $0x128] sm:$0xff]
  %v137 = vld [vmem:[%s1 + $0x130] sm:$0xff]
  %v138 = vld [vmem:[%s1 + $0x138] sm:$0xff]
  %v139 = vld [vmem:[%s1 + $0x140] sm:$0xff]
  %v140 = vld [vmem:[%s1 + $0x148] sm:$0xff]
  %v141 = vld [vmem:[%s1 + $0x150] sm:$0xff]
  %v142 = vld [vmem:[%s1 + $0x158] sm:$0xff]
  %v143 = vld [vmem:[%s1 + $0x160] sm:$0xff]
  %vm144 = vcmask 850944
  %v146 = vsel %vm144, %v89, 0
  %v149 = vsel %vm144, %v92, 0
  %v152 = vsel %vm144, %v95, 0
  %v155 = vsel %vm144, %v98, 0
  %157 = vmatprep.subr.mxu0 0.0
  %158 = vmatpush1.msra.mxu0 %v114
  %159 = vmatprep.subr.mxu0 0.0
  %160 = vmatpush1.msra.mxu0 %v113
  %161 = vmatprep.subr.mxu0 0.0
  %162 = vmatpush1.msra.mxu0 %v112
  %163 = vmatprep.subr.mxu0 0.0
  %164 = vmatpush1.msra.mxu0 %v111
  %165 = vmatprep.subr.mxu0 0.0
  %166 = vmatpush1.msra.mxu0 %v110
  %167 = vmatprep.subr.mxu0 0.0
  %168 = vmatpush1.msra.mxu0 %v109
  %169 = vmatprep.subr.mxu0 0.0
  %170 = vmatpush1.msra.mxu0 %v108
  %171 = vmatprep.subr.mxu0 0.0
  %172 = vmatpush1.msra.mxu0 %v107
  %173 = vmatprep.subr.mxu0 0.0
  %174 = vmatpush1.msra.mxu0 %v106
  %175 = vmatprep.subr.mxu0 0.0
  %176 = vmatpush1.msra.mxu0 %v105
  %177 = vmatprep.subr.mxu0 0.0
  %178 = vmatpush1.msra.mxu0 %v104
  %179 = vmatprep.subr.mxu0 0.0
  %180 = vmatpush1.msra.mxu0 %v103
  %181 = vmatprep.subr.mxu0 0.0
  %182 = vmatpush1.msra.mxu0 %v102
  %183 = vmatprep.subr.mxu0 0.0
  %184 = vmatpush1.msra.mxu0 %v101
  %185 = vmatprep.subr.mxu0 0.0
  %186 = vmatpush1.msra.mxu0 %v100
  %187 = vmatprep.subr.mxu0 0.0
  %188 = vmatpush1.msra.mxu0 %v99
  %189 = vmatprep.subr.mxu0 0.0
  %190 = vmatpush2.msra.mxu0 %v130
  %191 = vmatprep.subr.mxu0 0.0
  %192 = vmatpush2.msra.mxu0 %v129
  %193 = vmatprep.subr.mxu0 0.0
  %194 = vmatpush2.msra.mxu0 %v128
  %195 = vmatprep.subr.mxu0 0.0
  %196 = vmatpush2.msra.mxu0 %v127
  %197 = vmatprep.subr.mxu0 0.0
  %198 = vmatpush2.msra.mxu0 %v126
  %199 = vmatprep.subr.mxu0 0.0
  %200 = vmatpush2.msra.mxu0 %v125
  %201 = vmatprep.subr.mxu0 0.0
  %202 = vmatpush2.msra.mxu0 %v124
  %203 = vmatprep.subr.mxu0 0.0
  %204 = vmatpush2.msra.mxu0 %v123
  %205 = vmatprep.subr.mxu0 0.0
  %206 = vmatpush2.msra.mxu0 %v122
  %207 = vmatprep.subr.mxu0 0.0
  %208 = vmatpush2.msra.mxu0 %v121
  %209 = vmatprep.subr.mxu0 0.0
  %210 = vmatpush2.msra.mxu0 %v120
  %211 = vmatprep.subr.mxu0 0.0
  %212 = vmatpush2.msra.mxu0 %v119
  %213 = vmatprep.subr.mxu0 0.0
  %214 = vmatpush2.msra.mxu0 %v118
  %215 = vmatprep.subr.mxu0 0.0
  %216 = vmatpush2.msra.mxu0 %v117
  %217 = vmatprep.subr.mxu0 0.0
  %218 = vmatpush2.msra.mxu0 %v116
  %219 = vmatprep.subr.mxu0 0.0
  %220 = vmatpush2.msra.mxu0 %v115
  %221 = vmatprep.mubr.f32.mxu0 %v88
  %222 = vmatmul.mubr.f32.gmra.mxu0 %v87
  %v223 = vpop.f32.mrf.mxu0
  %v224 = vadd.f32 0.0, %v223
  %v225 = vpop.f32.mrf.mxu0
  %226 = vmatprep.mubr.f32.mxu0 %v91
  %227 = vmatmul.mubr.f32.gmra.mxu0 %v90
  %v228 = vpop.f32.mrf.mxu0
  %v229 = vadd.f32 0.0, %v228
  %v230 = vpop.f32.mrf.mxu0
  %231 = vmatprep.mubr.f32.mxu0 %v94
  %232 = vmatmul.mubr.f32.gmra.mxu0 %v93
  %v233 = vpop.f32.mrf.mxu0
  %v234 = vadd.f32 0.0, %v233
  %v235 = vpop.f32.mrf.mxu0
  %236 = vmatprep.mubr.f32.mxu0 %v97
  %237 = vmatmul.mubr.f32.gmra.mxu0 %v96
  %v238 = vpop.f32.mrf.mxu0
  %v239 = vadd.f32 0.0, %v238
  %v240 = vpop.f32.mrf.mxu0
  %241 = vdwg.mxu0
  %242 = vmatprep.subr.mxu0 0.0
  %243 = vmatpush1.msra.mxu0 0.0
  %244 = vmatprep.subr.mxu0 0.0
  %245 = vmatpush1.msra.mxu0 0.0
  %246 = vmatprep.subr.mxu0 0.0
  %247 = vmatpush1.msra.mxu0 0.0
  %248 = vmatprep.subr.mxu0 0.0
  %249 = vmatpush1.msra.mxu0 %v143
  %250 = vmatprep.subr.mxu0 0.0
  %251 = vmatpush1.msra.mxu0 %v142
  %252 = vmatprep.subr.mxu0 0.0
  %253 = vmatpush1.msra.mxu0 %v141
  %254 = vmatprep.subr.mxu0 0.0
  %255 = vmatpush1.msra.mxu0 %v140
  %256 = vmatprep.subr.mxu0 0.0
  %257 = vmatpush1.msra.mxu0 %v139
  %258 = vmatprep.subr.mxu0 0.0
  %259 = vmatpush1.msra.mxu0 %v138
  %260 = vmatprep.subr.mxu0 0.0
  %261 = vmatpush1.msra.mxu0 %v137
  %262 = vmatprep.subr.mxu0 0.0
  %263 = vmatpush1.msra.mxu0 %v136
  %264 = vmatprep.subr.mxu0 0.0
  %265 = vmatpush1.msra.mxu0 %v135
  %266 = vmatprep.subr.mxu0 0.0
  %267 = vmatpush1.msra.mxu0 %v134
  %268 = vmatprep.subr.mxu0 0.0
  %269 = vmatpush1.msra.mxu0 %v133
  %270 = vmatprep.subr.mxu0 0.0
  %271 = vmatpush1.msra.mxu0 %v132
  %272 = vmatprep.subr.mxu0 0.0
  %273 = vmatpush1.msra.mxu0 %v131
  %274 = vmatprep.subr.mxu0 0.0
  %275 = vmatpush2.msra.mxu0 0.0
  %276 = vmatprep.subr.mxu0 0.0
  %277 = vmatpush2.msra.mxu0 0.0
  %278 = vmatprep.subr.mxu0 0.0
  %279 = vmatpush2.msra.mxu0 0.0
  %280 = vmatprep.subr.mxu0 0.0
  %281 = vmatpush2.msra.mxu0 0.0
  %282 = vmatprep.subr.mxu0 0.0
  %283 = vmatpush2.msra.mxu0 0.0
  %284 = vmatprep.subr.mxu0 0.0
  %285 = vmatpush2.msra.mxu0 0.0
  %286 = vmatprep.subr.mxu0 0.0
  %287 = vmatpush2.msra.mxu0 0.0
  %288 = vmatprep.subr.mxu0 0.0
  %289 = vmatpush2.msra.mxu0 0.0
  %290 = vmatprep.subr.mxu0 0.0
  %291 = vmatpush2.msra.mxu0 0.0
  %292 = vmatprep.subr.mxu0 0.0
  %293 = vmatpush2.msra.mxu0 0.0
  %294 = vmatprep.subr.mxu0 0.0
  %295 = vmatpush2.msra.mxu0 0.0
  %296 = vmatprep.subr.mxu0 0.0
  %297 = vmatpush2.msra.mxu0 0.0
  %298 = vmatprep.subr.mxu0 0.0
  %299 = vmatpush2.msra.mxu0 0.0
  %300 = vmatprep.subr.mxu0 0.0
  %301 = vmatpush2.msra.mxu0 0.0
  %302 = vmatprep.subr.mxu0 0.0
  %303 = vmatpush2.msra.mxu0 0.0
  %304 = vmatprep.subr.mxu0 0.0
  %305 = vmatpush2.msra.mxu0 0.0
  %306 = vmatprep.mubr.f32.mxu0 0.0
  %307 = vmatmul.mubr.f32.gmra.mxu0 %v146
  %v308 = vpop.f32.mrf.mxu0
  %v309 = vadd.f32 %v224, %v308
  %v310 = vpop.f32.mrf.mxu0
  %311 = vmatprep.mubr.f32.mxu0 0.0
  %312 = vmatmul.mubr.f32.gmra.mxu0 %v149
  %v313 = vpop.f32.mrf.mxu0
  %v314 = vadd.f32 %v229, %v313
  %v315 = vpop.f32.mrf.mxu0
  %316 = vmatprep.mubr.f32.mxu0 0.0
  %317 = vmatmul.mubr.f32.gmra.mxu0 %v152
  %v318 = vpop.f32.mrf.mxu0
  %v319 = vadd.f32 %v234, %v318
  %v320 = vpop.f32.mrf.mxu0
  %321 = vmatprep.mubr.f32.mxu0 0.0
  %322 = vmatmul.mubr.f32.gmra.mxu0 %v155
  %v323 = vpop.f32.mrf.mxu0
  %v324 = vadd.f32 %v239, %v323
  %v325 = vpop.f32.mrf.mxu0
  %326 = vdwg.mxu0
  %vm327 = vcmask 64512
  %328 = vst.msk [vmem:[%s4] sm:$0xff] %vm327, %v309
  %329 = vst.msk [vmem:[%s4 + $0x8] sm:$0xff] %vm327, %v314
  %330 = vst.msk [vmem:[%s4 + $0x10] sm:$0xff] %vm327, %v319
  %331 = vst.msk [vmem:[%s4 + $0x18] sm:$0xff] %vm327, %v324
  // Predicated region
  $region18: #{_lambda_.16} parent=0 // pred_check
    _
  $region19: #{_lambda_.16} parent=0 // pred_check_branch
    %333 = sbr.rel (0) target = $region21
  $region20: #{_lambda_.16} parent=0 // pred_region
    _
  $region21: #{_lambda_.16} parent=0 // pred_fallthru
    _
  // Predicated region
  $region22: #{_lambda_.16} parent=0 // pred_check
    _
  $region23: #{_lambda_.16} parent=0 // pred_check_branch
    %335 = sbr.rel (0) target = $region25
  $region24: #{_lambda_.16} parent=0 // pred_region
    _
  $region25: #{_lambda_.16} parent=0 // pred_fallthru
    _

// kernel: tile.58
$region0: #{tile.58}
  #allocation0 [shape = 's32[1]{0}', space=sflag, size = 0x4, scoped, tag = 'scoped memory for tile.58']
  %s0 = inlined_call_operand.vmem [shape: f32[48], index: 0, kind: input, shape index: {}]
  %s1 = inlined_call_operand.vmem [shape: f32[9,48], index: 1, kind: output, shape index: {}]
  // Predicated region
  $region2: #{tile.58} parent=0 // pred_check
    _
  $region3: #{tile.58} parent=0 // pred_check_branch
    %3 = sbr.rel (0) target = $region5
  $region4: #{tile.58} parent=0 // pred_region
    _
  $region5: #{tile.58} parent=0 // pred_fallthru
    _
  %v4 = vld [vmem:[%s0] ss:$0 sm:$0xff]
  %5 = vst [vmem:[%s1] sm:$0xff] %v4
  %s6 = scalar_lea.vmem %s1, 8
  %7 = vst [vmem:[%s6] sm:$0xff] %v4

// kernel: tile.62
$region0: #{tile.62}
  %s0 = inlined_call_operand.vmem [shape: f32[9,48], index: 0, kind: input, shape index: {}]
  %s1 = inlined_call_operand.vmem [shape: f32[1,432], index: 1, kind: output, shape index: {}]
  $region1: #{tile.62} parent=0
    #allocation0 [shape = 'u8[16384]{0}', space=vmem, size = 0x4000, scoped, tag = 'scoped mem for output reshape']
    %s2 = smov 3
    %v3 = vld [vmem:[%s0] ss:$8 sm:%s2]
    %vm4 = vcmask 392192
    %5 = vst.msk [vmem:[#allocation0] ss:$24 sm:$0x3] %vm4, %v3
    %s6 = scalar_lea.vmem %s0, 5
    %v7 = vld [vmem:[%s6] sm:$0x1]
    %s8 = scalar_lea.vmem %s0, 5
    %v9 = vld [vmem:[%s8] sm:$0x1]
    %vm10 = vcmask 130048
    %v11 = vsel %vm10, %v9, %v7
    %12 = vrot.lane.b32.xlu0 %v11, 112
    %v13 = vpop.permute.xlu0 %12
    %vm14 = vcmask 261120
    %s15 = scalar_lea.vmem [#allocation0], 16
    %16 = vst.msk [vmem:[%s15] sm:$0x1] %vm14, %v13
    %vm17 = vcmask 1048448
    %s18 = scalar_lea.vmem [#allocation0], 8
    %19 = vst.msk [vmem:[%s18] sm:$0x1] %vm17, %v13
    %s20 = scalar_lea.vmem %s0, 2
    %v21 = vld [vmem:[%s20] sm:$0x1]
    %s22 = scalar_lea.vmem %s0, 2
    %v23 = vld [vmem:[%s22] sm:$0x1]
    %vm24 = vcmask 261120
    %v25 = vsel %vm24, %v23, %v21
    %26 = vrot.lane.b32.xlu0 %v25, 96
    %v27 = vpop.permute.xlu0 %26
    %vm28 = vcmask 130048
    %s29 = scalar_lea.vmem [#allocation0], 8
    %30 = vst.msk [vmem:[%s29] sm:$0x1] %vm28, %v27
    %vm31 = vcmask 1048320
    %32 = vst.msk [vmem:[#allocation0] sm:$0x1] %vm31, %v27
    %s33 = scalar_lea.vmem %s0, 7
    %v34 = vld [vmem:[%s33] sm:$0x1]
    %35 = vrot.lane.b32.xlu0 %v34, 80
    %v36 = vpop.permute.xlu0 %35
    %vm37 = vcmask 1048192
    %s38 = scalar_lea.vmem [#allocation0], 16
    %39 = vst.msk [vmem:[%s38] sm:$0x1] %vm37, %v36
    %s40 = scalar_lea.vmem %s0, 4
    %v41 = vld [vmem:[%s40] sm:$0x1]
    %42 = vrot.lane.b32.xlu0 %v41, 64
    %v43 = vpop.permute.xlu0 %42
    %vm44 = vcmask 916992
    %s45 = scalar_lea.vmem [#allocation0], 8
    %46 = vst.msk [vmem:[%s45] sm:$0x1] %vm44, %v43
    %s47 = scalar_lea.vmem %s0, 1
    %v48 = vld [vmem:[%s47] sm:$0x1]
    %49 = vrot.lane.b32.xlu0 %v48, 48
    %v50 = vpop.permute.xlu0 %49
    %vm51 = vcmask 785792
    %52 = vst.msk [vmem:[#allocation0] sm:$0x1] %vm51, %v50
    %s53 = scalar_lea.vmem %s0, 6
    %v54 = vld [vmem:[%s53] sm:$0x1]
    %55 = vrot.lane.b32.xlu0 %v54, 32
    %v56 = vpop.permute.xlu0 %55
    %vm57 = vcmask 654592
    %s58 = scalar_lea.vmem [#allocation0], 16
    %59 = vst.msk [vmem:[%s58] sm:$0x1] %vm57, %v56
    %s60 = scalar_lea.vmem %s0, 3
    %v61 = vld [vmem:[%s60] sm:$0x1]
    %62 = vrot.lane.b32.xlu0 %v61, 16
    %v63 = vpop.permute.xlu0 %62
    %vm64 = vcmask 523392
    %s65 = scalar_lea.vmem [#allocation0], 8
    %66 = vst.msk [vmem:[%s65] sm:$0x1] %vm64, %v63
    %s68 = sshll.u32 1, 1
    %s69 = ssub.s32 %s68, 1
    %v71 = vld [vmem:[#allocation0] sm:%s69]
    %s72 = sshll.u32 1, 1
    %s73 = ssub.s32 %s72, 1
    %74 = vst [vmem:[%s1] sm:%s73] %v71
    %s75 = scalar_lea.vmem [#allocation0], 8
    %v76 = vld [vmem:[%s75] sm:%s69]
    %s77 = sshll.u32 1, 1
    %s78 = ssub.s32 %s77, 1
    %s79 = scalar_lea.vmem %s1, 1
    %80 = vst [vmem:[%s79] sm:%s78] %v76
    %s81 = scalar_lea.vmem [#allocation0], 16
    %v82 = vld [vmem:[%s81] sm:%s69]
    %s83 = sshll.u32 1, 1
    %s84 = ssub.s32 %s83, 1
    %s85 = smul.addr 1, 2
    %s86 = scalar_lea.vmem %s1, %s85
    %87 = vst [vmem:[%s86] sm:%s84] %v82
    %s88 = scalar_lea.vmem [#allocation0], 24
    %v89 = vld [vmem:[%s88] sm:%s69]
    %s90 = sshll.u32 1, 1
    %s91 = ssub.s32 %s90, 1
    %s92 = smul.addr 1, 3
    %s93 = scalar_lea.vmem %s1, %s92
    %94 = vst [vmem:[%s93] sm:%s91] %v89

// kernel: _lambda_.17
$region0: #{_lambda_.17}
  #allocation0 [shape = 'u32[]', space=smem, size = 0x4, offset = 0x4, fixed_abs, tag = 'smem constant byte address 0x4 - core index']
  #allocation1 [shape = 'u32[144,128]{1,0:T(1,128)}', space=vmem, size = 0x12000, scoped, tag = 'internal scratch']
  %s0 = inlined_call_operand.vmem [shape: f32[32,432], index: 0, kind: input, shape index: {}]
  %s1 = inlined_call_operand.vmem [shape: f32[432,8], index: 1, kind: input, shape index: {}]
  %s2 = inlined_call_operand.vmem [shape: f32[1,432], index: 2, kind: input, shape index: {}]
  %s3 = inlined_call_operand.vmem [shape: f32[1,432], index: 3, kind: input, shape index: {}]
  %s4 = inlined_call_operand.vmem [shape: f32[32,8], index: 4, kind: output, shape index: {}]
  %s5 = sld [smem:[#allocation0]]
  $region26: #{_lambda_.17} parent=0
    _
  %s7 = ssub.s32 1, %s5
  %s8 = scalar_select 0, %s7, %s5
  // Predicated region
  $region2: #{_lambda_.17} parent=0 // pred_check
    _
  $region3: #{_lambda_.17} parent=0 // pred_check_branch
    %10 = sbr.rel (0) target = $region5
  $region4: #{_lambda_.17} parent=0 // pred_region
    _
  $region5: #{_lambda_.17} parent=0 // pred_fallthru
    _
  // Predicated region
  $region6: #{_lambda_.17} parent=0 // pred_check
    _
  $region7: #{_lambda_.17} parent=0 // pred_check_branch
    %12 = sbr.rel (0) target = $region9
  $region8: #{_lambda_.17} parent=0 // pred_region
    _
  $region9: #{_lambda_.17} parent=0 // pred_fallthru
    _
  // Predicated region
  $region10: #{_lambda_.17} parent=0 // pred_check
    _
  $region11: #{_lambda_.17} parent=0 // pred_check_branch
    %14 = sbr.rel (0) target = $region13
  $region12: #{_lambda_.17} parent=0 // pred_region
    _
  $region13: #{_lambda_.17} parent=0 // pred_fallthru
    _
  // Predicated region
  $region14: #{_lambda_.17} parent=0 // pred_check
    _
  $region15: #{_lambda_.17} parent=0 // pred_check_branch
    %16 = sbr.rel (0) target = $region17
  $region16: #{_lambda_.17} parent=0 // pred_region
    _
  $region17: #{_lambda_.17} parent=0 // pred_fallthru
    _
  %v17 = vld [vmem:[%s0] sm:$0xff]
  %v18 = vld [vmem:[%s0 + $0x8] sm:$0xff]
  %v19 = vld [vmem:[%s0 + $0x10] sm:$0xff]
  %v20 = vld [vmem:[%s0 + $0x18] sm:$0xff]
  %v21 = vld [vmem:[%s0 + $0x20] sm:$0xff]
  %v22 = vld [vmem:[%s0 + $0x28] sm:$0xff]
  %v23 = vld [vmem:[%s0 + $0x30] sm:$0xff]
  %v24 = vld [vmem:[%s0 + $0x38] sm:$0xff]
  %v25 = vld [vmem:[%s0 + $0x40] sm:$0xff]
  %v26 = vld [vmem:[%s0 + $0x48] sm:$0xff]
  %v27 = vld [vmem:[%s0 + $0x50] sm:$0xff]
  %v28 = vld [vmem:[%s0 + $0x58] sm:$0xff]
  %v29 = vld [vmem:[%s0 + $0x60] sm:$0xff]
  %v30 = vld [vmem:[%s0 + $0x68] sm:$0xff]
  %v31 = vld [vmem:[%s0 + $0x70] sm:$0xff]
  %v32 = vld [vmem:[%s0 + $0x78] sm:$0xff]
  %v33 = vld [vmem:[%s2] sm:$0xf]
  %v35 = vlaneseq
  %v36 = vshrl.u32 %v35, 7
  %v37 = vsub.s32 0, %v36
  %v38 = vrot.slane %v33, %v37
  %v39 = vlaneseq
  %v40 = vshrl.u32 %v39, 7
  %v41 = vsub.s32 1, %v40
  %v42 = vrot.slane %v33, %v41
  %v43 = vlaneseq
  %v44 = vshrl.u32 %v43, 7
  %v45 = vsub.s32 2, %v44
  %v46 = vrot.slane %v33, %v45
  %v47 = vlaneseq
  %v48 = vshrl.u32 %v47, 7
  %v49 = vsub.s32 3, %v48
  %v50 = vrot.slane %v33, %v49
  %v55 = vmul.f32 %v17, %v38
  %v56 = vmul.f32 %v18, %v42
  %v57 = vmul.f32 %v19, %v46
  %v58 = vmul.f32 %v20, %v50
  %v59 = vmul.f32 %v21, %v38
  %v60 = vmul.f32 %v22, %v42
  %v61 = vmul.f32 %v23, %v46
  %v62 = vmul.f32 %v24, %v50
  %v63 = vmul.f32 %v25, %v38
  %v64 = vmul.f32 %v26, %v42
  %v65 = vmul.f32 %v27, %v46
  %v66 = vmul.f32 %v28, %v50
  %v67 = vmul.f32 %v29, %v38
  %v68 = vmul.f32 %v30, %v42
  %v69 = vmul.f32 %v31, %v46
  %v70 = vmul.f32 %v32, %v50
  %v71 = vld [vmem:[%s3] sm:$0xf]
  %v73 = vlaneseq
  %v74 = vshrl.u32 %v73, 7
  %v75 = vsub.s32 0, %v74
  %v76 = vrot.slane %v71, %v75
  %v77 = vlaneseq
  %v78 = vshrl.u32 %v77, 7
  %v79 = vsub.s32 1, %v78
  %v80 = vrot.slane %v71, %v79
  %v81 = vlaneseq
  %v82 = vshrl.u32 %v81, 7
  %v83 = vsub.s32 2, %v82
  %v84 = vrot.slane %v71, %v83
  %v85 = vlaneseq
  %v86 = vshrl.u32 %v85, 7
  %v87 = vsub.s32 3, %v86
  %v88 = vrot.slane %v71, %v87
  %v93 = vadd.f32 %v55, %v76
  %v94 = vadd.f32 %v56, %v80
  %v95 = vadd.f32 %v57, %v84
  %v96 = vadd.f32 %v58, %v88
  %v97 = vadd.f32 %v59, %v76
  %v98 = vadd.f32 %v60, %v80
  %v99 = vadd.f32 %v61, %v84
  %v100 = vadd.f32 %v62, %v88
  %v101 = vadd.f32 %v63, %v76
  %v102 = vadd.f32 %v64, %v80
  %v103 = vadd.f32 %v65, %v84
  %v104 = vadd.f32 %v66, %v88
  %v105 = vadd.f32 %v67, %v76
  %v106 = vadd.f32 %v68, %v80
  %v107 = vadd.f32 %v69, %v84
  %v108 = vadd.f32 %v70, %v88
  %v109 = vmax.f32 %v93, 0.0
  %v110 = vmax.f32 %v94, 0.0
  %v111 = vmax.f32 %v95, 0.0
  %v112 = vmax.f32 %v96, 0.0
  %v113 = vmax.f32 %v97, 0.0
  %v114 = vmax.f32 %v98, 0.0
  %v115 = vmax.f32 %v99, 0.0
  %v116 = vmax.f32 %v100, 0.0
  %v117 = vmax.f32 %v101, 0.0
  %v118 = vmax.f32 %v102, 0.0
  %v119 = vmax.f32 %v103, 0.0
  %v120 = vmax.f32 %v104, 0.0
  %v121 = vmax.f32 %v105, 0.0
  %v122 = vmax.f32 %v106, 0.0
  %v123 = vmax.f32 %v107, 0.0
  %v124 = vmax.f32 %v108, 0.0
  %v125 = vld [vmem:[%s1] sm:$0xff]
  %v126 = vld [vmem:[%s1 + $0x8] sm:$0xff]
  %v127 = vld [vmem:[%s1 + $0x10] sm:$0xff]
  %v128 = vld [vmem:[%s1 + $0x18] sm:$0xff]
  %v129 = vld [vmem:[%s1 + $0x20] sm:$0xff]
  %v130 = vld [vmem:[%s1 + $0x28] sm:$0xff]
  %v131 = vld [vmem:[%s1 + $0x30] sm:$0xff]
  %v132 = vld [vmem:[%s1 + $0x38] sm:$0xff]
  %v133 = vld [vmem:[%s1 + $0x40] sm:$0xff]
  %v134 = vld [vmem:[%s1 + $0x48] sm:$0xff]
  %v135 = vld [vmem:[%s1 + $0x50] sm:$0xff]
  %v136 = vld [vmem:[%s1 + $0x58] sm:$0xff]
  %v137 = vld [vmem:[%s1 + $0x60] sm:$0xff]
  %v138 = vld [vmem:[%s1 + $0x68] sm:$0xff]
  %v139 = vld [vmem:[%s1 + $0x70] sm:$0xff]
  %v140 = vld [vmem:[%s1 + $0x78] sm:$0xff]
  %v141 = vld [vmem:[%s1 + $0x80] sm:$0xff]
  %v142 = vld [vmem:[%s1 + $0x88] sm:$0xff]
  %v143 = vld [vmem:[%s1 + $0x90] sm:$0xff]
  %v144 = vld [vmem:[%s1 + $0x98] sm:$0xff]
  %v145 = vld [vmem:[%s1 + $0xa0] sm:$0xff]
  %v146 = vld [vmem:[%s1 + $0xa8] sm:$0xff]
  %v147 = vld [vmem:[%s1 + $0xb0] sm:$0xff]
  %v148 = vld [vmem:[%s1 + $0xb8] sm:$0xff]
  %v149 = vld [vmem:[%s1 + $0xc0] sm:$0xff]
  %v150 = vld [vmem:[%s1 + $0xc8] sm:$0xff]
  %v151 = vld [vmem:[%s1 + $0xd0] sm:$0xff]
  %v152 = vld [vmem:[%s1 + $0xd8] sm:$0xff]
  %v153 = vld [vmem:[%s1 + $0xe0] sm:$0xff]
  %v154 = vld [vmem:[%s1 + $0xe8] sm:$0xff]
  %v155 = vld [vmem:[%s1 + $0xf0] sm:$0xff]
  %v156 = vld [vmem:[%s1 + $0xf8] sm:$0xff]
  %v157 = vld [vmem:[%s1 + $0x100] sm:$0xff]
  %v158 = vld [vmem:[%s1 + $0x108] sm:$0xff]
  %v159 = vld [vmem:[%s1 + $0x110] sm:$0xff]
  %v160 = vld [vmem:[%s1 + $0x118] sm:$0xff]
  %v161 = vld [vmem:[%s1 + $0x120] sm:$0xff]
  %v162 = vld [vmem:[%s1 + $0x128] sm:$0xff]
  %v163 = vld [vmem:[%s1 + $0x130] sm:$0xff]
  %v164 = vld [vmem:[%s1 + $0x138] sm:$0xff]
  %v165 = vld [vmem:[%s1 + $0x140] sm:$0xff]
  %v166 = vld [vmem:[%s1 + $0x148] sm:$0xff]
  %v167 = vld [vmem:[%s1 + $0x150] sm:$0xff]
  %v168 = vld [vmem:[%s1 + $0x158] sm:$0xff]
  %v169 = vld [vmem:[%s1 + $0x160] sm:$0xff]
  %v170 = vld [vmem:[%s1 + $0x168] sm:$0xff]
  %v171 = vld [vmem:[%s1 + $0x170] sm:$0xff]
  %v172 = vld [vmem:[%s1 + $0x178] sm:$0xff]
  %v173 = vld [vmem:[%s1 + $0x180] sm:$0xff]
  %v174 = vld [vmem:[%s1 + $0x188] sm:$0xff]
  %v175 = vld [vmem:[%s1 + $0x190] sm:$0xff]
  %v176 = vld [vmem:[%s1 + $0x198] sm:$0xff]
  %v177 = vld [vmem:[%s1 + $0x1a0] sm:$0xff]
  %v178 = vld [vmem:[%s1 + $0x1a8] sm:$0xff]
  %vm179 = vcmask 392192
  %v181 = vsel %vm179, %v112, 0
  %v184 = vsel %vm179, %v116, 0
  %v187 = vsel %vm179, %v120, 0
  %v190 = vsel %vm179, %v124, 0
  %192 = vmatprep.subr.mxu0 0.0
  %193 = vmatpush1.msra.mxu0 %v140
  %194 = vmatprep.subr.mxu0 0.0
  %195 = vmatpush1.msra.mxu0 %v139
  %196 = vmatprep.subr.mxu0 0.0
  %197 = vmatpush1.msra.mxu0 %v138
  %198 = vmatprep.subr.mxu0 0.0
  %199 = vmatpush1.msra.mxu0 %v137
  %200 = vmatprep.subr.mxu0 0.0
  %201 = vmatpush1.msra.mxu0 %v136
  %202 = vmatprep.subr.mxu0 0.0
  %203 = vmatpush1.msra.mxu0 %v135
  %204 = vmatprep.subr.mxu0 0.0
  %205 = vmatpush1.msra.mxu0 %v134
  %206 = vmatprep.subr.mxu0 0.0
  %207 = vmatpush1.msra.mxu0 %v133
  %208 = vmatprep.subr.mxu0 0.0
  %209 = vmatpush1.msra.mxu0 %v132
  %210 = vmatprep.subr.mxu0 0.0
  %211 = vmatpush1.msra.mxu0 %v131
  %212 = vmatprep.subr.mxu0 0.0
  %213 = vmatpush1.msra.mxu0 %v130
  %214 = vmatprep.subr.mxu0 0.0
  %215 = vmatpush1.msra.mxu0 %v129
  %216 = vmatprep.subr.mxu0 0.0
  %217 = vmatpush1.msra.mxu0 %v128
  %218 = vmatprep.subr.mxu0 0.0
  %219 = vmatpush1.msra.mxu0 %v127
  %220 = vmatprep.subr.mxu0 0.0
  %221 = vmatpush1.msra.mxu0 %v126
  %222 = vmatprep.subr.mxu0 0.0
  %223 = vmatpush1.msra.mxu0 %v125
  %224 = vmatprep.subr.mxu0 0.0
  %225 = vmatpush2.msra.mxu0 %v156
  %226 = vmatprep.subr.mxu0 0.0
  %227 = vmatpush2.msra.mxu0 %v155
  %228 = vmatprep.subr.mxu0 0.0
  %229 = vmatpush2.msra.mxu0 %v154
  %230 = vmatprep.subr.mxu0 0.0
  %231 = vmatpush2.msra.mxu0 %v153
  %232 = vmatprep.subr.mxu0 0.0
  %233 = vmatpush2.msra.mxu0 %v152
  %234 = vmatprep.subr.mxu0 0.0
  %235 = vmatpush2.msra.mxu0 %v151
  %236 = vmatprep.subr.mxu0 0.0
  %237 = vmatpush2.msra.mxu0 %v150
  %238 = vmatprep.subr.mxu0 0.0
  %239 = vmatpush2.msra.mxu0 %v149
  %240 = vmatprep.subr.mxu0 0.0
  %241 = vmatpush2.msra.mxu0 %v148
  %242 = vmatprep.subr.mxu0 0.0
  %243 = vmatpush2.msra.mxu0 %v147
  %244 = vmatprep.subr.mxu0 0.0
  %245 = vmatpush2.msra.mxu0 %v146
  %246 = vmatprep.subr.mxu0 0.0
  %247 = vmatpush2.msra.mxu0 %v145
  %248 = vmatprep.subr.mxu0 0.0
  %249 = vmatpush2.msra.mxu0 %v144
  %250 = vmatprep.subr.mxu0 0.0
  %251 = vmatpush2.msra.mxu0 %v143
  %252 = vmatprep.subr.mxu0 0.0
  %253 = vmatpush2.msra.mxu0 %v142
  %254 = vmatprep.subr.mxu0 0.0
  %255 = vmatpush2.msra.mxu0 %v141
  %256 = vmatprep.mubr.f32.mxu0 %v110
  %257 = vmatmul.mubr.f32.gmra.mxu0 %v109
  %v258 = vpop.f32.mrf.mxu0
  %v259 = vadd.f32 0.0, %v258
  %v260 = vpop.f32.mrf.mxu0
  %261 = vmatprep.mubr.f32.mxu0 %v114
  %262 = vmatmul.mubr.f32.gmra.mxu0 %v113
  %v263 = vpop.f32.mrf.mxu0
  %v264 = vadd.f32 0.0, %v263
  %v265 = vpop.f32.mrf.mxu0
  %266 = vmatprep.mubr.f32.mxu0 %v118
  %267 = vmatmul.mubr.f32.gmra.mxu0 %v117
  %v268 = vpop.f32.mrf.mxu0
  %v269 = vadd.f32 0.0, %v268
  %v270 = vpop.f32.mrf.mxu0
  %271 = vmatprep.mubr.f32.mxu0 %v122
  %272 = vmatmul.mubr.f32.gmra.mxu0 %v121
  %v273 = vpop.f32.mrf.mxu0
  %v274 = vadd.f32 0.0, %v273
  %v275 = vpop.f32.mrf.mxu0
  %276 = vdwg.mxu0
  %277 = vmatprep.subr.mxu0 0.0
  %278 = vmatpush1.msra.mxu0 %v172
  %279 = vmatprep.subr.mxu0 0.0
  %280 = vmatpush1.msra.mxu0 %v171
  %281 = vmatprep.subr.mxu0 0.0
  %282 = vmatpush1.msra.mxu0 %v170
  %283 = vmatprep.subr.mxu0 0.0
  %284 = vmatpush1.msra.mxu0 %v169
  %285 = vmatprep.subr.mxu0 0.0
  %286 = vmatpush1.msra.mxu0 %v168
  %287 = vmatprep.subr.mxu0 0.0
  %288 = vmatpush1.msra.mxu0 %v167
  %289 = vmatprep.subr.mxu0 0.0
  %290 = vmatpush1.msra.mxu0 %v166
  %291 = vmatprep.subr.mxu0 0.0
  %292 = vmatpush1.msra.mxu0 %v165
  %293 = vmatprep.subr.mxu0 0.0
  %294 = vmatpush1.msra.mxu0 %v164
  %295 = vmatprep.subr.mxu0 0.0
  %296 = vmatpush1.msra.mxu0 %v163
  %297 = vmatprep.subr.mxu0 0.0
  %298 = vmatpush1.msra.mxu0 %v162
  %299 = vmatprep.subr.mxu0 0.0
  %300 = vmatpush1.msra.mxu0 %v161
  %301 = vmatprep.subr.mxu0 0.0
  %302 = vmatpush1.msra.mxu0 %v160
  %303 = vmatprep.subr.mxu0 0.0
  %304 = vmatpush1.msra.mxu0 %v159
  %305 = vmatprep.subr.mxu0 0.0
  %306 = vmatpush1.msra.mxu0 %v158
  %307 = vmatprep.subr.mxu0 0.0
  %308 = vmatpush1.msra.mxu0 %v157
  %309 = vmatprep.subr.mxu0 0.0
  %310 = vmatpush2.msra.mxu0 0.0
  %311 = vmatprep.subr.mxu0 0.0
  %312 = vmatpush2.msra.mxu0 0.0
  %313 = vmatprep.subr.mxu0 0.0
  %314 = vmatpush2.msra.mxu0 0.0
  %315 = vmatprep.subr.mxu0 0.0
  %316 = vmatpush2.msra.mxu0 0.0
  %317 = vmatprep.subr.mxu0 0.0
  %318 = vmatpush2.msra.mxu0 0.0
  %319 = vmatprep.subr.mxu0 0.0
  %320 = vmatpush2.msra.mxu0 0.0
  %321 = vmatprep.subr.mxu0 0.0
  %322 = vmatpush2.msra.mxu0 0.0
  %323 = vmatprep.subr.mxu0 0.0
  %324 = vmatpush2.msra.mxu0 0.0
  %325 = vmatprep.subr.mxu0 0.0
  %326 = vmatpush2.msra.mxu0 0.0
  %327 = vmatprep.subr.mxu0 0.0
  %328 = vmatpush2.msra.mxu0 0.0
  %329 = vmatprep.subr.mxu0 0.0
  %330 = vmatpush2.msra.mxu0 %v178
  %331 = vmatprep.subr.mxu0 0.0
  %332 = vmatpush2.msra.mxu0 %v177
  %333 = vmatprep.subr.mxu0 0.0
  %334 = vmatpush2.msra.mxu0 %v176
  %335 = vmatprep.subr.mxu0 0.0
  %336 = vmatpush2.msra.mxu0 %v175
  %337 = vmatprep.subr.mxu0 0.0
  %338 = vmatpush2.msra.mxu0 %v174
  %339 = vmatprep.subr.mxu0 0.0
  %340 = vmatpush2.msra.mxu0 %v173
  %341 = vmatprep.mubr.f32.mxu0 %v181
  %342 = vmatmul.mubr.f32.gmra.mxu0 %v111
  %v343 = vpop.f32.mrf.mxu0
  %v344 = vadd.f32 %v259, %v343
  %v345 = vpop.f32.mrf.mxu0
  %346 = vmatprep.mubr.f32.mxu0 %v184
  %347 = vmatmul.mubr.f32.gmra.mxu0 %v115
  %v348 = vpop.f32.mrf.mxu0
  %v349 = vadd.f32 %v264, %v348
  %v350 = vpop.f32.mrf.mxu0
  %351 = vmatprep.mubr.f32.mxu0 %v187
  %352 = vmatmul.mubr.f32.gmra.mxu0 %v119
  %v353 = vpop.f32.mrf.mxu0
  %v354 = vadd.f32 %v269, %v353
  %v355 = vpop.f32.mrf.mxu0
  %356 = vmatprep.mubr.f32.mxu0 %v190
  %357 = vmatmul.mubr.f32.gmra.mxu0 %v123
  %v358 = vpop.f32.mrf.mxu0
  %v359 = vadd.f32 %v274, %v358
  %v360 = vpop.f32.mrf.mxu0
  %361 = vdwg.mxu0
  %vm362 = vcmask 64512
  %363 = vst.msk [vmem:[%s4] sm:$0xff] %vm362, %v344
  %364 = vst.msk [vmem:[%s4 + $0x8] sm:$0xff] %vm362, %v349
  %365 = vst.msk [vmem:[%s4 + $0x10] sm:$0xff] %vm362, %v354
  %366 = vst.msk [vmem:[%s4 + $0x18] sm:$0xff] %vm362, %v359
  // Predicated region
  $region18: #{_lambda_.17} parent=0 // pred_check
    _
  $region19: #{_lambda_.17} parent=0 // pred_check_branch
    %368 = sbr.rel (0) target = $region21
  $region20: #{_lambda_.17} parent=0 // pred_region
    _
  $region21: #{_lambda_.17} parent=0 // pred_fallthru
    _
  // Predicated region
  $region22: #{_lambda_.17} parent=0 // pred_check
    _
  $region23: #{_lambda_.17} parent=0 // pred_check_branch
    %370 = sbr.rel (0) target = $region25
  $region24: #{_lambda_.17} parent=0 // pred_region
    _
  $region25: #{_lambda_.17} parent=0 // pred_fallthru
    _

// kernel: _lambda_.18
$region0: #{_lambda_.18}
  #allocation0 [shape = 'u32[]', space=smem, size = 0x4, offset = 0x4, fixed_abs, tag = 'smem constant byte address 0x4 - core index']
  #allocation1 [shape = 'u32[144,128]{1,0:T(1,128)}', space=vmem, size = 0x12000, scoped, tag = 'internal scratch']
  %s0 = inlined_call_operand.vmem [shape: f32[1,56], index: 0, kind: input, shape index: {}]
  %s1 = inlined_call_operand.vmem [shape: f32[1,56], index: 1, kind: input, shape index: {}]
  %s2 = inlined_call_operand.vmem [shape: f32[2,56], index: 2, kind: input, shape index: {}]
  %s3 = inlined_call_operand.vmem [shape: f32[2,56], index: 3, kind: input, shape index: {}]
  %s4 = inlined_call_operand.vmem [shape: f32[2,56], index: 4, kind: input, shape index: {}]
  %s5 = inlined_call_operand.vmem [shape: f32[2,56], index: 5, kind: input, shape index: {}]
  %s6 = inlined_call_operand.vmem [shape: f32[2,56], index: 6, kind: input, shape index: {}]
  %s7 = inlined_call_operand.vmem [shape: f32[2,56], index: 7, kind: input, shape index: {}]
  %s8 = inlined_call_operand.vmem [shape: f32[2,56], index: 8, kind: input, shape index: {}]
  %s9 = inlined_call_operand.vmem [shape: f32[2,56], index: 9, kind: input, shape index: {}]
  %s10 = inlined_call_operand.vmem [shape: f32[2,56], index: 10, kind: input, shape index: {}]
  %s11 = inlined_call_operand.vmem [shape: f32[2,56], index: 11, kind: output, shape index: {}]
  %s12 = sld [smem:[#allocation0]]
  $region54: #{_lambda_.18} parent=0
    _
  %s14 = ssub.s32 1, %s12
  %s15 = scalar_select 0, %s14, %s12
  // Predicated region
  $region2: #{_lambda_.18} parent=0 // pred_check
    _
  $region3: #{_lambda_.18} parent=0 // pred_check_branch
    %17 = sbr.rel (0) target = $region5
  $region4: #{_lambda_.18} parent=0 // pred_region
    _
  $region5: #{_lambda_.18} parent=0 // pred_fallthru
    _
  // Predicated region
  $region6: #{_lambda_.18} parent=0 // pred_check
    _
  $region7: #{_lambda_.18} parent=0 // pred_check_branch
    %19 = sbr.rel (0) target = $region9
  $region8: #{_lambda_.18} parent=0 // pred_region
    _
  $region9: #{_lambda_.18} parent=0 // pred_fallthru
    _
  // Predicated region
  $region10: #{_lambda_.18} parent=0 // pred_check
    _
  $region11: #{_lambda_.18} parent=0 // pred_check_branch
    %21 = sbr.rel (0) target = $region13
  $region12: #{_lambda_.18} parent=0 // pred_region
    _
  $region13: #{_lambda_.18} parent=0 // pred_fallthru
    _
  // Predicated region
  $region14: #{_lambda_.18} parent=0 // pred_check
    _
  $region15: #{_lambda_.18} parent=0 // pred_check_branch
    %23 = sbr.rel (0) target = $region17
  $region16: #{_lambda_.18} parent=0 // pred_region
    _
  $region17: #{_lambda_.18} parent=0 // pred_fallthru
    _
  // Predicated region
  $region18: #{_lambda_.18} parent=0 // pred_check
    _
  $region19: #{_lambda_.18} parent=0 // pred_check_branch
    %25 = sbr.rel (0) target = $region21
  $region20: #{_lambda_.18} parent=0 // pred_region
    _
  $region21: #{_lambda_.18} parent=0 // pred_fallthru
    _
  // Predicated region
  $region22: #{_lambda_.18} parent=0 // pred_check
    _
  $region23: #{_lambda_.18} parent=0 // pred_check_branch
    %27 = sbr.rel (0) target = $region25
  $region24: #{_lambda_.18} parent=0 // pred_region
    _
  $region25: #{_lambda_.18} parent=0 // pred_fallthru
    _
  // Predicated region
  $region26: #{_lambda_.18} parent=0 // pred_check
    _
  $region27: #{_lambda_.18} parent=0 // pred_check_branch
    %29 = sbr.rel (0) target = $region29
  $region28: #{_lambda_.18} parent=0 // pred_region
    _
  $region29: #{_lambda_.18} parent=0 // pred_fallthru
    _
  // Predicated region
  $region30: #{_lambda_.18} parent=0 // pred_check
    _
  $region31: #{_lambda_.18} parent=0 // pred_check_branch
    %31 = sbr.rel (0) target = $region33
  $region32: #{_lambda_.18} parent=0 // pred_region
    _
  $region33: #{_lambda_.18} parent=0 // pred_fallthru
    _
  // Predicated region
  $region34: #{_lambda_.18} parent=0 // pred_check
    _
  $region35: #{_lambda_.18} parent=0 // pred_check_branch
    %33 = sbr.rel (0) target = $region37
  $region36: #{_lambda_.18} parent=0 // pred_region
    _
  $region37: #{_lambda_.18} parent=0 // pred_fallthru
    _
  // Predicated region
  $region38: #{_lambda_.18} parent=0 // pred_check
    _
  $region39: #{_lambda_.18} parent=0 // pred_check_branch
    %35 = sbr.rel (0) target = $region41
  $region40: #{_lambda_.18} parent=0 // pred_region
    _
  $region41: #{_lambda_.18} parent=0 // pred_fallthru
    _
  // Predicated region
  $region42: #{_lambda_.18} parent=0 // pred_check
    _
  $region43: #{_lambda_.18} parent=0 // pred_check_branch
    %37 = sbr.rel (0) target = $region45
  $region44: #{_lambda_.18} parent=0 // pred_region
    _
  $region45: #{_lambda_.18} parent=0 // pred_fallthru
    _
  %v38 = vld [vmem:[%s2] sm:$0x3]
  %v39 = vld [vmem:[%s0] sm:$0x1]
  %v41 = vlaneseq
  %v42 = vshrl.u32 %v41, 7
  %v43 = vsub.s32 0, %v42
  %v44 = vrot.slane %v39, %v43
  %v46 = vmul.f32 %v38, %v44
  %v47 = vld [vmem:[%s1] sm:$0x1]
  %v49 = vlaneseq
  %v50 = vshrl.u32 %v49, 7
  %v51 = vsub.s32 0, %v50
  %v52 = vrot.slane %v47, %v51
  %v54 = vadd.f32 %v46, %v52
  %v55 = vmax.f32 %v54, 0.0
  %v56 = vld [vmem:[%s3] sm:$0x3]
  %v57 = vmul.f32 %v56, %v44
  %v58 = vadd.f32 %v57, %v52
  %v59 = vmax.f32 %v58, 0.0
  %v60 = vadd.f32 %v55, %v59
  %v61 = vld [vmem:[%s4] sm:$0x3]
  %v62 = vmul.f32 %v61, %v44
  %v63 = vadd.f32 %v62, %v52
  %v64 = vmax.f32 %v63, 0.0
  %v65 = vadd.f32 %v60, %v64
  %v66 = vld [vmem:[%s5] sm:$0x3]
  %v67 = vmul.f32 %v66, %v44
  %v68 = vadd.f32 %v67, %v52
  %v69 = vmax.f32 %v68, 0.0
  %v70 = vadd.f32 %v65, %v69
  %v71 = vld [vmem:[%s6] sm:$0x3]
  %v72 = vmul.f32 %v71, %v44
  %v73 = vadd.f32 %v72, %v52
  %v74 = vmax.f32 %v73, 0.0
  %v75 = vadd.f32 %v70, %v74
  %v76 = vld [vmem:[%s7] sm:$0x3]
  %v77 = vmul.f32 %v76, %v44
  %v78 = vadd.f32 %v77, %v52
  %v79 = vmax.f32 %v78, 0.0
  %v80 = vadd.f32 %v75, %v79
  %v81 = vld [vmem:[%s8] sm:$0x3]
  %v82 = vmul.f32 %v81, %v44
  %v83 = vadd.f32 %v82, %v52
  %v84 = vmax.f32 %v83, 0.0
  %v85 = vadd.f32 %v80, %v84
  %v86 = vld [vmem:[%s9] sm:$0x3]
  %v87 = vmul.f32 %v86, %v44
  %v88 = vadd.f32 %v87, %v52
  %v89 = vmax.f32 %v88, 0.0
  %v90 = vadd.f32 %v85, %v89
  %v91 = vld [vmem:[%s10] sm:$0x3]
  %v92 = vmul.f32 %v91, %v44
  %v93 = vadd.f32 %v92, %v52
  %v94 = vmax.f32 %v93, 0.0
  %v95 = vadd.f32 %v90, %v94
  %v96 = vmul.f32 %v95, 0.11111111
  %vm97 = vcmask 451584
  %98 = vst.msk [vmem:[%s11] sm:$0x3] %vm97, %v96
  // Predicated region
  $region46: #{_lambda_.18} parent=0 // pred_check
    _
  $region47: #{_lambda_.18} parent=0 // pred_check_branch
    %100 = sbr.rel (0) target = $region49
  $region48: #{_lambda_.18} parent=0 // pred_region
    _
  $region49: #{_lambda_.18} parent=0 // pred_fallthru
    _
  // Predicated region
  $region50: #{_lambda_.18} parent=0 // pred_check
    _
  $region51: #{_lambda_.18} parent=0 // pred_check_branch
    %102 = sbr.rel (0) target = $region53
  $region52: #{_lambda_.18} parent=0 // pred_region
    _
  $region53: #{_lambda_.18} parent=0 // pred_fallthru
    _

// kernel: _lambda_.19
$region0: #{_lambda_.19}
  #allocation0 [shape = 'u32[]', space=smem, size = 0x4, offset = 0x4, fixed_abs, tag = 'smem constant byte address 0x4 - core index']
  #allocation1 [shape = 'u32[144,128]{1,0:T(1,128)}', space=vmem, size = 0x12000, scoped, tag = 'internal scratch']
  %s0 = inlined_call_operand.vmem [shape: f32[2,56], index: 0, kind: input, shape index: {}]
  %s1 = inlined_call_operand.vmem [shape: f32[56,10], index: 1, kind: input, shape index: {}]
  %s2 = inlined_call_operand.vmem [shape: f32[1,10], index: 2, kind: input, shape index: {}]
  %s3 = inlined_call_operand.hbm [shape: f32[2,10], index: 3, kind: output, shape index: {}]
  %s4 = sld [smem:[#allocation0]]
  $region22: #{_lambda_.19} parent=0
    _
  %s6 = ssub.s32 1, %s4
  %s7 = scalar_select 0, %s6, %s4
  $region1: #{_lambda_.19} parent=0
    #allocation2 [shape = 'u8[1024]{0}', space=vmem, size = 0x400, scoped, tag = 'output window, operand 0, single buffered']
    #allocation3 [shape = 's32[1]{0}', space=sflag, size = 0x4, scoped, tag = 'scoped memory for _lambda_.19']
    %8 = vsyncpa [#allocation3], 0
    // Predicated region
    $region2: #{_lambda_.19} parent=1 // pred_check
      _
    $region3: #{_lambda_.19} parent=1 // pred_check_branch
      %10 = sbr.rel (0) target = $region5
    $region4: #{_lambda_.19} parent=1 // pred_region
      _
    $region5: #{_lambda_.19} parent=1 // pred_fallthru
      _
    // Predicated region
    $region6: #{_lambda_.19} parent=1 // pred_check
      _
    $region7: #{_lambda_.19} parent=1 // pred_check_branch
      %12 = sbr.rel (0) target = $region9
    $region8: #{_lambda_.19} parent=1 // pred_region
      _
    $region9: #{_lambda_.19} parent=1 // pred_fallthru
      _
    // Predicated region
    $region10: #{_lambda_.19} parent=1 // pred_check
      _
    $region11: #{_lambda_.19} parent=1 // pred_check_branch
      %14 = sbr.rel (0) target = $region13
    $region12: #{_lambda_.19} parent=1 // pred_region
      _
    $region13: #{_lambda_.19} parent=1 // pred_fallthru
      _
    %v15 = vld [vmem:[%s0] sm:$0x3]
    %v16 = vld [vmem:[%s1] sm:$0xff]
    %v17 = vld [vmem:[%s1 + $0x8] sm:$0xff]
    %v18 = vld [vmem:[%s1 + $0x10] sm:$0xff]
    %v19 = vld [vmem:[%s1 + $0x18] sm:$0xff]
    %v20 = vld [vmem:[%s1 + $0x20] sm:$0xff]
    %v21 = vld [vmem:[%s1 + $0x28] sm:$0xff]
    %v22 = vld [vmem:[%s1 + $0x30] sm:$0xff]
    %v23 = vld [vmem:[%s2] sm:$0x1]
    %v25 = vlaneseq
    %v26 = vshrl.u32 %v25, 7
    %v27 = vsub.s32 0, %v26
    %v28 = vrot.slane %v23, %v27
    %vm30 = vcmask 457728
    %v32 = vsel %vm30, %v15, 0
    %34 = vmatprep.subr.mxu0 0.0
    %35 = vmatpush1.msra.mxu0 0.0
    %36 = vmatprep.subr.mxu0 0.0
    %37 = vmatpush1.msra.mxu0 0.0
    %38 = vmatprep.subr.mxu0 0.0
    %39 = vmatpush1.msra.mxu0 0.0
    %40 = vmatprep.subr.mxu0 0.0
    %41 = vmatpush1.msra.mxu0 0.0
    %42 = vmatprep.subr.mxu0 0.0
    %43 = vmatpush1.msra.mxu0 0.0
    %44 = vmatprep.subr.mxu0 0.0
    %45 = vmatpush1.msra.mxu0 0.0
    %46 = vmatprep.subr.mxu0 0.0
    %47 = vmatpush1.msra.mxu0 0.0
    %48 = vmatprep.subr.mxu0 0.0
    %49 = vmatpush1.msra.mxu0 0.0
    %50 = vmatprep.subr.mxu0 0.0
    %51 = vmatpush1.msra.mxu0 0.0
    %52 = vmatprep.subr.mxu0 0.0
    %53 = vmatpush1.msra.mxu0 %v22
    %54 = vmatprep.subr.mxu0 0.0
    %55 = vmatpush1.msra.mxu0 %v21
    %56 = vmatprep.subr.mxu0 0.0
    %57 = vmatpush1.msra.mxu0 %v20
    %58 = vmatprep.subr.mxu0 0.0
    %59 = vmatpush1.msra.mxu0 %v19
    %60 = vmatprep.subr.mxu0 0.0
    %61 = vmatpush1.msra.mxu0 %v18
    %62 = vmatprep.subr.mxu0 0.0
    %63 = vmatpush1.msra.mxu0 %v17
    %64 = vmatprep.subr.mxu0 0.0
    %65 = vmatpush1.msra.mxu0 %v16
    %66 = vmatprep.subr.mxu0 0.0
    %67 = vmatpush2.msra.mxu0 0.0
    %68 = vmatprep.subr.mxu0 0.0
    %69 = vmatpush2.msra.mxu0 0.0
    %70 = vmatprep.subr.mxu0 0.0
    %71 = vmatpush2.msra.mxu0 0.0
    %72 = vmatprep.subr.mxu0 0.0
    %73 = vmatpush2.msra.mxu0 0.0
    %74 = vmatprep.subr.mxu0 0.0
    %75 = vmatpush2.msra.mxu0 0.0
    %76 = vmatprep.subr.mxu0 0.0
    %77 = vmatpush2.msra.mxu0 0.0
    %78 = vmatprep.subr.mxu0 0.0
    %79 = vmatpush2.msra.mxu0 0.0
    %80 = vmatprep.subr.mxu0 0.0
    %81 = vmatpush2.msra.mxu0 0.0
    %82 = vmatprep.subr.mxu0 0.0
    %83 = vmatpush2.msra.mxu0 0.0
    %84 = vmatprep.subr.mxu0 0.0
    %85 = vmatpush2.msra.mxu0 0.0
    %86 = vmatprep.subr.mxu0 0.0
    %87 = vmatpush2.msra.mxu0 0.0
    %88 = vmatprep.subr.mxu0 0.0
    %89 = vmatpush2.msra.mxu0 0.0
    %90 = vmatprep.subr.mxu0 0.0
    %91 = vmatpush2.msra.mxu0 0.0
    %92 = vmatprep.subr.mxu0 0.0
    %93 = vmatpush2.msra.mxu0 0.0
    %94 = vmatprep.subr.mxu0 0.0
    %95 = vmatpush2.msra.mxu0 0.0
    %96 = vmatprep.subr.mxu0 0.0
    %97 = vmatpush2.msra.mxu0 0.0
    %98 = vmatprep.mubr.f32.mxu0 0.0
    %99 = vmatmul.mubr.f32.gmra.mxu0 %v32
    %v100 = vpop.f32.mrf.mxu0
    %v101 = vadd.f32 %v28, %v100
    %v102 = vpop.f32.mrf.mxu0
    %103 = vdwg.mxu0
    %vm104 = vcmask 74752
    %105 = vst.msk [vmem:[#allocation2] sm:$0x3] %vm104, %v101
    // Predicated region
    $region14: #{_lambda_.19} parent=1 // pred_check
      _
    $region15: #{_lambda_.19} parent=1 // pred_check_branch
      %107 = sbr.rel (0) target = $region17
    $region16: #{_lambda_.19} parent=1 // pred_region
      %s109 = ssub.s32 32, 32
      %110 = vsyncadd [#allocation3], %s109
      %s112 = sshll.u32 [#allocation2], 4
      %s113 = int_to_ptr.vmem [resolvable:$true] %s112
      %115 = dma.vmem_to_hbm [thread:$0]  %s113, 32, %s3, [#allocation3]
    $region17: #{_lambda_.19} parent=1 // pred_fallthru
      _
    // Predicated region
    $region18: #{_lambda_.19} parent=1 // pred_check
      _
    $region19: #{_lambda_.19} parent=1 // pred_check_branch
      %117 = sbr.rel (0) target = $region21
    $region20: #{_lambda_.19} parent=1 // pred_region
      %118 = dma.done [#allocation3], 32
    $region21: #{_lambda_.19} parent=1 // pred_fallthru
      _
    %119 = vsyncpa [#allocation3], 1

</llo_original>
